<compile_context>
chip_gen: v7x
topology: tpu7x:2x2x1
jax: 0.10.0
libtpu: 0.0.40
codegen_flags: <defaults>
</compile_context>

<pallas_src>
import jax
import jax.numpy as jnp
from jax.experimental import pallas as pl
from jax.experimental.pallas import tpu as pltpu

# Scaled-down hyperparameters (original: emb_dim=350, repr_dim=300, fc1=300).
TOK_EMB = 24
ROLE_EMB = 8
EMB_DIM = TOK_EMB + ROLE_EMB          # LSTM input size ("emb_dim")
HIDDEN = 16                           # repr_dim / 2
REPR_DIM = 2 * HIDDEN                 # 32
FC1_DIM = 32
N_CLASSES = 3
B = 8                                 # batch (per question)
T = 8                                 # sequence length
VOCAB = 50
ROLE_VOCAB = 5


# ----------------------------------------------------------------------------
# Single fused kernel: bidirectional LSTM over both questions (stacked on the
# batch axis) + similarity head. No grid; the time recurrence is a fully
# unrolled static loop inside the kernel, state carried in vregs/VMEM.
# ----------------------------------------------------------------------------
def _fused_kernel(x_ref, len_ref,
                  wih_f_ref, whh_f_ref, b_f_ref,
                  wih_b_ref, whh_b_ref, b_b_ref,
                  w_df_ref, w_db_ref, w_pf_ref, w_pb_ref, b1_ref,
                  w2_ref, b2_ref,
                  out_ref):
    B2, Tn, _ = x_ref.shape           # (2B, T, E) — q1 rows then q2 rows
    H = whh_f_ref.shape[0]
    Bq = B2 // 2

    lens = len_ref[...]               # (2B, 1) int32 valid lengths

    wih_f = wih_f_ref[...]
    whh_f = whh_f_ref[...]
    b_f = b_f_ref[...]
    wih_b = wih_b_ref[...]
    whh_b = whh_b_ref[...]
    b_b = b_b_ref[...]

    def cell(x_t, h, c, wih, whh, b):
        gates = (jnp.dot(x_t, wih, preferred_element_type=jnp.float32)
                 + jnp.dot(h, whh, preferred_element_type=jnp.float32)
                 + b)                                     # (2B, 4H), i,f,g,o
        i = jax.nn.sigmoid(gates[:, 0 * H:1 * H])
        f = jax.nn.sigmoid(gates[:, 1 * H:2 * H])
        g = jnp.tanh(gates[:, 2 * H:3 * H])
        o = jax.nn.sigmoid(gates[:, 3 * H:4 * H])
        c_new = f * c + i * g
        h_new = o * jnp.tanh(c_new)
        return h_new, c_new

    zeros = jnp.zeros((B2, H), jnp.float32)
    h_f, c_f, h_b, c_b = zeros, zeros, zeros, zeros

    # Unrolled time recurrence (T is small & static). The forward direction
    # walks t = 0..T-1, the backward direction walks T-1..0 in the same
    # iteration so each timestep slab is read once per step from VMEM.
    # pack_padded_sequence semantics: steps at/after a row's length are masked
    # so the carried state freezes at that row's final valid timestep (bwd is
    # correct because the initial state is zero and padded steps come first).
    for t in range(Tn):
        tb = Tn - 1 - t
        x_fwd = x_ref[:, t, :]                            # (2B, E)
        x_bwd = x_ref[:, tb, :]
        hf_n, cf_n = cell(x_fwd, h_f, c_f, wih_f, whh_f, b_f)
        hb_n, cb_n = cell(x_bwd, h_b, c_b, wih_b, whh_b, b_b)
        m_f = t < lens                                    # (2B, 1) bool
        m_b = tb < lens
        h_f = jnp.where(m_f, hf_n, h_f)
        c_f = jnp.where(m_f, cf_n, c_f)
        h_b = jnp.where(m_b, hb_n, h_b)
        c_b = jnp.where(m_b, cb_n, c_b)

    # Head. The module uses the final *cell* states with fwd/bwd interleaved
    # per hidden unit and then cat(|r1-r2|, r1*r2) @ fc1. Instead of
    # materializing the interleave and the lane concat, fc1's rows were
    # pre-split host-side into four (H, FC1) blocks, so the identical math is
    # four accumulating matmuls with zero cross-lane layout work.
    c1_f, c2_f = c_f[:Bq], c_f[Bq:]                       # q1 vs q2 rows
    c1_b, c2_b = c_b[:Bq], c_b[Bq:]
    d_f = jnp.abs(c1_f - c2_f)
    d_b = jnp.abs(c1_b - c2_b)
    p_f = c1_f * c2_f
    p_b = c1_b * c2_b

    h1 = jnp.tanh(
        jnp.dot(d_f, w_df_ref[...], preferred_element_type=jnp.float32)
        + jnp.dot(d_b, w_db_ref[...], preferred_element_type=jnp.float32)
        + jnp.dot(p_f, w_pf_ref[...], preferred_element_type=jnp.float32)
        + jnp.dot(p_b, w_pb_ref[...], preferred_element_type=jnp.float32)
        + b1_ref[...])
    out_ref[...] = (jnp.dot(h1, w2_ref[...], preferred_element_type=jnp.float32)
                    + b2_ref[...])


# ----------------------------------------------------------------------------
# Model glue: embedding lookups (gathers) stay in XLA; everything else is one
# pallas_call with all operands pinned to VMEM.
# ----------------------------------------------------------------------------
def model_forward(params, q1, q2, q1_len, q2_len, qr1, qr2):
    Bq = q1.shape[0]

    # Stack the two (independent, same-shape) questions on the batch axis so
    # the biLSTM + head run in a single kernel launch.
    tokens = jnp.concatenate([q1, q2], axis=0)            # (2B, T)
    roles = jnp.concatenate([qr1, qr2], axis=0)
    lens = jnp.concatenate([q1_len, q2_len], axis=0).astype(jnp.int32)

    # TODO(synk): original code calls nonexistent `nn.Concat`; token and role
    # embeddings are concatenated along the feature axis to form emb_dim.
    x = jnp.concatenate([params['emb'][tokens], params['role_emb'][roles]],
                        axis=-1).astype(jnp.float32)      # (2B, T, E), natural layout
    len_col = lens.reshape(-1, 1)                         # (2B, 1)

    vmem = pl.BlockSpec(memory_space=pltpu.MemorySpace.VMEM)
    return pl.pallas_call(
        _fused_kernel,
        out_shape=jax.ShapeDtypeStruct((Bq, N_CLASSES), jnp.float32),
        in_specs=[vmem] * 15,
        out_specs=vmem,
    )(x, len_col,
      params['w_ih_f'], params['w_hh_f'], params['b_f'],
      params['w_ih_b'], params['w_hh_b'], params['b_b'],
      params['fc1_w_df'], params['fc1_w_db'],
      params['fc1_w_pf'], params['fc1_w_pb'], params['fc1_b'],
      params['fc2_w'], params['fc2_b'])


# ----------------------------------------------------------------------------
# Parameter prep.
# ----------------------------------------------------------------------------
def _split_fc1(fc1_w):
    """Split a PyTorch-layout fc1 weight (stored (in, out), input features
    ordered [ |r1-r2| interleaved(fwd0,bwd0,...), r1*r2 interleaved(...) ])
    into the four (HIDDEN, FC1_DIM) blocks consumed by the fused kernel."""
    d_part, p_part = fc1_w[:REPR_DIM], fc1_w[REPR_DIM:]
    return d_part[0::2], d_part[1::2], p_part[0::2], p_part[1::2]


def make_params(key):
    ks = jax.random.split(key, 12)
    s = 0.1
    # LSTM weights stored (in, out) so the kernel computes x @ W directly.
    # Each direction uses a single bias = b_ih + b_hh (sum them when loading
    # real PyTorch weights).
    fc1_w = s * jax.random.normal(ks[8], (2 * REPR_DIM, FC1_DIM), jnp.float32)
    w_df, w_db, w_pf, w_pb = _split_fc1(fc1_w)
    return {
        'emb': s * jax.random.normal(ks[0], (VOCAB, TOK_EMB), jnp.float32),
        'role_emb': s * jax.random.normal(ks[1], (ROLE_VOCAB, ROLE_EMB),
                                          jnp.float32),
        'w_ih_f': s * jax.random.normal(ks[2], (EMB_DIM, 4 * HIDDEN),
                                        jnp.float32),
        'w_hh_f': s * jax.random.normal(ks[3], (HIDDEN, 4 * HIDDEN),
                                        jnp.float32),
        'b_f': s * jax.random.normal(ks[4], (1, 4 * HIDDEN), jnp.float32),
        'w_ih_b': s * jax.random.normal(ks[5], (EMB_DIM, 4 * HIDDEN),
                                        jnp.float32),
        'w_hh_b': s * jax.random.normal(ks[6], (HIDDEN, 4 * HIDDEN),
                                        jnp.float32),
        'b_b': s * jax.random.normal(ks[7], (1, 4 * HIDDEN), jnp.float32),
        'fc1_w': fc1_w,                    # original layout (reference only)
        'fc1_w_df': w_df, 'fc1_w_db': w_db,
        'fc1_w_pf': w_pf, 'fc1_w_pb': w_pb,
        'fc1_b': s * jax.random.normal(ks[9], (1, FC1_DIM), jnp.float32),
        'fc2_w': s * jax.random.normal(ks[10], (FC1_DIM, N_CLASSES),
                                       jnp.float32),
        'fc2_b': s * jax.random.normal(ks[11], (1, N_CLASSES), jnp.float32),
    }


# ----------------------------------------------------------------------------
# Pure-JAX reference mirroring the PyTorch module exactly (interleaved cn
# layout + full fc1 weight). Used only as a correctness check.
# ----------------------------------------------------------------------------
def reference_forward(params, q1, q2, q1_len, q2_len, qr1, qr2):
    hi = jax.lax.Precision.HIGHEST

    def encode(tokens, roles, lengths):
        embs = jnp.concatenate(
            [params['emb'][tokens], params['role_emb'][roles]], axis=-1)
        Bn, Tn, _ = embs.shape

        def direction(w_ih, w_hh, b, reverse):
            h = jnp.zeros((Bn, HIDDEN), jnp.float32)
            c = jnp.zeros((Bn, HIDDEN), jnp.float32)
            times = range(Tn - 1, -1, -1) if reverse else range(Tn)
            for time in times:
                x_t = embs[:, time, :]
                gates = (jnp.dot(x_t, w_ih, precision=hi)
                         + jnp.dot(h, w_hh, precision=hi) + b)
                i = jax.nn.sigmoid(gates[:, 0 * HIDDEN:1 * HIDDEN])
                f = jax.nn.sigmoid(gates[:, 1 * HIDDEN:2 * HIDDEN])
                g = jnp.tanh(gates[:, 2 * HIDDEN:3 * HIDDEN])
                o = jax.nn.sigmoid(gates[:, 3 * HIDDEN:4 * HIDDEN])
                c_new = f * c + i * g
                h_new = o * jnp.tanh(c_new)
                m = (time < lengths)[:, None]
                h = jnp.where(m, h_new, h)
                c = jnp.where(m, c_new, c)
            return c

        c_f = direction(params['w_ih_f'], params['w_hh_f'], params['b_f'],
                        False)
        c_b = direction(params['w_ih_b'], params['w_hh_b'], params['b_b'],
                        True)
        # cn.permute(1, 2, 0).view(-1, repr_dim): fwd/bwd interleaved per unit.
        return jnp.stack([c_f, c_b], axis=-1).reshape(Bn, REPR_DIM)

    r1 = encode(q1, qr1, q1_len)
    r2 = encode(q2, qr2, q2_len)
    joint = jnp.concatenate([jnp.abs(r1 - r2), r1 * r2], axis=1)
    h = jnp.tanh(jnp.dot(joint, params['fc1_w'], precision=hi)
                 + params['fc1_b'])
    return jnp.dot(h, params['fc2_w'], precision=hi) + params['fc2_b']


if __name__ == "__main__":
    key = jax.random.PRNGKey(0)
    pkey, dkey = jax.random.split(key)
    params = make_params(pkey)

    dks = jax.random.split(dkey, 6)
    q1 = jax.random.randint(dks[0], (B, T), 0, VOCAB, dtype=jnp.int32)
    q2 = jax.random.randint(dks[1], (B, T), 0, VOCAB, dtype=jnp.int32)
    qr1 = jax.random.randint(dks[2], (B, T), 0, ROLE_VOCAB, dtype=jnp.int32)
    qr2 = jax.random.randint(dks[3], (B, T), 0, ROLE_VOCAB, dtype=jnp.int32)
    q1_len = jax.random.randint(dks[4], (B,), 1, T + 1, dtype=jnp.int32)
    q2_len = jax.random.randint(dks[5], (B,), 1, T + 1, dtype=jnp.int32)

    out = jax.jit(model_forward)(params, q1, q2, q1_len, q2_len, qr1, qr2)
    out = jax.block_until_ready(out)
    assert out.shape == (B, N_CLASSES) and out.dtype == jnp.float32

    ref = reference_forward(params, q1, q2, q1_len, q2_len, qr1, qr2)
    max_err = float(jnp.max(jnp.abs(out - ref)))
    assert jnp.allclose(out, ref, atol=5e-3, rtol=5e-3), max_err

    print("KERNEL_OK")
</pallas_src>

<mosaic_0001>
module attributes {stable_mosaic.version = 11 : i64} {
  func.func @_fused_kernel(%arg0: memref<16x8x32xf32, #tpu.memory_space<vmem>>, %arg1: memref<16x1xi32, #tpu.memory_space<vmem>>, %arg2: memref<32x64xf32, #tpu.memory_space<vmem>>, %arg3: memref<16x64xf32, #tpu.memory_space<vmem>>, %arg4: memref<1x64xf32, #tpu.memory_space<vmem>>, %arg5: memref<32x64xf32, #tpu.memory_space<vmem>>, %arg6: memref<16x64xf32, #tpu.memory_space<vmem>>, %arg7: memref<1x64xf32, #tpu.memory_space<vmem>>, %arg8: memref<16x32xf32, #tpu.memory_space<vmem>>, %arg9: memref<16x32xf32, #tpu.memory_space<vmem>>, %arg10: memref<16x32xf32, #tpu.memory_space<vmem>>, %arg11: memref<16x32xf32, #tpu.memory_space<vmem>>, %arg12: memref<1x32xf32, #tpu.memory_space<vmem>>, %arg13: memref<32x3xf32, #tpu.memory_space<vmem>>, %arg14: memref<1x3xf32, #tpu.memory_space<vmem>>, %arg15: memref<8x3xf32, #tpu.memory_space<vmem>>) attributes {dimension_semantics = [], scalar_prefetch = 0 : i64, scratch_operands = 0 : i64, tpu.core_type = #tpu.core_type<tc>} {
    %c0 = arith.constant 0 : index
    %c0_0 = arith.constant 0 : index
    %0 = vector.load %arg1[%c0, %c0_0] : memref<16x1xi32, #tpu.memory_space<vmem>>, vector<16x1xi32>
    %c0_1 = arith.constant 0 : index
    %c0_2 = arith.constant 0 : index
    %1 = vector.load %arg2[%c0_1, %c0_2] : memref<32x64xf32, #tpu.memory_space<vmem>>, vector<32x64xf32>
    %c0_3 = arith.constant 0 : index
    %c0_4 = arith.constant 0 : index
    %2 = vector.load %arg3[%c0_3, %c0_4] : memref<16x64xf32, #tpu.memory_space<vmem>>, vector<16x64xf32>
    %c0_5 = arith.constant 0 : index
    %c0_6 = arith.constant 0 : index
    %3 = vector.load %arg4[%c0_5, %c0_6] : memref<1x64xf32, #tpu.memory_space<vmem>>, vector<1x64xf32>
    %c0_7 = arith.constant 0 : index
    %c0_8 = arith.constant 0 : index
    %4 = vector.load %arg5[%c0_7, %c0_8] : memref<32x64xf32, #tpu.memory_space<vmem>>, vector<32x64xf32>
    %c0_9 = arith.constant 0 : index
    %c0_10 = arith.constant 0 : index
    %5 = vector.load %arg6[%c0_9, %c0_10] : memref<16x64xf32, #tpu.memory_space<vmem>>, vector<16x64xf32>
    %c0_11 = arith.constant 0 : index
    %c0_12 = arith.constant 0 : index
    %6 = vector.load %arg7[%c0_11, %c0_12] : memref<1x64xf32, #tpu.memory_space<vmem>>, vector<1x64xf32>
    %cst = arith.constant 0.000000e+00 : f32
    %7 = vector.broadcast %cst : f32 to vector<16x16xf32>
    %c0_13 = arith.constant 0 : index
    %c0_14 = arith.constant 0 : index
    %c0_15 = arith.constant 0 : index
    %8 = vector.load %arg0[%c0_13, %c0_14, %c0_15] : memref<16x8x32xf32, #tpu.memory_space<vmem>>, vector<16x1x32xf32>
    %9 = vector.shape_cast %8 : vector<16x1x32xf32> to vector<16x32xf32>
    %c0_16 = arith.constant 0 : index
    %c7 = arith.constant 7 : index
    %c0_17 = arith.constant 0 : index
    %10 = vector.load %arg0[%c0_16, %c7, %c0_17] : memref<16x8x32xf32, #tpu.memory_space<vmem>>, vector<16x1x32xf32>
    %11 = vector.shape_cast %10 : vector<16x1x32xf32> to vector<16x32xf32>
    %cst_18 = arith.constant dense<0.000000e+00> : vector<16x64xf32>
    %12 = tpu.matmul %9, %1, %cst_18 {dimension_numbers = #tpu.dot_dimension_numbers<[1], [0], [0], [1], [0, 0, 1, 1], [], []>} : vector<16x32xf32>, vector<32x64xf32>, vector<16x64xf32> -> vector<16x64xf32>
    %cst_19 = arith.constant dense<0.000000e+00> : vector<16x64xf32>
    %13 = tpu.matmul %7, %2, %cst_19 {dimension_numbers = #tpu.dot_dimension_numbers<[1], [0], [0], [1], [0, 0, 1, 1], [], []>} : vector<16x16xf32>, vector<16x64xf32>, vector<16x64xf32> -> vector<16x64xf32>
    %14 = arith.addf %12, %13 : vector<16x64xf32>
    %15 = vector.broadcast %3 : vector<1x64xf32> to vector<16x64xf32>
    %16 = arith.addf %14, %15 : vector<16x64xf32>
    %17 = vector.extract_strided_slice %16 {offsets = [0, 0], sizes = [16, 16], strides = [1, 1]} : vector<16x64xf32> to vector<16x16xf32>
    %18 = arith.negf %17 : vector<16x16xf32>
    %19 = math.exp %18 : vector<16x16xf32>
    %cst_20 = arith.constant 1.000000e+00 : f32
    %20 = vector.broadcast %cst_20 : f32 to vector<16x16xf32>
    %21 = arith.addf %20, %19 : vector<16x16xf32>
    %22 = arith.divf %20, %21 : vector<16x16xf32>
    %23 = vector.extract_strided_slice %16 {offsets = [0, 16], sizes = [16, 16], strides = [1, 1]} : vector<16x64xf32> to vector<16x16xf32>
    %24 = arith.negf %23 : vector<16x16xf32>
    %25 = math.exp %24 : vector<16x16xf32>
    %cst_21 = arith.constant 1.000000e+00 : f32
    %26 = vector.broadcast %cst_21 : f32 to vector<16x16xf32>
    %27 = arith.addf %26, %25 : vector<16x16xf32>
    %28 = arith.divf %26, %27 : vector<16x16xf32>
    %29 = vector.extract_strided_slice %16 {offsets = [0, 32], sizes = [16, 16], strides = [1, 1]} : vector<16x64xf32> to vector<16x16xf32>
    %30 = math.tanh %29 : vector<16x16xf32>
    %31 = vector.extract_strided_slice %16 {offsets = [0, 48], sizes = [16, 16], strides = [1, 1]} : vector<16x64xf32> to vector<16x16xf32>
    %32 = arith.negf %31 : vector<16x16xf32>
    %33 = math.exp %32 : vector<16x16xf32>
    %cst_22 = arith.constant 1.000000e+00 : f32
    %34 = vector.broadcast %cst_22 : f32 to vector<16x16xf32>
    %35 = arith.addf %34, %33 : vector<16x16xf32>
    %36 = arith.divf %34, %35 : vector<16x16xf32>
    %37 = arith.mulf %28, %7 : vector<16x16xf32>
    %38 = arith.mulf %22, %30 : vector<16x16xf32>
    %39 = arith.addf %37, %38 : vector<16x16xf32>
    %40 = math.tanh %39 : vector<16x16xf32>
    %41 = arith.mulf %36, %40 : vector<16x16xf32>
    %cst_23 = arith.constant dense<0.000000e+00> : vector<16x64xf32>
    %42 = tpu.matmul %11, %4, %cst_23 {dimension_numbers = #tpu.dot_dimension_numbers<[1], [0], [0], [1], [0, 0, 1, 1], [], []>} : vector<16x32xf32>, vector<32x64xf32>, vector<16x64xf32> -> vector<16x64xf32>
    %cst_24 = arith.constant dense<0.000000e+00> : vector<16x64xf32>
    %43 = tpu.matmul %7, %5, %cst_24 {dimension_numbers = #tpu.dot_dimension_numbers<[1], [0], [0], [1], [0, 0, 1, 1], [], []>} : vector<16x16xf32>, vector<16x64xf32>, vector<16x64xf32> -> vector<16x64xf32>
    %44 = arith.addf %42, %43 : vector<16x64xf32>
    %45 = vector.broadcast %6 : vector<1x64xf32> to vector<16x64xf32>
    %46 = arith.addf %44, %45 : vector<16x64xf32>
    %47 = vector.extract_strided_slice %46 {offsets = [0, 0], sizes = [16, 16], strides = [1, 1]} : vector<16x64xf32> to vector<16x16xf32>
    %48 = arith.negf %47 : vector<16x16xf32>
    %49 = math.exp %48 : vector<16x16xf32>
    %cst_25 = arith.constant 1.000000e+00 : f32
    %50 = vector.broadcast %cst_25 : f32 to vector<16x16xf32>
    %51 = arith.addf %50, %49 : vector<16x16xf32>
    %52 = arith.divf %50, %51 : vector<16x16xf32>
    %53 = vector.extract_strided_slice %46 {offsets = [0, 16], sizes = [16, 16], strides = [1, 1]} : vector<16x64xf32> to vector<16x16xf32>
    %54 = arith.negf %53 : vector<16x16xf32>
    %55 = math.exp %54 : vector<16x16xf32>
    %cst_26 = arith.constant 1.000000e+00 : f32
    %56 = vector.broadcast %cst_26 : f32 to vector<16x16xf32>
    %57 = arith.addf %56, %55 : vector<16x16xf32>
    %58 = arith.divf %56, %57 : vector<16x16xf32>
    %59 = vector.extract_strided_slice %46 {offsets = [0, 32], sizes = [16, 16], strides = [1, 1]} : vector<16x64xf32> to vector<16x16xf32>
    %60 = math.tanh %59 : vector<16x16xf32>
    %61 = vector.extract_strided_slice %46 {offsets = [0, 48], sizes = [16, 16], strides = [1, 1]} : vector<16x64xf32> to vector<16x16xf32>
    %62 = arith.negf %61 : vector<16x16xf32>
    %63 = math.exp %62 : vector<16x16xf32>
    %cst_27 = arith.constant 1.000000e+00 : f32
    %64 = vector.broadcast %cst_27 : f32 to vector<16x16xf32>
    %65 = arith.addf %64, %63 : vector<16x16xf32>
    %66 = arith.divf %64, %65 : vector<16x16xf32>
    %67 = arith.mulf %58, %7 : vector<16x16xf32>
    %68 = arith.mulf %52, %60 : vector<16x16xf32>
    %69 = arith.addf %67, %68 : vector<16x16xf32>
    %70 = math.tanh %69 : vector<16x16xf32>
    %71 = arith.mulf %66, %70 : vector<16x16xf32>
    %c0_i32 = arith.constant 0 : i32
    %72 = vector.broadcast %c0_i32 : i32 to vector<16x1xi32>
    %73 = arith.cmpi sgt, %0, %72 : vector<16x1xi32>
    %c7_i32 = arith.constant 7 : i32
    %74 = vector.broadcast %c7_i32 : i32 to vector<16x1xi32>
    %75 = arith.cmpi sgt, %0, %74 : vector<16x1xi32>
    %76 = vector.shape_cast %73 : vector<16x1xi1> to vector<16x1xi1>
    %77 = vector.broadcast %76 : vector<16x1xi1> to vector<16x16xi1>
    %78 = arith.select %77, %41, %7 : vector<16x16xi1>, vector<16x16xf32>
    %79 = vector.shape_cast %73 : vector<16x1xi1> to vector<16x1xi1>
    %80 = vector.broadcast %79 : vector<16x1xi1> to vector<16x16xi1>
    %81 = arith.select %80, %39, %7 : vector<16x16xi1>, vector<16x16xf32>
    %82 = vector.shape_cast %75 : vector<16x1xi1> to vector<16x1xi1>
    %83 = vector.broadcast %82 : vector<16x1xi1> to vector<16x16xi1>
    %84 = arith.select %83, %71, %7 : vector<16x16xi1>, vector<16x16xf32>
    %85 = vector.shape_cast %75 : vector<16x1xi1> to vector<16x1xi1>
    %86 = vector.broadcast %85 : vector<16x1xi1> to vector<16x16xi1>
    %87 = arith.select %86, %69, %7 : vector<16x16xi1>, vector<16x16xf32>
    %c0_28 = arith.constant 0 : index
    %c1 = arith.constant 1 : index
    %c0_29 = arith.constant 0 : index
    %88 = vector.load %arg0[%c0_28, %c1, %c0_29] : memref<16x8x32xf32, #tpu.memory_space<vmem>>, vector<16x1x32xf32>
    %89 = vector.shape_cast %88 : vector<16x1x32xf32> to vector<16x32xf32>
    %c0_30 = arith.constant 0 : index
    %c6 = arith.constant 6 : index
    %c0_31 = arith.constant 0 : index
    %90 = vector.load %arg0[%c0_30, %c6, %c0_31] : memref<16x8x32xf32, #tpu.memory_space<vmem>>, vector<16x1x32xf32>
    %91 = vector.shape_cast %90 : vector<16x1x32xf32> to vector<16x32xf32>
    %cst_32 = arith.constant dense<0.000000e+00> : vector<16x64xf32>
    %92 = tpu.matmul %89, %1, %cst_32 {dimension_numbers = #tpu.dot_dimension_numbers<[1], [0], [0], [1], [0, 0, 1, 1], [], []>} : vector<16x32xf32>, vector<32x64xf32>, vector<16x64xf32> -> vector<16x64xf32>
    %cst_33 = arith.constant dense<0.000000e+00> : vector<16x64xf32>
    %93 = tpu.matmul %78, %2, %cst_33 {dimension_numbers = #tpu.dot_dimension_numbers<[1], [0], [0], [1], [0, 0, 1, 1], [], []>} : vector<16x16xf32>, vector<16x64xf32>, vector<16x64xf32> -> vector<16x64xf32>
    %94 = arith.addf %92, %93 : vector<16x64xf32>
    %95 = vector.broadcast %3 : vector<1x64xf32> to vector<16x64xf32>
    %96 = arith.addf %94, %95 : vector<16x64xf32>
    %97 = vector.extract_strided_slice %96 {offsets = [0, 0], sizes = [16, 16], strides = [1, 1]} : vector<16x64xf32> to vector<16x16xf32>
    %98 = arith.negf %97 : vector<16x16xf32>
    %99 = math.exp %98 : vector<16x16xf32>
    %cst_34 = arith.constant 1.000000e+00 : f32
    %100 = vector.broadcast %cst_34 : f32 to vector<16x16xf32>
    %101 = arith.addf %100, %99 : vector<16x16xf32>
    %102 = arith.divf %100, %101 : vector<16x16xf32>
    %103 = vector.extract_strided_slice %96 {offsets = [0, 16], sizes = [16, 16], strides = [1, 1]} : vector<16x64xf32> to vector<16x16xf32>
    %104 = arith.negf %103 : vector<16x16xf32>
    %105 = math.exp %104 : vector<16x16xf32>
    %cst_35 = arith.constant 1.000000e+00 : f32
    %106 = vector.broadcast %cst_35 : f32 to vector<16x16xf32>
    %107 = arith.addf %106, %105 : vector<16x16xf32>
    %108 = arith.divf %106, %107 : vector<16x16xf32>
    %109 = vector.extract_strided_slice %96 {offsets = [0, 32], sizes = [16, 16], strides = [1, 1]} : vector<16x64xf32> to vector<16x16xf32>
    %110 = math.tanh %109 : vector<16x16xf32>
    %111 = vector.extract_strided_slice %96 {offsets = [0, 48], sizes = [16, 16], strides = [1, 1]} : vector<16x64xf32> to vector<16x16xf32>
    %112 = arith.negf %111 : vector<16x16xf32>
    %113 = math.exp %112 : vector<16x16xf32>
    %cst_36 = arith.constant 1.000000e+00 : f32
    %114 = vector.broadcast %cst_36 : f32 to vector<16x16xf32>
    %115 = arith.addf %114, %113 : vector<16x16xf32>
    %116 = arith.divf %114, %115 : vector<16x16xf32>
    %117 = arith.mulf %108, %81 : vector<16x16xf32>
    %118 = arith.mulf %102, %110 : vector<16x16xf32>
    %119 = arith.addf %117, %118 : vector<16x16xf32>
    %120 = math.tanh %119 : vector<16x16xf32>
    %121 = arith.mulf %116, %120 : vector<16x16xf32>
    %cst_37 = arith.constant dense<0.000000e+00> : vector<16x64xf32>
    %122 = tpu.matmul %91, %4, %cst_37 {dimension_numbers = #tpu.dot_dimension_numbers<[1], [0], [0], [1], [0, 0, 1, 1], [], []>} : vector<16x32xf32>, vector<32x64xf32>, vector<16x64xf32> -> vector<16x64xf32>
    %cst_38 = arith.constant dense<0.000000e+00> : vector<16x64xf32>
    %123 = tpu.matmul %84, %5, %cst_38 {dimension_numbers = #tpu.dot_dimension_numbers<[1], [0], [0], [1], [0, 0, 1, 1], [], []>} : vector<16x16xf32>, vector<16x64xf32>, vector<16x64xf32> -> vector<16x64xf32>
    %124 = arith.addf %122, %123 : vector<16x64xf32>
    %125 = vector.broadcast %6 : vector<1x64xf32> to vector<16x64xf32>
    %126 = arith.addf %124, %125 : vector<16x64xf32>
    %127 = vector.extract_strided_slice %126 {offsets = [0, 0], sizes = [16, 16], strides = [1, 1]} : vector<16x64xf32> to vector<16x16xf32>
    %128 = arith.negf %127 : vector<16x16xf32>
    %129 = math.exp %128 : vector<16x16xf32>
    %cst_39 = arith.constant 1.000000e+00 : f32
    %130 = vector.broadcast %cst_39 : f32 to vector<16x16xf32>
    %131 = arith.addf %130, %129 : vector<16x16xf32>
    %132 = arith.divf %130, %131 : vector<16x16xf32>
    %133 = vector.extract_strided_slice %126 {offsets = [0, 16], sizes = [16, 16], strides = [1, 1]} : vector<16x64xf32> to vector<16x16xf32>
    %134 = arith.negf %133 : vector<16x16xf32>
    %135 = math.exp %134 : vector<16x16xf32>
    %cst_40 = arith.constant 1.000000e+00 : f32
    %136 = vector.broadcast %cst_40 : f32 to vector<16x16xf32>
    %137 = arith.addf %136, %135 : vector<16x16xf32>
    %138 = arith.divf %136, %137 : vector<16x16xf32>
    %139 = vector.extract_strided_slice %126 {offsets = [0, 32], sizes = [16, 16], strides = [1, 1]} : vector<16x64xf32> to vector<16x16xf32>
    %140 = math.tanh %139 : vector<16x16xf32>
    %141 = vector.extract_strided_slice %126 {offsets = [0, 48], sizes = [16, 16], strides = [1, 1]} : vector<16x64xf32> to vector<16x16xf32>
    %142 = arith.negf %141 : vector<16x16xf32>
    %143 = math.exp %142 : vector<16x16xf32>
    %cst_41 = arith.constant 1.000000e+00 : f32
    %144 = vector.broadcast %cst_41 : f32 to vector<16x16xf32>
    %145 = arith.addf %144, %143 : vector<16x16xf32>
    %146 = arith.divf %144, %145 : vector<16x16xf32>
    %147 = arith.mulf %138, %87 : vector<16x16xf32>
    %148 = arith.mulf %132, %140 : vector<16x16xf32>
    %149 = arith.addf %147, %148 : vector<16x16xf32>
    %150 = math.tanh %149 : vector<16x16xf32>
    %151 = arith.mulf %146, %150 : vector<16x16xf32>
    %c1_i32 = arith.constant 1 : i32
    %152 = vector.broadcast %c1_i32 : i32 to vector<16x1xi32>
    %153 = arith.cmpi sgt, %0, %152 : vector<16x1xi32>
    %c6_i32 = arith.constant 6 : i32
    %154 = vector.broadcast %c6_i32 : i32 to vector<16x1xi32>
    %155 = arith.cmpi sgt, %0, %154 : vector<16x1xi32>
    %156 = vector.shape_cast %153 : vector<16x1xi1> to vector<16x1xi1>
    %157 = vector.broadcast %156 : vector<16x1xi1> to vector<16x16xi1>
    %158 = arith.select %157, %121, %78 : vector<16x16xi1>, vector<16x16xf32>
    %159 = vector.shape_cast %153 : vector<16x1xi1> to vector<16x1xi1>
    %160 = vector.broadcast %159 : vector<16x1xi1> to vector<16x16xi1>
    %161 = arith.select %160, %119, %81 : vector<16x16xi1>, vector<16x16xf32>
    %162 = vector.shape_cast %155 : vector<16x1xi1> to vector<16x1xi1>
    %163 = vector.broadcast %162 : vector<16x1xi1> to vector<16x16xi1>
    %164 = arith.select %163, %151, %84 : vector<16x16xi1>, vector<16x16xf32>
    %165 = vector.shape_cast %155 : vector<16x1xi1> to vector<16x1xi1>
    %166 = vector.broadcast %165 : vector<16x1xi1> to vector<16x16xi1>
    %167 = arith.select %166, %149, %87 : vector<16x16xi1>, vector<16x16xf32>
    %c0_42 = arith.constant 0 : index
    %c2 = arith.constant 2 : index
    %c0_43 = arith.constant 0 : index
    %168 = vector.load %arg0[%c0_42, %c2, %c0_43] : memref<16x8x32xf32, #tpu.memory_space<vmem>>, vector<16x1x32xf32>
    %169 = vector.shape_cast %168 : vector<16x1x32xf32> to vector<16x32xf32>
    %c0_44 = arith.constant 0 : index
    %c5 = arith.constant 5 : index
    %c0_45 = arith.constant 0 : index
    %170 = vector.load %arg0[%c0_44, %c5, %c0_45] : memref<16x8x32xf32, #tpu.memory_space<vmem>>, vector<16x1x32xf32>
    %171 = vector.shape_cast %170 : vector<16x1x32xf32> to vector<16x32xf32>
    %cst_46 = arith.constant dense<0.000000e+00> : vector<16x64xf32>
    %172 = tpu.matmul %169, %1, %cst_46 {dimension_numbers = #tpu.dot_dimension_numbers<[1], [0], [0], [1], [0, 0, 1, 1], [], []>} : vector<16x32xf32>, vector<32x64xf32>, vector<16x64xf32> -> vector<16x64xf32>
    %cst_47 = arith.constant dense<0.000000e+00> : vector<16x64xf32>
    %173 = tpu.matmul %158, %2, %cst_47 {dimension_numbers = #tpu.dot_dimension_numbers<[1], [0], [0], [1], [0, 0, 1, 1], [], []>} : vector<16x16xf32>, vector<16x64xf32>, vector<16x64xf32> -> vector<16x64xf32>
    %174 = arith.addf %172, %173 : vector<16x64xf32>
    %175 = vector.broadcast %3 : vector<1x64xf32> to vector<16x64xf32>
    %176 = arith.addf %174, %175 : vector<16x64xf32>
    %177 = vector.extract_strided_slice %176 {offsets = [0, 0], sizes = [16, 16], strides = [1, 1]} : vector<16x64xf32> to vector<16x16xf32>
    %178 = arith.negf %177 : vector<16x16xf32>
    %179 = math.exp %178 : vector<16x16xf32>
    %cst_48 = arith.constant 1.000000e+00 : f32
    %180 = vector.broadcast %cst_48 : f32 to vector<16x16xf32>
    %181 = arith.addf %180, %179 : vector<16x16xf32>
    %182 = arith.divf %180, %181 : vector<16x16xf32>
    %183 = vector.extract_strided_slice %176 {offsets = [0, 16], sizes = [16, 16], strides = [1, 1]} : vector<16x64xf32> to vector<16x16xf32>
    %184 = arith.negf %183 : vector<16x16xf32>
    %185 = math.exp %184 : vector<16x16xf32>
    %cst_49 = arith.constant 1.000000e+00 : f32
    %186 = vector.broadcast %cst_49 : f32 to vector<16x16xf32>
    %187 = arith.addf %186, %185 : vector<16x16xf32>
    %188 = arith.divf %186, %187 : vector<16x16xf32>
    %189 = vector.extract_strided_slice %176 {offsets = [0, 32], sizes = [16, 16], strides = [1, 1]} : vector<16x64xf32> to vector<16x16xf32>
    %190 = math.tanh %189 : vector<16x16xf32>
    %191 = vector.extract_strided_slice %176 {offsets = [0, 48], sizes = [16, 16], strides = [1, 1]} : vector<16x64xf32> to vector<16x16xf32>
    %192 = arith.negf %191 : vector<16x16xf32>
    %193 = math.exp %192 : vector<16x16xf32>
    %cst_50 = arith.constant 1.000000e+00 : f32
    %194 = vector.broadcast %cst_50 : f32 to vector<16x16xf32>
    %195 = arith.addf %194, %193 : vector<16x16xf32>
    %196 = arith.divf %194, %195 : vector<16x16xf32>
    %197 = arith.mulf %188, %161 : vector<16x16xf32>
    %198 = arith.mulf %182, %190 : vector<16x16xf32>
    %199 = arith.addf %197, %198 : vector<16x16xf32>
    %200 = math.tanh %199 : vector<16x16xf32>
    %201 = arith.mulf %196, %200 : vector<16x16xf32>
    %cst_51 = arith.constant dense<0.000000e+00> : vector<16x64xf32>
    %202 = tpu.matmul %171, %4, %cst_51 {dimension_numbers = #tpu.dot_dimension_numbers<[1], [0], [0], [1], [0, 0, 1, 1], [], []>} : vector<16x32xf32>, vector<32x64xf32>, vector<16x64xf32> -> vector<16x64xf32>
    %cst_52 = arith.constant dense<0.000000e+00> : vector<16x64xf32>
    %203 = tpu.matmul %164, %5, %cst_52 {dimension_numbers = #tpu.dot_dimension_numbers<[1], [0], [0], [1], [0, 0, 1, 1], [], []>} : vector<16x16xf32>, vector<16x64xf32>, vector<16x64xf32> -> vector<16x64xf32>
    %204 = arith.addf %202, %203 : vector<16x64xf32>
    %205 = vector.broadcast %6 : vector<1x64xf32> to vector<16x64xf32>
    %206 = arith.addf %204, %205 : vector<16x64xf32>
    %207 = vector.extract_strided_slice %206 {offsets = [0, 0], sizes = [16, 16], strides = [1, 1]} : vector<16x64xf32> to vector<16x16xf32>
    %208 = arith.negf %207 : vector<16x16xf32>
    %209 = math.exp %208 : vector<16x16xf32>
    %cst_53 = arith.constant 1.000000e+00 : f32
    %210 = vector.broadcast %cst_53 : f32 to vector<16x16xf32>
    %211 = arith.addf %210, %209 : vector<16x16xf32>
    %212 = arith.divf %210, %211 : vector<16x16xf32>
    %213 = vector.extract_strided_slice %206 {offsets = [0, 16], sizes = [16, 16], strides = [1, 1]} : vector<16x64xf32> to vector<16x16xf32>
    %214 = arith.negf %213 : vector<16x16xf32>
    %215 = math.exp %214 : vector<16x16xf32>
    %cst_54 = arith.constant 1.000000e+00 : f32
    %216 = vector.broadcast %cst_54 : f32 to vector<16x16xf32>
    %217 = arith.addf %216, %215 : vector<16x16xf32>
    %218 = arith.divf %216, %217 : vector<16x16xf32>
    %219 = vector.extract_strided_slice %206 {offsets = [0, 32], sizes = [16, 16], strides = [1, 1]} : vector<16x64xf32> to vector<16x16xf32>
    %220 = math.tanh %219 : vector<16x16xf32>
    %221 = vector.extract_strided_slice %206 {offsets = [0, 48], sizes = [16, 16], strides = [1, 1]} : vector<16x64xf32> to vector<16x16xf32>
    %222 = arith.negf %221 : vector<16x16xf32>
    %223 = math.exp %222 : vector<16x16xf32>
    %cst_55 = arith.constant 1.000000e+00 : f32
    %224 = vector.broadcast %cst_55 : f32 to vector<16x16xf32>
    %225 = arith.addf %224, %223 : vector<16x16xf32>
    %226 = arith.divf %224, %225 : vector<16x16xf32>
    %227 = arith.mulf %218, %167 : vector<16x16xf32>
    %228 = arith.mulf %212, %220 : vector<16x16xf32>
    %229 = arith.addf %227, %228 : vector<16x16xf32>
    %230 = math.tanh %229 : vector<16x16xf32>
    %231 = arith.mulf %226, %230 : vector<16x16xf32>
    %c2_i32 = arith.constant 2 : i32
    %232 = vector.broadcast %c2_i32 : i32 to vector<16x1xi32>
    %233 = arith.cmpi sgt, %0, %232 : vector<16x1xi32>
    %c5_i32 = arith.constant 5 : i32
    %234 = vector.broadcast %c5_i32 : i32 to vector<16x1xi32>
    %235 = arith.cmpi sgt, %0, %234 : vector<16x1xi32>
    %236 = vector.shape_cast %233 : vector<16x1xi1> to vector<16x1xi1>
    %237 = vector.broadcast %236 : vector<16x1xi1> to vector<16x16xi1>
    %238 = arith.select %237, %201, %158 : vector<16x16xi1>, vector<16x16xf32>
    %239 = vector.shape_cast %233 : vector<16x1xi1> to vector<16x1xi1>
    %240 = vector.broadcast %239 : vector<16x1xi1> to vector<16x16xi1>
    %241 = arith.select %240, %199, %161 : vector<16x16xi1>, vector<16x16xf32>
    %242 = vector.shape_cast %235 : vector<16x1xi1> to vector<16x1xi1>
    %243 = vector.broadcast %242 : vector<16x1xi1> to vector<16x16xi1>
    %244 = arith.select %243, %231, %164 : vector<16x16xi1>, vector<16x16xf32>
    %245 = vector.shape_cast %235 : vector<16x1xi1> to vector<16x1xi1>
    %246 = vector.broadcast %245 : vector<16x1xi1> to vector<16x16xi1>
    %247 = arith.select %246, %229, %167 : vector<16x16xi1>, vector<16x16xf32>
    %c0_56 = arith.constant 0 : index
    %c3 = arith.constant 3 : index
    %c0_57 = arith.constant 0 : index
    %248 = vector.load %arg0[%c0_56, %c3, %c0_57] : memref<16x8x32xf32, #tpu.memory_space<vmem>>, vector<16x1x32xf32>
    %249 = vector.shape_cast %248 : vector<16x1x32xf32> to vector<16x32xf32>
    %c0_58 = arith.constant 0 : index
    %c4 = arith.constant 4 : index
    %c0_59 = arith.constant 0 : index
    %250 = vector.load %arg0[%c0_58, %c4, %c0_59] : memref<16x8x32xf32, #tpu.memory_space<vmem>>, vector<16x1x32xf32>
    %251 = vector.shape_cast %250 : vector<16x1x32xf32> to vector<16x32xf32>
    %cst_60 = arith.constant dense<0.000000e+00> : vector<16x64xf32>
    %252 = tpu.matmul %249, %1, %cst_60 {dimension_numbers = #tpu.dot_dimension_numbers<[1], [0], [0], [1], [0, 0, 1, 1], [], []>} : vector<16x32xf32>, vector<32x64xf32>, vector<16x64xf32> -> vector<16x64xf32>
    %cst_61 = arith.constant dense<0.000000e+00> : vector<16x64xf32>
    %253 = tpu.matmul %238, %2, %cst_61 {dimension_numbers = #tpu.dot_dimension_numbers<[1], [0], [0], [1], [0, 0, 1, 1], [], []>} : vector<16x16xf32>, vector<16x64xf32>, vector<16x64xf32> -> vector<16x64xf32>
    %254 = arith.addf %252, %253 : vector<16x64xf32>
    %255 = vector.broadcast %3 : vector<1x64xf32> to vector<16x64xf32>
    %256 = arith.addf %254, %255 : vector<16x64xf32>
    %257 = vector.extract_strided_slice %256 {offsets = [0, 0], sizes = [16, 16], strides = [1, 1]} : vector<16x64xf32> to vector<16x16xf32>
    %258 = arith.negf %257 : vector<16x16xf32>
    %259 = math.exp %258 : vector<16x16xf32>
    %cst_62 = arith.constant 1.000000e+00 : f32
    %260 = vector.broadcast %cst_62 : f32 to vector<16x16xf32>
    %261 = arith.addf %260, %259 : vector<16x16xf32>
    %262 = arith.divf %260, %261 : vector<16x16xf32>
    %263 = vector.extract_strided_slice %256 {offsets = [0, 16], sizes = [16, 16], strides = [1, 1]} : vector<16x64xf32> to vector<16x16xf32>
    %264 = arith.negf %263 : vector<16x16xf32>
    %265 = math.exp %264 : vector<16x16xf32>
    %cst_63 = arith.constant 1.000000e+00 : f32
    %266 = vector.broadcast %cst_63 : f32 to vector<16x16xf32>
    %267 = arith.addf %266, %265 : vector<16x16xf32>
    %268 = arith.divf %266, %267 : vector<16x16xf32>
    %269 = vector.extract_strided_slice %256 {offsets = [0, 32], sizes = [16, 16], strides = [1, 1]} : vector<16x64xf32> to vector<16x16xf32>
    %270 = math.tanh %269 : vector<16x16xf32>
    %271 = vector.extract_strided_slice %256 {offsets = [0, 48], sizes = [16, 16], strides = [1, 1]} : vector<16x64xf32> to vector<16x16xf32>
    %272 = arith.negf %271 : vector<16x16xf32>
    %273 = math.exp %272 : vector<16x16xf32>
    %cst_64 = arith.constant 1.000000e+00 : f32
    %274 = vector.broadcast %cst_64 : f32 to vector<16x16xf32>
    %275 = arith.addf %274, %273 : vector<16x16xf32>
    %276 = arith.divf %274, %275 : vector<16x16xf32>
    %277 = arith.mulf %268, %241 : vector<16x16xf32>
    %278 = arith.mulf %262, %270 : vector<16x16xf32>
    %279 = arith.addf %277, %278 : vector<16x16xf32>
    %280 = math.tanh %279 : vector<16x16xf32>
    %281 = arith.mulf %276, %280 : vector<16x16xf32>
    %cst_65 = arith.constant dense<0.000000e+00> : vector<16x64xf32>
    %282 = tpu.matmul %251, %4, %cst_65 {dimension_numbers = #tpu.dot_dimension_numbers<[1], [0], [0], [1], [0, 0, 1, 1], [], []>} : vector<16x32xf32>, vector<32x64xf32>, vector<16x64xf32> -> vector<16x64xf32>
    %cst_66 = arith.constant dense<0.000000e+00> : vector<16x64xf32>
    %283 = tpu.matmul %244, %5, %cst_66 {dimension_numbers = #tpu.dot_dimension_numbers<[1], [0], [0], [1], [0, 0, 1, 1], [], []>} : vector<16x16xf32>, vector<16x64xf32>, vector<16x64xf32> -> vector<16x64xf32>
    %284 = arith.addf %282, %283 : vector<16x64xf32>
    %285 = vector.broadcast %6 : vector<1x64xf32> to vector<16x64xf32>
    %286 = arith.addf %284, %285 : vector<16x64xf32>
    %287 = vector.extract_strided_slice %286 {offsets = [0, 0], sizes = [16, 16], strides = [1, 1]} : vector<16x64xf32> to vector<16x16xf32>
    %288 = arith.negf %287 : vector<16x16xf32>
    %289 = math.exp %288 : vector<16x16xf32>
    %cst_67 = arith.constant 1.000000e+00 : f32
    %290 = vector.broadcast %cst_67 : f32 to vector<16x16xf32>
    %291 = arith.addf %290, %289 : vector<16x16xf32>
    %292 = arith.divf %290, %291 : vector<16x16xf32>
    %293 = vector.extract_strided_slice %286 {offsets = [0, 16], sizes = [16, 16], strides = [1, 1]} : vector<16x64xf32> to vector<16x16xf32>
    %294 = arith.negf %293 : vector<16x16xf32>
    %295 = math.exp %294 : vector<16x16xf32>
    %cst_68 = arith.constant 1.000000e+00 : f32
    %296 = vector.broadcast %cst_68 : f32 to vector<16x16xf32>
    %297 = arith.addf %296, %295 : vector<16x16xf32>
    %298 = arith.divf %296, %297 : vector<16x16xf32>
    %299 = vector.extract_strided_slice %286 {offsets = [0, 32], sizes = [16, 16], strides = [1, 1]} : vector<16x64xf32> to vector<16x16xf32>
    %300 = math.tanh %299 : vector<16x16xf32>
    %301 = vector.extract_strided_slice %286 {offsets = [0, 48], sizes = [16, 16], strides = [1, 1]} : vector<16x64xf32> to vector<16x16xf32>
    %302 = arith.negf %301 : vector<16x16xf32>
    %303 = math.exp %302 : vector<16x16xf32>
    %cst_69 = arith.constant 1.000000e+00 : f32
    %304 = vector.broadcast %cst_69 : f32 to vector<16x16xf32>
    %305 = arith.addf %304, %303 : vector<16x16xf32>
    %306 = arith.divf %304, %305 : vector<16x16xf32>
    %307 = arith.mulf %298, %247 : vector<16x16xf32>
    %308 = arith.mulf %292, %300 : vector<16x16xf32>
    %309 = arith.addf %307, %308 : vector<16x16xf32>
    %310 = math.tanh %309 : vector<16x16xf32>
    %311 = arith.mulf %306, %310 : vector<16x16xf32>
    %c3_i32 = arith.constant 3 : i32
    %312 = vector.broadcast %c3_i32 : i32 to vector<16x1xi32>
    %313 = arith.cmpi sgt, %0, %312 : vector<16x1xi32>
    %c4_i32 = arith.constant 4 : i32
    %314 = vector.broadcast %c4_i32 : i32 to vector<16x1xi32>
    %315 = arith.cmpi sgt, %0, %314 : vector<16x1xi32>
    %316 = vector.shape_cast %313 : vector<16x1xi1> to vector<16x1xi1>
    %317 = vector.broadcast %316 : vector<16x1xi1> to vector<16x16xi1>
    %318 = arith.select %317, %281, %238 : vector<16x16xi1>, vector<16x16xf32>
    %319 = vector.shape_cast %313 : vector<16x1xi1> to vector<16x1xi1>
    %320 = vector.broadcast %319 : vector<16x1xi1> to vector<16x16xi1>
    %321 = arith.select %320, %279, %241 : vector<16x16xi1>, vector<16x16xf32>
    %322 = vector.shape_cast %315 : vector<16x1xi1> to vector<16x1xi1>
    %323 = vector.broadcast %322 : vector<16x1xi1> to vector<16x16xi1>
    %324 = arith.select %323, %311, %244 : vector<16x16xi1>, vector<16x16xf32>
    %325 = vector.shape_cast %315 : vector<16x1xi1> to vector<16x1xi1>
    %326 = vector.broadcast %325 : vector<16x1xi1> to vector<16x16xi1>
    %327 = arith.select %326, %309, %247 : vector<16x16xi1>, vector<16x16xf32>
    %c0_70 = arith.constant 0 : index
    %c4_71 = arith.constant 4 : index
    %c0_72 = arith.constant 0 : index
    %328 = vector.load %arg0[%c0_70, %c4_71, %c0_72] : memref<16x8x32xf32, #tpu.memory_space<vmem>>, vector<16x1x32xf32>
    %329 = vector.shape_cast %328 : vector<16x1x32xf32> to vector<16x32xf32>
    %c0_73 = arith.constant 0 : index
    %c3_74 = arith.constant 3 : index
    %c0_75 = arith.constant 0 : index
    %330 = vector.load %arg0[%c0_73, %c3_74, %c0_75] : memref<16x8x32xf32, #tpu.memory_space<vmem>>, vector<16x1x32xf32>
    %331 = vector.shape_cast %330 : vector<16x1x32xf32> to vector<16x32xf32>
    %cst_76 = arith.constant dense<0.000000e+00> : vector<16x64xf32>
    %332 = tpu.matmul %329, %1, %cst_76 {dimension_numbers = #tpu.dot_dimension_numbers<[1], [0], [0], [1], [0, 0, 1, 1], [], []>} : vector<16x32xf32>, vector<32x64xf32>, vector<16x64xf32> -> vector<16x64xf32>
    %cst_77 = arith.constant dense<0.000000e+00> : vector<16x64xf32>
    %333 = tpu.matmul %318, %2, %cst_77 {dimension_numbers = #tpu.dot_dimension_numbers<[1], [0], [0], [1], [0, 0, 1, 1], [], []>} : vector<16x16xf32>, vector<16x64xf32>, vector<16x64xf32> -> vector<16x64xf32>
    %334 = arith.addf %332, %333 : vector<16x64xf32>
    %335 = vector.broadcast %3 : vector<1x64xf32> to vector<16x64xf32>
    %336 = arith.addf %334, %335 : vector<16x64xf32>
    %337 = vector.extract_strided_slice %336 {offsets = [0, 0], sizes = [16, 16], strides = [1, 1]} : vector<16x64xf32> to vector<16x16xf32>
    %338 = arith.negf %337 : vector<16x16xf32>
    %339 = math.exp %338 : vector<16x16xf32>
    %cst_78 = arith.constant 1.000000e+00 : f32
    %340 = vector.broadcast %cst_78 : f32 to vector<16x16xf32>
    %341 = arith.addf %340, %339 : vector<16x16xf32>
    %342 = arith.divf %340, %341 : vector<16x16xf32>
    %343 = vector.extract_strided_slice %336 {offsets = [0, 16], sizes = [16, 16], strides = [1, 1]} : vector<16x64xf32> to vector<16x16xf32>
    %344 = arith.negf %343 : vector<16x16xf32>
    %345 = math.exp %344 : vector<16x16xf32>
    %cst_79 = arith.constant 1.000000e+00 : f32
    %346 = vector.broadcast %cst_79 : f32 to vector<16x16xf32>
    %347 = arith.addf %346, %345 : vector<16x16xf32>
    %348 = arith.divf %346, %347 : vector<16x16xf32>
    %349 = vector.extract_strided_slice %336 {offsets = [0, 32], sizes = [16, 16], strides = [1, 1]} : vector<16x64xf32> to vector<16x16xf32>
    %350 = math.tanh %349 : vector<16x16xf32>
    %351 = vector.extract_strided_slice %336 {offsets = [0, 48], sizes = [16, 16], strides = [1, 1]} : vector<16x64xf32> to vector<16x16xf32>
    %352 = arith.negf %351 : vector<16x16xf32>
    %353 = math.exp %352 : vector<16x16xf32>
    %cst_80 = arith.constant 1.000000e+00 : f32
    %354 = vector.broadcast %cst_80 : f32 to vector<16x16xf32>
    %355 = arith.addf %354, %353 : vector<16x16xf32>
    %356 = arith.divf %354, %355 : vector<16x16xf32>
    %357 = arith.mulf %348, %321 : vector<16x16xf32>
    %358 = arith.mulf %342, %350 : vector<16x16xf32>
    %359 = arith.addf %357, %358 : vector<16x16xf32>
    %360 = math.tanh %359 : vector<16x16xf32>
    %361 = arith.mulf %356, %360 : vector<16x16xf32>
    %cst_81 = arith.constant dense<0.000000e+00> : vector<16x64xf32>
    %362 = tpu.matmul %331, %4, %cst_81 {dimension_numbers = #tpu.dot_dimension_numbers<[1], [0], [0], [1], [0, 0, 1, 1], [], []>} : vector<16x32xf32>, vector<32x64xf32>, vector<16x64xf32> -> vector<16x64xf32>
    %cst_82 = arith.constant dense<0.000000e+00> : vector<16x64xf32>
    %363 = tpu.matmul %324, %5, %cst_82 {dimension_numbers = #tpu.dot_dimension_numbers<[1], [0], [0], [1], [0, 0, 1, 1], [], []>} : vector<16x16xf32>, vector<16x64xf32>, vector<16x64xf32> -> vector<16x64xf32>
    %364 = arith.addf %362, %363 : vector<16x64xf32>
    %365 = vector.broadcast %6 : vector<1x64xf32> to vector<16x64xf32>
    %366 = arith.addf %364, %365 : vector<16x64xf32>
    %367 = vector.extract_strided_slice %366 {offsets = [0, 0], sizes = [16, 16], strides = [1, 1]} : vector<16x64xf32> to vector<16x16xf32>
    %368 = arith.negf %367 : vector<16x16xf32>
    %369 = math.exp %368 : vector<16x16xf32>
    %cst_83 = arith.constant 1.000000e+00 : f32
    %370 = vector.broadcast %cst_83 : f32 to vector<16x16xf32>
    %371 = arith.addf %370, %369 : vector<16x16xf32>
    %372 = arith.divf %370, %371 : vector<16x16xf32>
    %373 = vector.extract_strided_slice %366 {offsets = [0, 16], sizes = [16, 16], strides = [1, 1]} : vector<16x64xf32> to vector<16x16xf32>
    %374 = arith.negf %373 : vector<16x16xf32>
    %375 = math.exp %374 : vector<16x16xf32>
    %cst_84 = arith.constant 1.000000e+00 : f32
    %376 = vector.broadcast %cst_84 : f32 to vector<16x16xf32>
    %377 = arith.addf %376, %375 : vector<16x16xf32>
    %378 = arith.divf %376, %377 : vector<16x16xf32>
    %379 = vector.extract_strided_slice %366 {offsets = [0, 32], sizes = [16, 16], strides = [1, 1]} : vector<16x64xf32> to vector<16x16xf32>
    %380 = math.tanh %379 : vector<16x16xf32>
    %381 = vector.extract_strided_slice %366 {offsets = [0, 48], sizes = [16, 16], strides = [1, 1]} : vector<16x64xf32> to vector<16x16xf32>
    %382 = arith.negf %381 : vector<16x16xf32>
    %383 = math.exp %382 : vector<16x16xf32>
    %cst_85 = arith.constant 1.000000e+00 : f32
    %384 = vector.broadcast %cst_85 : f32 to vector<16x16xf32>
    %385 = arith.addf %384, %383 : vector<16x16xf32>
    %386 = arith.divf %384, %385 : vector<16x16xf32>
    %387 = arith.mulf %378, %327 : vector<16x16xf32>
    %388 = arith.mulf %372, %380 : vector<16x16xf32>
    %389 = arith.addf %387, %388 : vector<16x16xf32>
    %390 = math.tanh %389 : vector<16x16xf32>
    %391 = arith.mulf %386, %390 : vector<16x16xf32>
    %c4_i32_86 = arith.constant 4 : i32
    %392 = vector.broadcast %c4_i32_86 : i32 to vector<16x1xi32>
    %393 = arith.cmpi sgt, %0, %392 : vector<16x1xi32>
    %c3_i32_87 = arith.constant 3 : i32
    %394 = vector.broadcast %c3_i32_87 : i32 to vector<16x1xi32>
    %395 = arith.cmpi sgt, %0, %394 : vector<16x1xi32>
    %396 = vector.shape_cast %393 : vector<16x1xi1> to vector<16x1xi1>
    %397 = vector.broadcast %396 : vector<16x1xi1> to vector<16x16xi1>
    %398 = arith.select %397, %361, %318 : vector<16x16xi1>, vector<16x16xf32>
    %399 = vector.shape_cast %393 : vector<16x1xi1> to vector<16x1xi1>
    %400 = vector.broadcast %399 : vector<16x1xi1> to vector<16x16xi1>
    %401 = arith.select %400, %359, %321 : vector<16x16xi1>, vector<16x16xf32>
    %402 = vector.shape_cast %395 : vector<16x1xi1> to vector<16x1xi1>
    %403 = vector.broadcast %402 : vector<16x1xi1> to vector<16x16xi1>
    %404 = arith.select %403, %391, %324 : vector<16x16xi1>, vector<16x16xf32>
    %405 = vector.shape_cast %395 : vector<16x1xi1> to vector<16x1xi1>
    %406 = vector.broadcast %405 : vector<16x1xi1> to vector<16x16xi1>
    %407 = arith.select %406, %389, %327 : vector<16x16xi1>, vector<16x16xf32>
    %c0_88 = arith.constant 0 : index
    %c5_89 = arith.constant 5 : index
    %c0_90 = arith.constant 0 : index
    %408 = vector.load %arg0[%c0_88, %c5_89, %c0_90] : memref<16x8x32xf32, #tpu.memory_space<vmem>>, vector<16x1x32xf32>
    %409 = vector.shape_cast %408 : vector<16x1x32xf32> to vector<16x32xf32>
    %c0_91 = arith.constant 0 : index
    %c2_92 = arith.constant 2 : index
    %c0_93 = arith.constant 0 : index
    %410 = vector.load %arg0[%c0_91, %c2_92, %c0_93] : memref<16x8x32xf32, #tpu.memory_space<vmem>>, vector<16x1x32xf32>
    %411 = vector.shape_cast %410 : vector<16x1x32xf32> to vector<16x32xf32>
    %cst_94 = arith.constant dense<0.000000e+00> : vector<16x64xf32>
    %412 = tpu.matmul %409, %1, %cst_94 {dimension_numbers = #tpu.dot_dimension_numbers<[1], [0], [0], [1], [0, 0, 1, 1], [], []>} : vector<16x32xf32>, vector<32x64xf32>, vector<16x64xf32> -> vector<16x64xf32>
    %cst_95 = arith.constant dense<0.000000e+00> : vector<16x64xf32>
    %413 = tpu.matmul %398, %2, %cst_95 {dimension_numbers = #tpu.dot_dimension_numbers<[1], [0], [0], [1], [0, 0, 1, 1], [], []>} : vector<16x16xf32>, vector<16x64xf32>, vector<16x64xf32> -> vector<16x64xf32>
    %414 = arith.addf %412, %413 : vector<16x64xf32>
    %415 = vector.broadcast %3 : vector<1x64xf32> to vector<16x64xf32>
    %416 = arith.addf %414, %415 : vector<16x64xf32>
    %417 = vector.extract_strided_slice %416 {offsets = [0, 0], sizes = [16, 16], strides = [1, 1]} : vector<16x64xf32> to vector<16x16xf32>
    %418 = arith.negf %417 : vector<16x16xf32>
    %419 = math.exp %418 : vector<16x16xf32>
    %cst_96 = arith.constant 1.000000e+00 : f32
    %420 = vector.broadcast %cst_96 : f32 to vector<16x16xf32>
    %421 = arith.addf %420, %419 : vector<16x16xf32>
    %422 = arith.divf %420, %421 : vector<16x16xf32>
    %423 = vector.extract_strided_slice %416 {offsets = [0, 16], sizes = [16, 16], strides = [1, 1]} : vector<16x64xf32> to vector<16x16xf32>
    %424 = arith.negf %423 : vector<16x16xf32>
    %425 = math.exp %424 : vector<16x16xf32>
    %cst_97 = arith.constant 1.000000e+00 : f32
    %426 = vector.broadcast %cst_97 : f32 to vector<16x16xf32>
    %427 = arith.addf %426, %425 : vector<16x16xf32>
    %428 = arith.divf %426, %427 : vector<16x16xf32>
    %429 = vector.extract_strided_slice %416 {offsets = [0, 32], sizes = [16, 16], strides = [1, 1]} : vector<16x64xf32> to vector<16x16xf32>
    %430 = math.tanh %429 : vector<16x16xf32>
    %431 = vector.extract_strided_slice %416 {offsets = [0, 48], sizes = [16, 16], strides = [1, 1]} : vector<16x64xf32> to vector<16x16xf32>
    %432 = arith.negf %431 : vector<16x16xf32>
    %433 = math.exp %432 : vector<16x16xf32>
    %cst_98 = arith.constant 1.000000e+00 : f32
    %434 = vector.broadcast %cst_98 : f32 to vector<16x16xf32>
    %435 = arith.addf %434, %433 : vector<16x16xf32>
    %436 = arith.divf %434, %435 : vector<16x16xf32>
    %437 = arith.mulf %428, %401 : vector<16x16xf32>
    %438 = arith.mulf %422, %430 : vector<16x16xf32>
    %439 = arith.addf %437, %438 : vector<16x16xf32>
    %440 = math.tanh %439 : vector<16x16xf32>
    %441 = arith.mulf %436, %440 : vector<16x16xf32>
    %cst_99 = arith.constant dense<0.000000e+00> : vector<16x64xf32>
    %442 = tpu.matmul %411, %4, %cst_99 {dimension_numbers = #tpu.dot_dimension_numbers<[1], [0], [0], [1], [0, 0, 1, 1], [], []>} : vector<16x32xf32>, vector<32x64xf32>, vector<16x64xf32> -> vector<16x64xf32>
    %cst_100 = arith.constant dense<0.000000e+00> : vector<16x64xf32>
    %443 = tpu.matmul %404, %5, %cst_100 {dimension_numbers = #tpu.dot_dimension_numbers<[1], [0], [0], [1], [0, 0, 1, 1], [], []>} : vector<16x16xf32>, vector<16x64xf32>, vector<16x64xf32> -> vector<16x64xf32>
    %444 = arith.addf %442, %443 : vector<16x64xf32>
    %445 = vector.broadcast %6 : vector<1x64xf32> to vector<16x64xf32>
    %446 = arith.addf %444, %445 : vector<16x64xf32>
    %447 = vector.extract_strided_slice %446 {offsets = [0, 0], sizes = [16, 16], strides = [1, 1]} : vector<16x64xf32> to vector<16x16xf32>
    %448 = arith.negf %447 : vector<16x16xf32>
    %449 = math.exp %448 : vector<16x16xf32>
    %cst_101 = arith.constant 1.000000e+00 : f32
    %450 = vector.broadcast %cst_101 : f32 to vector<16x16xf32>
    %451 = arith.addf %450, %449 : vector<16x16xf32>
    %452 = arith.divf %450, %451 : vector<16x16xf32>
    %453 = vector.extract_strided_slice %446 {offsets = [0, 16], sizes = [16, 16], strides = [1, 1]} : vector<16x64xf32> to vector<16x16xf32>
    %454 = arith.negf %453 : vector<16x16xf32>
    %455 = math.exp %454 : vector<16x16xf32>
    %cst_102 = arith.constant 1.000000e+00 : f32
    %456 = vector.broadcast %cst_102 : f32 to vector<16x16xf32>
    %457 = arith.addf %456, %455 : vector<16x16xf32>
    %458 = arith.divf %456, %457 : vector<16x16xf32>
    %459 = vector.extract_strided_slice %446 {offsets = [0, 32], sizes = [16, 16], strides = [1, 1]} : vector<16x64xf32> to vector<16x16xf32>
    %460 = math.tanh %459 : vector<16x16xf32>
    %461 = vector.extract_strided_slice %446 {offsets = [0, 48], sizes = [16, 16], strides = [1, 1]} : vector<16x64xf32> to vector<16x16xf32>
    %462 = arith.negf %461 : vector<16x16xf32>
    %463 = math.exp %462 : vector<16x16xf32>
    %cst_103 = arith.constant 1.000000e+00 : f32
    %464 = vector.broadcast %cst_103 : f32 to vector<16x16xf32>
    %465 = arith.addf %464, %463 : vector<16x16xf32>
    %466 = arith.divf %464, %465 : vector<16x16xf32>
    %467 = arith.mulf %458, %407 : vector<16x16xf32>
    %468 = arith.mulf %452, %460 : vector<16x16xf32>
    %469 = arith.addf %467, %468 : vector<16x16xf32>
    %470 = math.tanh %469 : vector<16x16xf32>
    %471 = arith.mulf %466, %470 : vector<16x16xf32>
    %c5_i32_104 = arith.constant 5 : i32
    %472 = vector.broadcast %c5_i32_104 : i32 to vector<16x1xi32>
    %473 = arith.cmpi sgt, %0, %472 : vector<16x1xi32>
    %c2_i32_105 = arith.constant 2 : i32
    %474 = vector.broadcast %c2_i32_105 : i32 to vector<16x1xi32>
    %475 = arith.cmpi sgt, %0, %474 : vector<16x1xi32>
    %476 = vector.shape_cast %473 : vector<16x1xi1> to vector<16x1xi1>
    %477 = vector.broadcast %476 : vector<16x1xi1> to vector<16x16xi1>
    %478 = arith.select %477, %441, %398 : vector<16x16xi1>, vector<16x16xf32>
    %479 = vector.shape_cast %473 : vector<16x1xi1> to vector<16x1xi1>
    %480 = vector.broadcast %479 : vector<16x1xi1> to vector<16x16xi1>
    %481 = arith.select %480, %439, %401 : vector<16x16xi1>, vector<16x16xf32>
    %482 = vector.shape_cast %475 : vector<16x1xi1> to vector<16x1xi1>
    %483 = vector.broadcast %482 : vector<16x1xi1> to vector<16x16xi1>
    %484 = arith.select %483, %471, %404 : vector<16x16xi1>, vector<16x16xf32>
    %485 = vector.shape_cast %475 : vector<16x1xi1> to vector<16x1xi1>
    %486 = vector.broadcast %485 : vector<16x1xi1> to vector<16x16xi1>
    %487 = arith.select %486, %469, %407 : vector<16x16xi1>, vector<16x16xf32>
    %c0_106 = arith.constant 0 : index
    %c6_107 = arith.constant 6 : index
    %c0_108 = arith.constant 0 : index
    %488 = vector.load %arg0[%c0_106, %c6_107, %c0_108] : memref<16x8x32xf32, #tpu.memory_space<vmem>>, vector<16x1x32xf32>
    %489 = vector.shape_cast %488 : vector<16x1x32xf32> to vector<16x32xf32>
    %c0_109 = arith.constant 0 : index
    %c1_110 = arith.constant 1 : index
    %c0_111 = arith.constant 0 : index
    %490 = vector.load %arg0[%c0_109, %c1_110, %c0_111] : memref<16x8x32xf32, #tpu.memory_space<vmem>>, vector<16x1x32xf32>
    %491 = vector.shape_cast %490 : vector<16x1x32xf32> to vector<16x32xf32>
    %cst_112 = arith.constant dense<0.000000e+00> : vector<16x64xf32>
    %492 = tpu.matmul %489, %1, %cst_112 {dimension_numbers = #tpu.dot_dimension_numbers<[1], [0], [0], [1], [0, 0, 1, 1], [], []>} : vector<16x32xf32>, vector<32x64xf32>, vector<16x64xf32> -> vector<16x64xf32>
    %cst_113 = arith.constant dense<0.000000e+00> : vector<16x64xf32>
    %493 = tpu.matmul %478, %2, %cst_113 {dimension_numbers = #tpu.dot_dimension_numbers<[1], [0], [0], [1], [0, 0, 1, 1], [], []>} : vector<16x16xf32>, vector<16x64xf32>, vector<16x64xf32> -> vector<16x64xf32>
    %494 = arith.addf %492, %493 : vector<16x64xf32>
    %495 = vector.broadcast %3 : vector<1x64xf32> to vector<16x64xf32>
    %496 = arith.addf %494, %495 : vector<16x64xf32>
    %497 = vector.extract_strided_slice %496 {offsets = [0, 0], sizes = [16, 16], strides = [1, 1]} : vector<16x64xf32> to vector<16x16xf32>
    %498 = arith.negf %497 : vector<16x16xf32>
    %499 = math.exp %498 : vector<16x16xf32>
    %cst_114 = arith.constant 1.000000e+00 : f32
    %500 = vector.broadcast %cst_114 : f32 to vector<16x16xf32>
    %501 = arith.addf %500, %499 : vector<16x16xf32>
    %502 = arith.divf %500, %501 : vector<16x16xf32>
    %503 = vector.extract_strided_slice %496 {offsets = [0, 16], sizes = [16, 16], strides = [1, 1]} : vector<16x64xf32> to vector<16x16xf32>
    %504 = arith.negf %503 : vector<16x16xf32>
    %505 = math.exp %504 : vector<16x16xf32>
    %cst_115 = arith.constant 1.000000e+00 : f32
    %506 = vector.broadcast %cst_115 : f32 to vector<16x16xf32>
    %507 = arith.addf %506, %505 : vector<16x16xf32>
    %508 = arith.divf %506, %507 : vector<16x16xf32>
    %509 = vector.extract_strided_slice %496 {offsets = [0, 32], sizes = [16, 16], strides = [1, 1]} : vector<16x64xf32> to vector<16x16xf32>
    %510 = math.tanh %509 : vector<16x16xf32>
    %511 = vector.extract_strided_slice %496 {offsets = [0, 48], sizes = [16, 16], strides = [1, 1]} : vector<16x64xf32> to vector<16x16xf32>
    %512 = arith.negf %511 : vector<16x16xf32>
    %513 = math.exp %512 : vector<16x16xf32>
    %cst_116 = arith.constant 1.000000e+00 : f32
    %514 = vector.broadcast %cst_116 : f32 to vector<16x16xf32>
    %515 = arith.addf %514, %513 : vector<16x16xf32>
    %516 = arith.divf %514, %515 : vector<16x16xf32>
    %517 = arith.mulf %508, %481 : vector<16x16xf32>
    %518 = arith.mulf %502, %510 : vector<16x16xf32>
    %519 = arith.addf %517, %518 : vector<16x16xf32>
    %520 = math.tanh %519 : vector<16x16xf32>
    %521 = arith.mulf %516, %520 : vector<16x16xf32>
    %cst_117 = arith.constant dense<0.000000e+00> : vector<16x64xf32>
    %522 = tpu.matmul %491, %4, %cst_117 {dimension_numbers = #tpu.dot_dimension_numbers<[1], [0], [0], [1], [0, 0, 1, 1], [], []>} : vector<16x32xf32>, vector<32x64xf32>, vector<16x64xf32> -> vector<16x64xf32>
    %cst_118 = arith.constant dense<0.000000e+00> : vector<16x64xf32>
    %523 = tpu.matmul %484, %5, %cst_118 {dimension_numbers = #tpu.dot_dimension_numbers<[1], [0], [0], [1], [0, 0, 1, 1], [], []>} : vector<16x16xf32>, vector<16x64xf32>, vector<16x64xf32> -> vector<16x64xf32>
    %524 = arith.addf %522, %523 : vector<16x64xf32>
    %525 = vector.broadcast %6 : vector<1x64xf32> to vector<16x64xf32>
    %526 = arith.addf %524, %525 : vector<16x64xf32>
    %527 = vector.extract_strided_slice %526 {offsets = [0, 0], sizes = [16, 16], strides = [1, 1]} : vector<16x64xf32> to vector<16x16xf32>
    %528 = arith.negf %527 : vector<16x16xf32>
    %529 = math.exp %528 : vector<16x16xf32>
    %cst_119 = arith.constant 1.000000e+00 : f32
    %530 = vector.broadcast %cst_119 : f32 to vector<16x16xf32>
    %531 = arith.addf %530, %529 : vector<16x16xf32>
    %532 = arith.divf %530, %531 : vector<16x16xf32>
    %533 = vector.extract_strided_slice %526 {offsets = [0, 16], sizes = [16, 16], strides = [1, 1]} : vector<16x64xf32> to vector<16x16xf32>
    %534 = arith.negf %533 : vector<16x16xf32>
    %535 = math.exp %534 : vector<16x16xf32>
    %cst_120 = arith.constant 1.000000e+00 : f32
    %536 = vector.broadcast %cst_120 : f32 to vector<16x16xf32>
    %537 = arith.addf %536, %535 : vector<16x16xf32>
    %538 = arith.divf %536, %537 : vector<16x16xf32>
    %539 = vector.extract_strided_slice %526 {offsets = [0, 32], sizes = [16, 16], strides = [1, 1]} : vector<16x64xf32> to vector<16x16xf32>
    %540 = math.tanh %539 : vector<16x16xf32>
    %541 = vector.extract_strided_slice %526 {offsets = [0, 48], sizes = [16, 16], strides = [1, 1]} : vector<16x64xf32> to vector<16x16xf32>
    %542 = arith.negf %541 : vector<16x16xf32>
    %543 = math.exp %542 : vector<16x16xf32>
    %cst_121 = arith.constant 1.000000e+00 : f32
    %544 = vector.broadcast %cst_121 : f32 to vector<16x16xf32>
    %545 = arith.addf %544, %543 : vector<16x16xf32>
    %546 = arith.divf %544, %545 : vector<16x16xf32>
    %547 = arith.mulf %538, %487 : vector<16x16xf32>
    %548 = arith.mulf %532, %540 : vector<16x16xf32>
    %549 = arith.addf %547, %548 : vector<16x16xf32>
    %550 = math.tanh %549 : vector<16x16xf32>
    %551 = arith.mulf %546, %550 : vector<16x16xf32>
    %c6_i32_122 = arith.constant 6 : i32
    %552 = vector.broadcast %c6_i32_122 : i32 to vector<16x1xi32>
    %553 = arith.cmpi sgt, %0, %552 : vector<16x1xi32>
    %c1_i32_123 = arith.constant 1 : i32
    %554 = vector.broadcast %c1_i32_123 : i32 to vector<16x1xi32>
    %555 = arith.cmpi sgt, %0, %554 : vector<16x1xi32>
    %556 = vector.shape_cast %553 : vector<16x1xi1> to vector<16x1xi1>
    %557 = vector.broadcast %556 : vector<16x1xi1> to vector<16x16xi1>
    %558 = arith.select %557, %521, %478 : vector<16x16xi1>, vector<16x16xf32>
    %559 = vector.shape_cast %553 : vector<16x1xi1> to vector<16x1xi1>
    %560 = vector.broadcast %559 : vector<16x1xi1> to vector<16x16xi1>
    %561 = arith.select %560, %519, %481 : vector<16x16xi1>, vector<16x16xf32>
    %562 = vector.shape_cast %555 : vector<16x1xi1> to vector<16x1xi1>
    %563 = vector.broadcast %562 : vector<16x1xi1> to vector<16x16xi1>
    %564 = arith.select %563, %551, %484 : vector<16x16xi1>, vector<16x16xf32>
    %565 = vector.shape_cast %555 : vector<16x1xi1> to vector<16x1xi1>
    %566 = vector.broadcast %565 : vector<16x1xi1> to vector<16x16xi1>
    %567 = arith.select %566, %549, %487 : vector<16x16xi1>, vector<16x16xf32>
    %c0_124 = arith.constant 0 : index
    %c7_125 = arith.constant 7 : index
    %c0_126 = arith.constant 0 : index
    %568 = vector.load %arg0[%c0_124, %c7_125, %c0_126] : memref<16x8x32xf32, #tpu.memory_space<vmem>>, vector<16x1x32xf32>
    %569 = vector.shape_cast %568 : vector<16x1x32xf32> to vector<16x32xf32>
    %c0_127 = arith.constant 0 : index
    %c0_128 = arith.constant 0 : index
    %c0_129 = arith.constant 0 : index
    %570 = vector.load %arg0[%c0_127, %c0_128, %c0_129] : memref<16x8x32xf32, #tpu.memory_space<vmem>>, vector<16x1x32xf32>
    %571 = vector.shape_cast %570 : vector<16x1x32xf32> to vector<16x32xf32>
    %cst_130 = arith.constant dense<0.000000e+00> : vector<16x64xf32>
    %572 = tpu.matmul %569, %1, %cst_130 {dimension_numbers = #tpu.dot_dimension_numbers<[1], [0], [0], [1], [0, 0, 1, 1], [], []>} : vector<16x32xf32>, vector<32x64xf32>, vector<16x64xf32> -> vector<16x64xf32>
    %cst_131 = arith.constant dense<0.000000e+00> : vector<16x64xf32>
    %573 = tpu.matmul %558, %2, %cst_131 {dimension_numbers = #tpu.dot_dimension_numbers<[1], [0], [0], [1], [0, 0, 1, 1], [], []>} : vector<16x16xf32>, vector<16x64xf32>, vector<16x64xf32> -> vector<16x64xf32>
    %574 = arith.addf %572, %573 : vector<16x64xf32>
    %575 = vector.broadcast %3 : vector<1x64xf32> to vector<16x64xf32>
    %576 = arith.addf %574, %575 : vector<16x64xf32>
    %577 = vector.extract_strided_slice %576 {offsets = [0, 0], sizes = [16, 16], strides = [1, 1]} : vector<16x64xf32> to vector<16x16xf32>
    %578 = arith.negf %577 : vector<16x16xf32>
    %579 = math.exp %578 : vector<16x16xf32>
    %cst_132 = arith.constant 1.000000e+00 : f32
    %580 = vector.broadcast %cst_132 : f32 to vector<16x16xf32>
    %581 = arith.addf %580, %579 : vector<16x16xf32>
    %582 = arith.divf %580, %581 : vector<16x16xf32>
    %583 = vector.extract_strided_slice %576 {offsets = [0, 16], sizes = [16, 16], strides = [1, 1]} : vector<16x64xf32> to vector<16x16xf32>
    %584 = arith.negf %583 : vector<16x16xf32>
    %585 = math.exp %584 : vector<16x16xf32>
    %cst_133 = arith.constant 1.000000e+00 : f32
    %586 = vector.broadcast %cst_133 : f32 to vector<16x16xf32>
    %587 = arith.addf %586, %585 : vector<16x16xf32>
    %588 = arith.divf %586, %587 : vector<16x16xf32>
    %589 = vector.extract_strided_slice %576 {offsets = [0, 32], sizes = [16, 16], strides = [1, 1]} : vector<16x64xf32> to vector<16x16xf32>
    %590 = math.tanh %589 : vector<16x16xf32>
    %591 = arith.mulf %588, %561 : vector<16x16xf32>
    %592 = arith.mulf %582, %590 : vector<16x16xf32>
    %593 = arith.addf %591, %592 : vector<16x16xf32>
    %cst_134 = arith.constant dense<0.000000e+00> : vector<16x64xf32>
    %594 = tpu.matmul %571, %4, %cst_134 {dimension_numbers = #tpu.dot_dimension_numbers<[1], [0], [0], [1], [0, 0, 1, 1], [], []>} : vector<16x32xf32>, vector<32x64xf32>, vector<16x64xf32> -> vector<16x64xf32>
    %cst_135 = arith.constant dense<0.000000e+00> : vector<16x64xf32>
    %595 = tpu.matmul %564, %5, %cst_135 {dimension_numbers = #tpu.dot_dimension_numbers<[1], [0], [0], [1], [0, 0, 1, 1], [], []>} : vector<16x16xf32>, vector<16x64xf32>, vector<16x64xf32> -> vector<16x64xf32>
    %596 = arith.addf %594, %595 : vector<16x64xf32>
    %597 = vector.broadcast %6 : vector<1x64xf32> to vector<16x64xf32>
    %598 = arith.addf %596, %597 : vector<16x64xf32>
    %599 = vector.extract_strided_slice %598 {offsets = [0, 0], sizes = [16, 16], strides = [1, 1]} : vector<16x64xf32> to vector<16x16xf32>
    %600 = arith.negf %599 : vector<16x16xf32>
    %601 = math.exp %600 : vector<16x16xf32>
    %cst_136 = arith.constant 1.000000e+00 : f32
    %602 = vector.broadcast %cst_136 : f32 to vector<16x16xf32>
    %603 = arith.addf %602, %601 : vector<16x16xf32>
    %604 = arith.divf %602, %603 : vector<16x16xf32>
    %605 = vector.extract_strided_slice %598 {offsets = [0, 16], sizes = [16, 16], strides = [1, 1]} : vector<16x64xf32> to vector<16x16xf32>
    %606 = arith.negf %605 : vector<16x16xf32>
    %607 = math.exp %606 : vector<16x16xf32>
    %cst_137 = arith.constant 1.000000e+00 : f32
    %608 = vector.broadcast %cst_137 : f32 to vector<16x16xf32>
    %609 = arith.addf %608, %607 : vector<16x16xf32>
    %610 = arith.divf %608, %609 : vector<16x16xf32>
    %611 = vector.extract_strided_slice %598 {offsets = [0, 32], sizes = [16, 16], strides = [1, 1]} : vector<16x64xf32> to vector<16x16xf32>
    %612 = math.tanh %611 : vector<16x16xf32>
    %613 = arith.mulf %610, %567 : vector<16x16xf32>
    %614 = arith.mulf %604, %612 : vector<16x16xf32>
    %615 = arith.addf %613, %614 : vector<16x16xf32>
    %c7_i32_138 = arith.constant 7 : i32
    %616 = vector.broadcast %c7_i32_138 : i32 to vector<16x1xi32>
    %617 = arith.cmpi sgt, %0, %616 : vector<16x1xi32>
    %c0_i32_139 = arith.constant 0 : i32
    %618 = vector.broadcast %c0_i32_139 : i32 to vector<16x1xi32>
    %619 = arith.cmpi sgt, %0, %618 : vector<16x1xi32>
    %620 = vector.shape_cast %617 : vector<16x1xi1> to vector<16x1xi1>
    %621 = vector.broadcast %620 : vector<16x1xi1> to vector<16x16xi1>
    %622 = arith.select %621, %593, %561 : vector<16x16xi1>, vector<16x16xf32>
    %623 = vector.shape_cast %619 : vector<16x1xi1> to vector<16x1xi1>
    %624 = vector.broadcast %623 : vector<16x1xi1> to vector<16x16xi1>
    %625 = arith.select %624, %615, %567 : vector<16x16xi1>, vector<16x16xf32>
    %626 = vector.extract_strided_slice %622 {offsets = [0, 0], sizes = [8, 16], strides = [1, 1]} : vector<16x16xf32> to vector<8x16xf32>
    %627 = vector.extract_strided_slice %622 {offsets = [8, 0], sizes = [8, 16], strides = [1, 1]} : vector<16x16xf32> to vector<8x16xf32>
    %628 = vector.extract_strided_slice %625 {offsets = [0, 0], sizes = [8, 16], strides = [1, 1]} : vector<16x16xf32> to vector<8x16xf32>
    %629 = vector.extract_strided_slice %625 {offsets = [8, 0], sizes = [8, 16], strides = [1, 1]} : vector<16x16xf32> to vector<8x16xf32>
    %630 = arith.subf %626, %627 : vector<8x16xf32>
    %631 = math.absf %630 : vector<8x16xf32>
    %632 = arith.subf %628, %629 : vector<8x16xf32>
    %633 = math.absf %632 : vector<8x16xf32>
    %634 = arith.mulf %626, %627 : vector<8x16xf32>
    %635 = arith.mulf %628, %629 : vector<8x16xf32>
    %c0_140 = arith.constant 0 : index
    %c0_141 = arith.constant 0 : index
    %636 = vector.load %arg8[%c0_140, %c0_141] : memref<16x32xf32, #tpu.memory_space<vmem>>, vector<16x32xf32>
    %cst_142 = arith.constant dense<0.000000e+00> : vector<8x32xf32>
    %637 = tpu.matmul %631, %636, %cst_142 {dimension_numbers = #tpu.dot_dimension_numbers<[1], [0], [0], [1], [0, 0, 1, 1], [], []>} : vector<8x16xf32>, vector<16x32xf32>, vector<8x32xf32> -> vector<8x32xf32>
    %c0_143 = arith.constant 0 : index
    %c0_144 = arith.constant 0 : index
    %638 = vector.load %arg9[%c0_143, %c0_144] : memref<16x32xf32, #tpu.memory_space<vmem>>, vector<16x32xf32>
    %cst_145 = arith.constant dense<0.000000e+00> : vector<8x32xf32>
    %639 = tpu.matmul %633, %638, %cst_145 {dimension_numbers = #tpu.dot_dimension_numbers<[1], [0], [0], [1], [0, 0, 1, 1], [], []>} : vector<8x16xf32>, vector<16x32xf32>, vector<8x32xf32> -> vector<8x32xf32>
    %640 = arith.addf %637, %639 : vector<8x32xf32>
    %c0_146 = arith.constant 0 : index
    %c0_147 = arith.constant 0 : index
    %641 = vector.load %arg10[%c0_146, %c0_147] : memref<16x32xf32, #tpu.memory_space<vmem>>, vector<16x32xf32>
    %cst_148 = arith.constant dense<0.000000e+00> : vector<8x32xf32>
    %642 = tpu.matmul %634, %641, %cst_148 {dimension_numbers = #tpu.dot_dimension_numbers<[1], [0], [0], [1], [0, 0, 1, 1], [], []>} : vector<8x16xf32>, vector<16x32xf32>, vector<8x32xf32> -> vector<8x32xf32>
    %643 = arith.addf %640, %642 : vector<8x32xf32>
    %c0_149 = arith.constant 0 : index
    %c0_150 = arith.constant 0 : index
    %644 = vector.load %arg11[%c0_149, %c0_150] : memref<16x32xf32, #tpu.memory_space<vmem>>, vector<16x32xf32>
    %cst_151 = arith.constant dense<0.000000e+00> : vector<8x32xf32>
    %645 = tpu.matmul %635, %644, %cst_151 {dimension_numbers = #tpu.dot_dimension_numbers<[1], [0], [0], [1], [0, 0, 1, 1], [], []>} : vector<8x16xf32>, vector<16x32xf32>, vector<8x32xf32> -> vector<8x32xf32>
    %646 = arith.addf %643, %645 : vector<8x32xf32>
    %c0_152 = arith.constant 0 : index
    %c0_153 = arith.constant 0 : index
    %647 = vector.load %arg12[%c0_152, %c0_153] : memref<1x32xf32, #tpu.memory_space<vmem>>, vector<1x32xf32>
    %648 = vector.broadcast %647 : vector<1x32xf32> to vector<8x32xf32>
    %649 = arith.addf %646, %648 : vector<8x32xf32>
    %650 = math.tanh %649 : vector<8x32xf32>
    %c0_154 = arith.constant 0 : index
    %c0_155 = arith.constant 0 : index
    %651 = vector.load %arg13[%c0_154, %c0_155] : memref<32x3xf32, #tpu.memory_space<vmem>>, vector<32x3xf32>
    %cst_156 = arith.constant dense<0.000000e+00> : vector<8x3xf32>
    %652 = tpu.matmul %650, %651, %cst_156 {dimension_numbers = #tpu.dot_dimension_numbers<[1], [0], [0], [1], [0, 0, 1, 1], [], []>} : vector<8x32xf32>, vector<32x3xf32>, vector<8x3xf32> -> vector<8x3xf32>
    %c0_157 = arith.constant 0 : index
    %c0_158 = arith.constant 0 : index
    %653 = vector.load %arg14[%c0_157, %c0_158] : memref<1x3xf32, #tpu.memory_space<vmem>>, vector<1x3xf32>
    %654 = vector.broadcast %653 : vector<1x3xf32> to vector<8x3xf32>
    %655 = arith.addf %652, %654 : vector<8x3xf32>
    %c0_159 = arith.constant 0 : index
    %c0_160 = arith.constant 0 : index
    %656 = vector.load %arg15[%c0_159, %c0_160] : memref<8x3xf32, #tpu.memory_space<vmem>>, vector<8x3xf32>
    tpu.vector_store %arg15[%c0_159, %c0_160], %655 {strides = array<i32>} : memref<8x3xf32, #tpu.memory_space<vmem>>, vector<8x3xf32>,
    return
  }
}

</mosaic_0001>

<llo_original>
// kernel: model_forward.1
$region0: #{model_forward.1}
  #allocation0 [shape = 'u32[]', space=smem, size = 0x4, offset = 0x4, fixed_abs, tag = 'smem constant byte address 0x4 - core index']
  #allocation1 [shape = 'u32[144,128]{1,0:T(1,128)}', space=vmem, size = 0x12000, scoped, tag = 'internal scratch']
  %s0 = inlined_call_operand.vmem [shape: f32[16,8,32], index: 0, kind: input, shape index: {}]
  %s1 = inlined_call_operand.vmem [shape: s32[16,1], index: 1, kind: input, shape index: {}]
  %s2 = inlined_call_operand.vmem [shape: f32[32,64], index: 2, kind: input, shape index: {}]
  %s3 = inlined_call_operand.vmem [shape: f32[16,64], index: 3, kind: input, shape index: {}]
  %s4 = inlined_call_operand.vmem [shape: f32[1,64], index: 4, kind: input, shape index: {}]
  %s5 = inlined_call_operand.vmem [shape: f32[32,64], index: 5, kind: input, shape index: {}]
  %s6 = inlined_call_operand.vmem [shape: f32[16,64], index: 6, kind: input, shape index: {}]
  %s7 = inlined_call_operand.vmem [shape: f32[1,64], index: 7, kind: input, shape index: {}]
  %s8 = inlined_call_operand.vmem [shape: f32[16,32], index: 8, kind: input, shape index: {}]
  %s9 = inlined_call_operand.vmem [shape: f32[16,32], index: 9, kind: input, shape index: {}]
  %s10 = inlined_call_operand.vmem [shape: f32[16,32], index: 10, kind: input, shape index: {}]
  %s11 = inlined_call_operand.vmem [shape: f32[16,32], index: 11, kind: input, shape index: {}]
  %s12 = inlined_call_operand.vmem [shape: f32[1,32], index: 12, kind: input, shape index: {}]
  %s13 = inlined_call_operand.vmem [shape: f32[32,3], index: 13, kind: input, shape index: {}]
  %s14 = inlined_call_operand.vmem [shape: f32[1,3], index: 14, kind: input, shape index: {}]
  %s15 = inlined_call_operand.vmem [shape: f32[8,3], index: 15, kind: output, shape index: {}]
  %s16 = sld [smem:[#allocation0]]
  $region70: #{model_forward.1} parent=0
    _
  %s18 = ssub.s32 1, %s16
  %s19 = scalar_select 0, %s18, %s16
  // Predicated region
  $region2: #{model_forward.1} parent=0 // pred_check
    _
  $region3: #{model_forward.1} parent=0 // pred_check_branch
    %21 = sbr.rel (0) target = $region5
  $region4: #{model_forward.1} parent=0 // pred_region
    _
  $region5: #{model_forward.1} parent=0 // pred_fallthru
    _
  // Predicated region
  $region6: #{model_forward.1} parent=0 // pred_check
    _
  $region7: #{model_forward.1} parent=0 // pred_check_branch
    %23 = sbr.rel (0) target = $region9
  $region8: #{model_forward.1} parent=0 // pred_region
    _
  $region9: #{model_forward.1} parent=0 // pred_fallthru
    _
  // Predicated region
  $region10: #{model_forward.1} parent=0 // pred_check
    _
  $region11: #{model_forward.1} parent=0 // pred_check_branch
    %25 = sbr.rel (0) target = $region13
  $region12: #{model_forward.1} parent=0 // pred_region
    _
  $region13: #{model_forward.1} parent=0 // pred_fallthru
    _
  // Predicated region
  $region14: #{model_forward.1} parent=0 // pred_check
    _
  $region15: #{model_forward.1} parent=0 // pred_check_branch
    %27 = sbr.rel (0) target = $region17
  $region16: #{model_forward.1} parent=0 // pred_region
    _
  $region17: #{model_forward.1} parent=0 // pred_fallthru
    _
  // Predicated region
  $region18: #{model_forward.1} parent=0 // pred_check
    _
  $region19: #{model_forward.1} parent=0 // pred_check_branch
    %29 = sbr.rel (0) target = $region21
  $region20: #{model_forward.1} parent=0 // pred_region
    _
  $region21: #{model_forward.1} parent=0 // pred_fallthru
    _
  // Predicated region
  $region22: #{model_forward.1} parent=0 // pred_check
    _
  $region23: #{model_forward.1} parent=0 // pred_check_branch
    %31 = sbr.rel (0) target = $region25
  $region24: #{model_forward.1} parent=0 // pred_region
    _
  $region25: #{model_forward.1} parent=0 // pred_fallthru
    _
  // Predicated region
  $region26: #{model_forward.1} parent=0 // pred_check
    _
  $region27: #{model_forward.1} parent=0 // pred_check_branch
    %33 = sbr.rel (0) target = $region29
  $region28: #{model_forward.1} parent=0 // pred_region
    _
  $region29: #{model_forward.1} parent=0 // pred_fallthru
    _
  // Predicated region
  $region30: #{model_forward.1} parent=0 // pred_check
    _
  $region31: #{model_forward.1} parent=0 // pred_check_branch
    %35 = sbr.rel (0) target = $region33
  $region32: #{model_forward.1} parent=0 // pred_region
    _
  $region33: #{model_forward.1} parent=0 // pred_fallthru
    _
  // Predicated region
  $region34: #{model_forward.1} parent=0 // pred_check
    _
  $region35: #{model_forward.1} parent=0 // pred_check_branch
    %37 = sbr.rel (0) target = $region37
  $region36: #{model_forward.1} parent=0 // pred_region
    _
  $region37: #{model_forward.1} parent=0 // pred_fallthru
    _
  // Predicated region
  $region38: #{model_forward.1} parent=0 // pred_check
    _
  $region39: #{model_forward.1} parent=0 // pred_check_branch
    %39 = sbr.rel (0) target = $region41
  $region40: #{model_forward.1} parent=0 // pred_region
    _
  $region41: #{model_forward.1} parent=0 // pred_fallthru
    _
  // Predicated region
  $region42: #{model_forward.1} parent=0 // pred_check
    _
  $region43: #{model_forward.1} parent=0 // pred_check_branch
    %41 = sbr.rel (0) target = $region45
  $region44: #{model_forward.1} parent=0 // pred_region
    _
  $region45: #{model_forward.1} parent=0 // pred_fallthru
    _
  // Predicated region
  $region46: #{model_forward.1} parent=0 // pred_check
    _
  $region47: #{model_forward.1} parent=0 // pred_check_branch
    %43 = sbr.rel (0) target = $region49
  $region48: #{model_forward.1} parent=0 // pred_region
    _
  $region49: #{model_forward.1} parent=0 // pred_fallthru
    _
  // Predicated region
  $region50: #{model_forward.1} parent=0 // pred_check
    _
  $region51: #{model_forward.1} parent=0 // pred_check_branch
    %45 = sbr.rel (0) target = $region53
  $region52: #{model_forward.1} parent=0 // pred_region
    _
  $region53: #{model_forward.1} parent=0 // pred_fallthru
    _
  // Predicated region
  $region54: #{model_forward.1} parent=0 // pred_check
    _
  $region55: #{model_forward.1} parent=0 // pred_check_branch
    %47 = sbr.rel (0) target = $region57
  $region56: #{model_forward.1} parent=0 // pred_region
    _
  $region57: #{model_forward.1} parent=0 // pred_fallthru
    _
  // Predicated region
  $region58: #{model_forward.1} parent=0 // pred_check
    _
  $region59: #{model_forward.1} parent=0 // pred_check_branch
    %49 = sbr.rel (0) target = $region61
  $region60: #{model_forward.1} parent=0 // pred_region
    _
  $region61: #{model_forward.1} parent=0 // pred_fallthru
    _
  %v50 = vld [vmem:[%s1] sm:$0xff]
  %v51 = vld [vmem:[%s1 + $0x8] sm:$0xff]
  %v52 = vld [vmem:[%s2] sm:$0xff]
  %v53 = vld [vmem:[%s2 + $0x8] sm:$0xff]
  %v54 = vld [vmem:[%s2 + $0x10] sm:$0xff]
  %v55 = vld [vmem:[%s2 + $0x18] sm:$0xff]
  %v56 = vld [vmem:[%s3] sm:$0xff]
  %v57 = vld [vmem:[%s3 + $0x8] sm:$0xff]
  %v58 = vld [vmem:[%s4] sm:$0x1]
  %v59 = vld [vmem:[%s5] sm:$0xff]
  %v60 = vld [vmem:[%s5 + $0x8] sm:$0xff]
  %v61 = vld [vmem:[%s5 + $0x10] sm:$0xff]
  %v62 = vld [vmem:[%s5 + $0x18] sm:$0xff]
  %v63 = vld [vmem:[%s6] sm:$0xff]
  %v64 = vld [vmem:[%s6 + $0x8] sm:$0xff]
  %v65 = vld [vmem:[%s7] sm:$0x1]
  %v66 = vld [vmem:[%s0] sm:$0x1]
  %v67 = vld [vmem:[%s0 + $0x8] sm:$0x1]
  %v68 = vld [vmem:[%s0 + $0x10] sm:$0x1]
  %v69 = vld [vmem:[%s0 + $0x18] sm:$0x1]
  %v70 = vld [vmem:[%s0 + $0x20] sm:$0x1]
  %v71 = vld [vmem:[%s0 + $0x28] sm:$0x1]
  %v72 = vld [vmem:[%s0 + $0x30] sm:$0x1]
  %v73 = vld [vmem:[%s0 + $0x38] sm:$0x1]
  %v74 = vld [vmem:[%s0 + $0x40] sm:$0x1]
  %v75 = vld [vmem:[%s0 + $0x48] sm:$0x1]
  %v76 = vld [vmem:[%s0 + $0x50] sm:$0x1]
  %v77 = vld [vmem:[%s0 + $0x58] sm:$0x1]
  %v78 = vld [vmem:[%s0 + $0x60] sm:$0x1]
  %v79 = vld [vmem:[%s0 + $0x68] sm:$0x1]
  %v80 = vld [vmem:[%s0 + $0x70] sm:$0x1]
  %v81 = vld [vmem:[%s0 + $0x78] sm:$0x1]
  %v82 = vld [vmem:[%s0 + $0x7] sm:$0x1]
  %v83 = vld [vmem:[%s0 + $0xf] sm:$0x1]
  %v84 = vld [vmem:[%s0 + $0x17] sm:$0x1]
  %v85 = vld [vmem:[%s0 + $0x1f] sm:$0x1]
  %v86 = vld [vmem:[%s0 + $0x27] sm:$0x1]
  %v87 = vld [vmem:[%s0 + $0x2f] sm:$0x1]
  %v88 = vld [vmem:[%s0 + $0x37] sm:$0x1]
  %v89 = vld [vmem:[%s0 + $0x3f] sm:$0x1]
  %v90 = vld [vmem:[%s0 + $0x47] sm:$0x1]
  %v91 = vld [vmem:[%s0 + $0x4f] sm:$0x1]
  %v92 = vld [vmem:[%s0 + $0x57] sm:$0x1]
  %v93 = vld [vmem:[%s0 + $0x5f] sm:$0x1]
  %v94 = vld [vmem:[%s0 + $0x67] sm:$0x1]
  %v95 = vld [vmem:[%s0 + $0x6f] sm:$0x1]
  %v96 = vld [vmem:[%s0 + $0x77] sm:$0x1]
  %v97 = vld [vmem:[%s0 + $0x7f] sm:$0x1]
  %vm98 = vcmask 130048
  %v100 = vsel %vm98, 0.0, 0
  %102 = vmatprep.subr.mxu0 0.0
  %103 = vmatpush1.msra.mxu0 %v56
  %104 = vmatprep.subr.mxu0 0.0
  %105 = vmatpush1.msra.mxu0 %v57
  %106 = vmatprep.subr.mxu0 0.0
  %107 = vmatpush1.msra.mxu0 0.0
  %108 = vmatprep.subr.mxu0 0.0
  %109 = vmatpush1.msra.mxu0 0.0
  %110 = vmatprep.subr.mxu0 0.0
  %111 = vmatpush1.msra.mxu0 0.0
  %112 = vmatprep.subr.mxu0 0.0
  %113 = vmatpush1.msra.mxu0 0.0
  %114 = vmatprep.subr.mxu0 0.0
  %115 = vmatpush1.msra.mxu0 0.0
  %116 = vmatprep.subr.mxu0 0.0
  %117 = vmatpush1.msra.mxu0 0.0
  %118 = vmatprep.subr.mxu0 0.0
  %119 = vmatpush1.msra.mxu0 0.0
  %120 = vmatprep.subr.mxu0 0.0
  %121 = vmatpush1.msra.mxu0 0.0
  %122 = vmatprep.subr.mxu0 0.0
  %123 = vmatpush1.msra.mxu0 0.0
  %124 = vmatprep.subr.mxu0 0.0
  %125 = vmatpush1.msra.mxu0 0.0
  %126 = vmatprep.subr.mxu0 0.0
  %127 = vmatpush1.msra.mxu0 0.0
  %128 = vmatprep.subr.mxu0 0.0
  %129 = vmatpush1.msra.mxu0 0.0
  %130 = vmatprep.subr.mxu0 0.0
  %131 = vmatpush1.msra.mxu0 0.0
  %132 = vmatprep.subr.mxu0 0.0
  %133 = vmatpush1.msra.mxu0 0.0
  %134 = vmatprep.subr.mxu0 0.0
  %135 = vmatpush1.msra.mxu0 0.0
  %136 = vmatprep.subr.mxu0 0.0
  %137 = vmatpush1.msra.mxu0 0.0
  %138 = vmatprep.subr.mxu0 0.0
  %139 = vmatpush1.msra.mxu0 0.0
  %140 = vmatprep.subr.mxu0 0.0
  %141 = vmatpush1.msra.mxu0 0.0
  %142 = vmatprep.subr.mxu0 0.0
  %143 = vmatpush1.msra.mxu0 0.0
  %144 = vmatprep.subr.mxu0 0.0
  %145 = vmatpush1.msra.mxu0 0.0
  %146 = vmatprep.subr.mxu0 0.0
  %147 = vmatpush1.msra.mxu0 0.0
  %148 = vmatprep.subr.mxu0 0.0
  %149 = vmatpush1.msra.mxu0 0.0
  %150 = vmatprep.subr.mxu0 0.0
  %151 = vmatpush1.msra.mxu0 0.0
  %152 = vmatprep.subr.mxu0 0.0
  %153 = vmatpush1.msra.mxu0 0.0
  %154 = vmatprep.subr.mxu0 0.0
  %155 = vmatpush1.msra.mxu0 0.0
  %156 = vmatprep.subr.mxu0 0.0
  %157 = vmatpush1.msra.mxu0 0.0
  %158 = vmatprep.subr.mxu0 0.0
  %159 = vmatpush1.msra.mxu0 0.0
  %160 = vmatprep.subr.mxu0 0.0
  %161 = vmatpush1.msra.mxu0 0.0
  %162 = vmatprep.subr.mxu0 0.0
  %163 = vmatpush1.msra.mxu0 0.0
  %164 = vmatprep.subr.mxu0 0.0
  %165 = vmatpush1.msra.mxu0 0.0
  %166 = vmatprep.mubr.f32.mxu0 0.0
  %167 = vmatmul.mubr.f32.gmra.mrb[0].mxu0 %v100
  %v168 = vpop.f32.mrb[0].mxu0
  %v169 = vadd.f32 0.0, %v168
  %v170 = vpop.f32.mrb[0].mxu0
  %171 = vmatprep.mubr.f32.mxu0 0.0
  %172 = vmatmul.mubr.f32.gmra.mrb[0].mxu0 %v100
  %v173 = vpop.f32.mrb[0].mxu0
  %v174 = vadd.f32 0.0, %v173
  %v175 = vpop.f32.mrb[0].mxu0
  %176 = vdwg.mxu0
  %v193 = vrot.slane %v67, 7
  %vm194 = vcmask 1041409
  %v195 = vsel %vm194, %v193, %v66
  %v196 = vrot.slane %v68, 6
  %vm197 = vcmask 1042434
  %v198 = vsel %vm197, %v196, %v195
  %v199 = vrot.slane %v69, 5
  %vm200 = vcmask 1043459
  %v201 = vsel %vm200, %v199, %v198
  %v202 = vrot.slane %v70, 4
  %vm203 = vcmask 1044484
  %v204 = vsel %vm203, %v202, %v201
  %v205 = vrot.slane %v71, 3
  %vm206 = vcmask 1045509
  %v207 = vsel %vm206, %v205, %v204
  %v208 = vrot.slane %v72, 2
  %vm209 = vcmask 1046534
  %v210 = vsel %vm209, %v208, %v207
  %v211 = vrot.slane %v73, 1
  %vm212 = vcmask 1047559
  %v213 = vsel %vm212, %v211, %v210
  %v214 = vrot.slane %v75, 7
  %v215 = vsel %vm194, %v214, %v74
  %v216 = vrot.slane %v76, 6
  %v217 = vsel %vm197, %v216, %v215
  %v218 = vrot.slane %v77, 5
  %v219 = vsel %vm200, %v218, %v217
  %v220 = vrot.slane %v78, 4
  %v221 = vsel %vm203, %v220, %v219
  %v222 = vrot.slane %v79, 3
  %v223 = vsel %vm206, %v222, %v221
  %v224 = vrot.slane %v80, 2
  %v225 = vsel %vm209, %v224, %v223
  %v226 = vrot.slane %v81, 1
  %v227 = vsel %vm212, %v226, %v225
  %vm228 = vcmask 261120
  %v229 = vsel %vm228, %v213, 0
  %v231 = vsel %vm228, %v227, 0
  %233 = vmatprep.subr.mxu0 0.0
  %234 = vmatpush1.msra.mxu0 %v52
  %235 = vmatprep.subr.mxu0 0.0
  %236 = vmatpush1.msra.mxu0 %v53
  %237 = vmatprep.subr.mxu0 0.0
  %238 = vmatpush1.msra.mxu0 %v54
  %239 = vmatprep.subr.mxu0 0.0
  %240 = vmatpush1.msra.mxu0 %v55
  %241 = vmatprep.subr.mxu0 0.0
  %242 = vmatpush1.msra.mxu0 0.0
  %243 = vmatprep.subr.mxu0 0.0
  %244 = vmatpush1.msra.mxu0 0.0
  %245 = vmatprep.subr.mxu0 0.0
  %246 = vmatpush1.msra.mxu0 0.0
  %247 = vmatprep.subr.mxu0 0.0
  %248 = vmatpush1.msra.mxu0 0.0
  %249 = vmatprep.subr.mxu0 0.0
  %250 = vmatpush1.msra.mxu0 0.0
  %251 = vmatprep.subr.mxu0 0.0
  %252 = vmatpush1.msra.mxu0 0.0
  %253 = vmatprep.subr.mxu0 0.0
  %254 = vmatpush1.msra.mxu0 0.0
  %255 = vmatprep.subr.mxu0 0.0
  %256 = vmatpush1.msra.mxu0 0.0
  %257 = vmatprep.subr.mxu0 0.0
  %258 = vmatpush1.msra.mxu0 0.0
  %259 = vmatprep.subr.mxu0 0.0
  %260 = vmatpush1.msra.mxu0 0.0
  %261 = vmatprep.subr.mxu0 0.0
  %262 = vmatpush1.msra.mxu0 0.0
  %263 = vmatprep.subr.mxu0 0.0
  %264 = vmatpush1.msra.mxu0 0.0
  %265 = vmatprep.subr.mxu0 0.0
  %266 = vmatpush1.msra.mxu0 0.0
  %267 = vmatprep.subr.mxu0 0.0
  %268 = vmatpush1.msra.mxu0 0.0
  %269 = vmatprep.subr.mxu0 0.0
  %270 = vmatpush1.msra.mxu0 0.0
  %271 = vmatprep.subr.mxu0 0.0
  %272 = vmatpush1.msra.mxu0 0.0
  %273 = vmatprep.subr.mxu0 0.0
  %274 = vmatpush1.msra.mxu0 0.0
  %275 = vmatprep.subr.mxu0 0.0
  %276 = vmatpush1.msra.mxu0 0.0
  %277 = vmatprep.subr.mxu0 0.0
  %278 = vmatpush1.msra.mxu0 0.0
  %279 = vmatprep.subr.mxu0 0.0
  %280 = vmatpush1.msra.mxu0 0.0
  %281 = vmatprep.subr.mxu0 0.0
  %282 = vmatpush1.msra.mxu0 0.0
  %283 = vmatprep.subr.mxu0 0.0
  %284 = vmatpush1.msra.mxu0 0.0
  %285 = vmatprep.subr.mxu0 0.0
  %286 = vmatpush1.msra.mxu0 0.0
  %287 = vmatprep.subr.mxu0 0.0
  %288 = vmatpush1.msra.mxu0 0.0
  %289 = vmatprep.subr.mxu0 0.0
  %290 = vmatpush1.msra.mxu0 0.0
  %291 = vmatprep.subr.mxu0 0.0
  %292 = vmatpush1.msra.mxu0 0.0
  %293 = vmatprep.subr.mxu0 0.0
  %294 = vmatpush1.msra.mxu0 0.0
  %295 = vmatprep.subr.mxu0 0.0
  %296 = vmatpush1.msra.mxu0 0.0
  %297 = vmatprep.mubr.f32.mxu0 0.0
  %298 = vmatmul.mubr.f32.gmra.mrb[0].mxu0 %v229
  %v299 = vpop.f32.mrb[0].mxu0
  %v300 = vadd.f32 %v169, %v299
  %v301 = vpop.f32.mrb[0].mxu0
  %302 = vmatprep.mubr.f32.mxu0 0.0
  %303 = vmatmul.mubr.f32.gmra.mrb[0].mxu0 %v231
  %v304 = vpop.f32.mrb[0].mxu0
  %v305 = vadd.f32 %v174, %v304
  %v306 = vpop.f32.mrb[0].mxu0
  %307 = vdwg.mxu0
  %v309 = vlaneseq
  %v310 = vshrl.u32 %v309, 7
  %v311 = vsub.s32 0, %v310
  %v312 = vrot.slane %v58, %v311
  %v314 = vadd.f32 %v300, %v312
  %v315 = vadd.f32 %v305, %v312
  %v316 = vxor.u32 %v314, 2147483648
  %v317 = vxor.u32 %v315, 2147483648
  %v318 = vmul.f32 %v316, 1.442695
  %v319 = vpow.pop %v318
  %v320 = vmul.f32 %v317, 1.442695
  %v321 = vpow.pop %v320
  %v322 = vadd.f32 %v319, 1.0
  %v323 = vadd.f32 %v321, 1.0
  %v324 = vrcp.pop %v322
  %v325 = vmul.f32 1.0, %v324
  %v326 = vrcp.pop %v323
  %v327 = vmul.f32 1.0, %v326
  %v328 = vtanh.pop %v314
  %v329 = vtanh.pop %v315
  %v330 = vmul.f32 %v325, 0.0
  %v331 = vmul.f32 %v327, 0.0
  %334 = vrot.lane.b32.xlu0 %v328, 96
  %v335 = vpop.permute.xlu0 %334
  %336 = vrot.lane.b32.xlu0 %v329, 96
  %v337 = vpop.permute.xlu0 %336
  %v340 = vmul.f32 %v325, %v335
  %v341 = vmul.f32 %v327, %v337
  %344 = vrot.lane.b32.xlu0 %v340, 16
  %v345 = vpop.permute.xlu0 %344
  %346 = vrot.lane.b32.xlu0 %v341, 16
  %v347 = vpop.permute.xlu0 %346
  %v350 = vadd.f32 %v330, %v345
  %v351 = vadd.f32 %v331, %v347
  %v352 = vtanh.pop %v350
  %v353 = vtanh.pop %v351
  %356 = vrot.lane.b32.xlu0 %v352, 32
  %v357 = vpop.permute.xlu0 %356
  %358 = vrot.lane.b32.xlu0 %v353, 32
  %v359 = vpop.permute.xlu0 %358
  %v362 = vmul.f32 %v325, %v357
  %v363 = vmul.f32 %v327, %v359
  %364 = vmatprep.subr.mxu0 0.0
  %365 = vmatpush1.msra.mxu0 %v63
  %366 = vmatprep.subr.mxu0 0.0
  %367 = vmatpush1.msra.mxu0 %v64
  %368 = vmatprep.subr.mxu0 0.0
  %369 = vmatpush1.msra.mxu0 0.0
  %370 = vmatprep.subr.mxu0 0.0
  %371 = vmatpush1.msra.mxu0 0.0
  %372 = vmatprep.subr.mxu0 0.0
  %373 = vmatpush1.msra.mxu0 0.0
  %374 = vmatprep.subr.mxu0 0.0
  %375 = vmatpush1.msra.mxu0 0.0
  %376 = vmatprep.subr.mxu0 0.0
  %377 = vmatpush1.msra.mxu0 0.0
  %378 = vmatprep.subr.mxu0 0.0
  %379 = vmatpush1.msra.mxu0 0.0
  %380 = vmatprep.subr.mxu0 0.0
  %381 = vmatpush1.msra.mxu0 0.0
  %382 = vmatprep.subr.mxu0 0.0
  %383 = vmatpush1.msra.mxu0 0.0
  %384 = vmatprep.subr.mxu0 0.0
  %385 = vmatpush1.msra.mxu0 0.0
  %386 = vmatprep.subr.mxu0 0.0
  %387 = vmatpush1.msra.mxu0 0.0
  %388 = vmatprep.subr.mxu0 0.0
  %389 = vmatpush1.msra.mxu0 0.0
  %390 = vmatprep.subr.mxu0 0.0
  %391 = vmatpush1.msra.mxu0 0.0
  %392 = vmatprep.subr.mxu0 0.0
  %393 = vmatpush1.msra.mxu0 0.0
  %394 = vmatprep.subr.mxu0 0.0
  %395 = vmatpush1.msra.mxu0 0.0
  %396 = vmatprep.subr.mxu0 0.0
  %397 = vmatpush1.msra.mxu0 0.0
  %398 = vmatprep.subr.mxu0 0.0
  %399 = vmatpush1.msra.mxu0 0.0
  %400 = vmatprep.subr.mxu0 0.0
  %401 = vmatpush1.msra.mxu0 0.0
  %402 = vmatprep.subr.mxu0 0.0
  %403 = vmatpush1.msra.mxu0 0.0
  %404 = vmatprep.subr.mxu0 0.0
  %405 = vmatpush1.msra.mxu0 0.0
  %406 = vmatprep.subr.mxu0 0.0
  %407 = vmatpush1.msra.mxu0 0.0
  %408 = vmatprep.subr.mxu0 0.0
  %409 = vmatpush1.msra.mxu0 0.0
  %410 = vmatprep.subr.mxu0 0.0
  %411 = vmatpush1.msra.mxu0 0.0
  %412 = vmatprep.subr.mxu0 0.0
  %413 = vmatpush1.msra.mxu0 0.0
  %414 = vmatprep.subr.mxu0 0.0
  %415 = vmatpush1.msra.mxu0 0.0
  %416 = vmatprep.subr.mxu0 0.0
  %417 = vmatpush1.msra.mxu0 0.0
  %418 = vmatprep.subr.mxu0 0.0
  %419 = vmatpush1.msra.mxu0 0.0
  %420 = vmatprep.subr.mxu0 0.0
  %421 = vmatpush1.msra.mxu0 0.0
  %422 = vmatprep.subr.mxu0 0.0
  %423 = vmatpush1.msra.mxu0 0.0
  %424 = vmatprep.subr.mxu0 0.0
  %425 = vmatpush1.msra.mxu0 0.0
  %426 = vmatprep.subr.mxu0 0.0
  %427 = vmatpush1.msra.mxu0 0.0
  %428 = vmatprep.mubr.f32.mxu0 0.0
  %429 = vmatmul.mubr.f32.gmra.mrb[0].mxu0 %v100
  %v430 = vpop.f32.mrb[0].mxu0
  %v431 = vadd.f32 0.0, %v430
  %v432 = vpop.f32.mrb[0].mxu0
  %433 = vmatprep.mubr.f32.mxu0 0.0
  %434 = vmatmul.mubr.f32.gmra.mrb[0].mxu0 %v100
  %v435 = vpop.f32.mrb[0].mxu0
  %v436 = vadd.f32 0.0, %v435
  %v437 = vpop.f32.mrb[0].mxu0
  %438 = vdwg.mxu0
  %v455 = vrot.slane %v83, 7
  %v456 = vsel %vm194, %v455, %v82
  %v457 = vrot.slane %v84, 6
  %v458 = vsel %vm197, %v457, %v456
  %v459 = vrot.slane %v85, 5
  %v460 = vsel %vm200, %v459, %v458
  %v461 = vrot.slane %v86, 4
  %v462 = vsel %vm203, %v461, %v460
  %v463 = vrot.slane %v87, 3
  %v464 = vsel %vm206, %v463, %v462
  %v465 = vrot.slane %v88, 2
  %v466 = vsel %vm209, %v465, %v464
  %v467 = vrot.slane %v89, 1
  %v468 = vsel %vm212, %v467, %v466
  %v469 = vrot.slane %v91, 7
  %v470 = vsel %vm194, %v469, %v90
  %v471 = vrot.slane %v92, 6
  %v472 = vsel %vm197, %v471, %v470
  %v473 = vrot.slane %v93, 5
  %v474 = vsel %vm200, %v473, %v472
  %v475 = vrot.slane %v94, 4
  %v476 = vsel %vm203, %v475, %v474
  %v477 = vrot.slane %v95, 3
  %v478 = vsel %vm206, %v477, %v476
  %v479 = vrot.slane %v96, 2
  %v480 = vsel %vm209, %v479, %v478
  %v481 = vrot.slane %v97, 1
  %v482 = vsel %vm212, %v481, %v480
  %v483 = vsel %vm228, %v468, 0
  %v485 = vsel %vm228, %v482, 0
  %487 = vmatprep.subr.mxu0 0.0
  %488 = vmatpush1.msra.mxu0 %v59
  %489 = vmatprep.subr.mxu0 0.0
  %490 = vmatpush1.msra.mxu0 %v60
  %491 = vmatprep.subr.mxu0 0.0
  %492 = vmatpush1.msra.mxu0 %v61
  %493 = vmatprep.subr.mxu0 0.0
  %494 = vmatpush1.msra.mxu0 %v62
  %495 = vmatprep.subr.mxu0 0.0
  %496 = vmatpush1.msra.mxu0 0.0
  %497 = vmatprep.subr.mxu0 0.0
  %498 = vmatpush1.msra.mxu0 0.0
  %499 = vmatprep.subr.mxu0 0.0
  %500 = vmatpush1.msra.mxu0 0.0
  %501 = vmatprep.subr.mxu0 0.0
  %502 = vmatpush1.msra.mxu0 0.0
  %503 = vmatprep.subr.mxu0 0.0
  %504 = vmatpush1.msra.mxu0 0.0
  %505 = vmatprep.subr.mxu0 0.0
  %506 = vmatpush1.msra.mxu0 0.0
  %507 = vmatprep.subr.mxu0 0.0
  %508 = vmatpush1.msra.mxu0 0.0
  %509 = vmatprep.subr.mxu0 0.0
  %510 = vmatpush1.msra.mxu0 0.0
  %511 = vmatprep.subr.mxu0 0.0
  %512 = vmatpush1.msra.mxu0 0.0
  %513 = vmatprep.subr.mxu0 0.0
  %514 = vmatpush1.msra.mxu0 0.0
  %515 = vmatprep.subr.mxu0 0.0
  %516 = vmatpush1.msra.mxu0 0.0
  %517 = vmatprep.subr.mxu0 0.0
  %518 = vmatpush1.msra.mxu0 0.0
  %519 = vmatprep.subr.mxu0 0.0
  %520 = vmatpush1.msra.mxu0 0.0
  %521 = vmatprep.subr.mxu0 0.0
  %522 = vmatpush1.msra.mxu0 0.0
  %523 = vmatprep.subr.mxu0 0.0
  %524 = vmatpush1.msra.mxu0 0.0
  %525 = vmatprep.subr.mxu0 0.0
  %526 = vmatpush1.msra.mxu0 0.0
  %527 = vmatprep.subr.mxu0 0.0
  %528 = vmatpush1.msra.mxu0 0.0
  %529 = vmatprep.subr.mxu0 0.0
  %530 = vmatpush1.msra.mxu0 0.0
  %531 = vmatprep.subr.mxu0 0.0
  %532 = vmatpush1.msra.mxu0 0.0
  %533 = vmatprep.subr.mxu0 0.0
  %534 = vmatpush1.msra.mxu0 0.0
  %535 = vmatprep.subr.mxu0 0.0
  %536 = vmatpush1.msra.mxu0 0.0
  %537 = vmatprep.subr.mxu0 0.0
  %538 = vmatpush1.msra.mxu0 0.0
  %539 = vmatprep.subr.mxu0 0.0
  %540 = vmatpush1.msra.mxu0 0.0
  %541 = vmatprep.subr.mxu0 0.0
  %542 = vmatpush1.msra.mxu0 0.0
  %543 = vmatprep.subr.mxu0 0.0
  %544 = vmatpush1.msra.mxu0 0.0
  %545 = vmatprep.subr.mxu0 0.0
  %546 = vmatpush1.msra.mxu0 0.0
  %547 = vmatprep.subr.mxu0 0.0
  %548 = vmatpush1.msra.mxu0 0.0
  %549 = vmatprep.subr.mxu0 0.0
  %550 = vmatpush1.msra.mxu0 0.0
  %551 = vmatprep.mubr.f32.mxu0 0.0
  %552 = vmatmul.mubr.f32.gmra.mrb[0].mxu0 %v483
  %v553 = vpop.f32.mrb[0].mxu0
  %v554 = vadd.f32 %v431, %v553
  %v555 = vpop.f32.mrb[0].mxu0
  %556 = vmatprep.mubr.f32.mxu0 0.0
  %557 = vmatmul.mubr.f32.gmra.mrb[0].mxu0 %v485
  %v558 = vpop.f32.mrb[0].mxu0
  %v559 = vadd.f32 %v436, %v558
  %v560 = vpop.f32.mrb[0].mxu0
  %561 = vdwg.mxu0
  %v563 = vlaneseq
  %v564 = vshrl.u32 %v563, 7
  %v565 = vsub.s32 0, %v564
  %v566 = vrot.slane %v65, %v565
  %v568 = vadd.f32 %v554, %v566
  %v569 = vadd.f32 %v559, %v566
  %v570 = vxor.u32 %v568, 2147483648
  %v571 = vxor.u32 %v569, 2147483648
  %v572 = vmul.f32 %v570, 1.442695
  %v573 = vpow.pop %v572
  %v574 = vmul.f32 %v571, 1.442695
  %v575 = vpow.pop %v574
  %v576 = vadd.f32 %v573, 1.0
  %v577 = vadd.f32 %v575, 1.0
  %v578 = vrcp.pop %v576
  %v579 = vmul.f32 1.0, %v578
  %v580 = vrcp.pop %v577
  %v581 = vmul.f32 1.0, %v580
  %v582 = vtanh.pop %v568
  %v583 = vtanh.pop %v569
  %v584 = vmul.f32 %v579, 0.0
  %v585 = vmul.f32 %v581, 0.0
  %588 = vrot.lane.b32.xlu0 %v582, 96
  %v589 = vpop.permute.xlu0 %588
  %590 = vrot.lane.b32.xlu0 %v583, 96
  %v591 = vpop.permute.xlu0 %590
  %v594 = vmul.f32 %v579, %v589
  %v595 = vmul.f32 %v581, %v591
  %598 = vrot.lane.b32.xlu0 %v594, 16
  %v599 = vpop.permute.xlu0 %598
  %600 = vrot.lane.b32.xlu0 %v595, 16
  %v601 = vpop.permute.xlu0 %600
  %v604 = vadd.f32 %v584, %v599
  %v605 = vadd.f32 %v585, %v601
  %v606 = vtanh.pop %v604
  %v607 = vtanh.pop %v605
  %610 = vrot.lane.b32.xlu0 %v606, 32
  %v611 = vpop.permute.xlu0 %610
  %612 = vrot.lane.b32.xlu0 %v607, 32
  %v613 = vpop.permute.xlu0 %612
  %v616 = vmul.f32 %v579, %v611
  %v617 = vmul.f32 %v581, %v613
  %vm618 = vcmp.gt.s32.totalorder %v50, 0
  %vm619 = vcmp.gt.s32.totalorder %v51, 0
  %vm620 = vcmp.gt.s32.totalorder %v50, 7
  %vm621 = vcmp.gt.s32.totalorder %v51, 7
  %v622 = vsel %vm618, 1, 0
  %v623 = vsel %vm619, 1, 0
  %624 = vset.pattern.permute.xlu0 0
  %625 = vperm.xlu0 %624, %v622
  %v626 = vpop.permute.xlu0 %625
  %627 = vset.pattern.permute.xlu0 0
  %628 = vperm.xlu0 %627, %v623
  %v629 = vpop.permute.xlu0 %628
  %vm630 = vcmp.eq.s32.totalorder %v626, 1
  %vm631 = vcmp.eq.s32.totalorder %v629, 1
  %v632 = vsel %vm630, %v362, 0.0
  %v633 = vsel %vm631, %v363, 0.0
  %v634 = vsel %vm630, %v350, 0.0
  %v635 = vsel %vm631, %v351, 0.0
  %v636 = vsel %vm620, 1, 0
  %v637 = vsel %vm621, 1, 0
  %638 = vset.pattern.permute.xlu0 0
  %639 = vperm.xlu0 %638, %v636
  %v640 = vpop.permute.xlu0 %639
  %641 = vset.pattern.permute.xlu0 0
  %642 = vperm.xlu0 %641, %v637
  %v643 = vpop.permute.xlu0 %642
  %vm644 = vcmp.eq.s32.totalorder %v640, 1
  %vm645 = vcmp.eq.s32.totalorder %v643, 1
  %v646 = vsel %vm644, %v616, 0.0
  %v647 = vsel %vm645, %v617, 0.0
  %v648 = vsel %vm644, %v604, 0.0
  %v649 = vsel %vm645, %v605, 0.0
  %v650 = vld [vmem:[%s0 + $0x1] sm:$0x1]
  %v651 = vld [vmem:[%s0 + $0x9] sm:$0x1]
  %v652 = vld [vmem:[%s0 + $0x11] sm:$0x1]
  %v653 = vld [vmem:[%s0 + $0x19] sm:$0x1]
  %v654 = vld [vmem:[%s0 + $0x21] sm:$0x1]
  %v655 = vld [vmem:[%s0 + $0x29] sm:$0x1]
  %v656 = vld [vmem:[%s0 + $0x31] sm:$0x1]
  %v657 = vld [vmem:[%s0 + $0x39] sm:$0x1]
  %v658 = vld [vmem:[%s0 + $0x41] sm:$0x1]
  %v659 = vld [vmem:[%s0 + $0x49] sm:$0x1]
  %v660 = vld [vmem:[%s0 + $0x51] sm:$0x1]
  %v661 = vld [vmem:[%s0 + $0x59] sm:$0x1]
  %v662 = vld [vmem:[%s0 + $0x61] sm:$0x1]
  %v663 = vld [vmem:[%s0 + $0x69] sm:$0x1]
  %v664 = vld [vmem:[%s0 + $0x71] sm:$0x1]
  %v665 = vld [vmem:[%s0 + $0x79] sm:$0x1]
  %v666 = vld [vmem:[%s0 + $0x6] sm:$0x1]
  %v667 = vld [vmem:[%s0 + $0xe] sm:$0x1]
  %v668 = vld [vmem:[%s0 + $0x16] sm:$0x1]
  %v669 = vld [vmem:[%s0 + $0x1e] sm:$0x1]
  %v670 = vld [vmem:[%s0 + $0x26] sm:$0x1]
  %v671 = vld [vmem:[%s0 + $0x2e] sm:$0x1]
  %v672 = vld [vmem:[%s0 + $0x36] sm:$0x1]
  %v673 = vld [vmem:[%s0 + $0x3e] sm:$0x1]
  %v674 = vld [vmem:[%s0 + $0x46] sm:$0x1]
  %v675 = vld [vmem:[%s0 + $0x4e] sm:$0x1]
  %v676 = vld [vmem:[%s0 + $0x56] sm:$0x1]
  %v677 = vld [vmem:[%s0 + $0x5e] sm:$0x1]
  %v678 = vld [vmem:[%s0 + $0x66] sm:$0x1]
  %v679 = vld [vmem:[%s0 + $0x6e] sm:$0x1]
  %v680 = vld [vmem:[%s0 + $0x76] sm:$0x1]
  %v681 = vld [vmem:[%s0 + $0x7e] sm:$0x1]
  %684 = vrot.lane.b32.xlu0 %v632, 80
  %v685 = vpop.permute.xlu0 %684
  %686 = vrot.lane.b32.xlu0 %v633, 80
  %v687 = vpop.permute.xlu0 %686
  %v688 = vsel %vm98, %v685, 0
  %v690 = vsel %vm98, %v687, 0
  %692 = vmatprep.subr.mxu0 0.0
  %693 = vmatpush1.msra.mxu0 %v56
  %694 = vmatprep.subr.mxu0 0.0
  %695 = vmatpush1.msra.mxu0 %v57
  %696 = vmatprep.subr.mxu0 0.0
  %697 = vmatpush1.msra.mxu0 0.0
  %698 = vmatprep.subr.mxu0 0.0
  %699 = vmatpush1.msra.mxu0 0.0
  %700 = vmatprep.subr.mxu0 0.0
  %701 = vmatpush1.msra.mxu0 0.0
  %702 = vmatprep.subr.mxu0 0.0
  %703 = vmatpush1.msra.mxu0 0.0
  %704 = vmatprep.subr.mxu0 0.0
  %705 = vmatpush1.msra.mxu0 0.0
  %706 = vmatprep.subr.mxu0 0.0
  %707 = vmatpush1.msra.mxu0 0.0
  %708 = vmatprep.subr.mxu0 0.0
  %709 = vmatpush1.msra.mxu0 0.0
  %710 = vmatprep.subr.mxu0 0.0
  %711 = vmatpush1.msra.mxu0 0.0
  %712 = vmatprep.subr.mxu0 0.0
  %713 = vmatpush1.msra.mxu0 0.0
  %714 = vmatprep.subr.mxu0 0.0
  %715 = vmatpush1.msra.mxu0 0.0
  %716 = vmatprep.subr.mxu0 0.0
  %717 = vmatpush1.msra.mxu0 0.0
  %718 = vmatprep.subr.mxu0 0.0
  %719 = vmatpush1.msra.mxu0 0.0
  %720 = vmatprep.subr.mxu0 0.0
  %721 = vmatpush1.msra.mxu0 0.0
  %722 = vmatprep.subr.mxu0 0.0
  %723 = vmatpush1.msra.mxu0 0.0
  %724 = vmatprep.subr.mxu0 0.0
  %725 = vmatpush1.msra.mxu0 0.0
  %726 = vmatprep.subr.mxu0 0.0
  %727 = vmatpush1.msra.mxu0 0.0
  %728 = vmatprep.subr.mxu0 0.0
  %729 = vmatpush1.msra.mxu0 0.0
  %730 = vmatprep.subr.mxu0 0.0
  %731 = vmatpush1.msra.mxu0 0.0
  %732 = vmatprep.subr.mxu0 0.0
  %733 = vmatpush1.msra.mxu0 0.0
  %734 = vmatprep.subr.mxu0 0.0
  %735 = vmatpush1.msra.mxu0 0.0
  %736 = vmatprep.subr.mxu0 0.0
  %737 = vmatpush1.msra.mxu0 0.0
  %738 = vmatprep.subr.mxu0 0.0
  %739 = vmatpush1.msra.mxu0 0.0
  %740 = vmatprep.subr.mxu0 0.0
  %741 = vmatpush1.msra.mxu0 0.0
  %742 = vmatprep.subr.mxu0 0.0
  %743 = vmatpush1.msra.mxu0 0.0
  %744 = vmatprep.subr.mxu0 0.0
  %745 = vmatpush1.msra.mxu0 0.0
  %746 = vmatprep.subr.mxu0 0.0
  %747 = vmatpush1.msra.mxu0 0.0
  %748 = vmatprep.subr.mxu0 0.0
  %749 = vmatpush1.msra.mxu0 0.0
  %750 = vmatprep.subr.mxu0 0.0
  %751 = vmatpush1.msra.mxu0 0.0
  %752 = vmatprep.subr.mxu0 0.0
  %753 = vmatpush1.msra.mxu0 0.0
  %754 = vmatprep.subr.mxu0 0.0
  %755 = vmatpush1.msra.mxu0 0.0
  %756 = vmatprep.mubr.f32.mxu0 0.0
  %757 = vmatmul.mubr.f32.gmra.mrb[0].mxu0 %v688
  %v758 = vpop.f32.mrb[0].mxu0
  %v759 = vadd.f32 0.0, %v758
  %v760 = vpop.f32.mrb[0].mxu0
  %761 = vmatprep.mubr.f32.mxu0 0.0
  %762 = vmatmul.mubr.f32.gmra.mrb[0].mxu0 %v690
  %v763 = vpop.f32.mrb[0].mxu0
  %v764 = vadd.f32 0.0, %v763
  %v765 = vpop.f32.mrb[0].mxu0
  %766 = vdwg.mxu0
  %v783 = vrot.slane %v651, 7
  %v784 = vsel %vm194, %v783, %v650
  %v785 = vrot.slane %v652, 6
  %v786 = vsel %vm197, %v785, %v784
  %v787 = vrot.slane %v653, 5
  %v788 = vsel %vm200, %v787, %v786
  %v789 = vrot.slane %v654, 4
  %v790 = vsel %vm203, %v789, %v788
  %v791 = vrot.slane %v655, 3
  %v792 = vsel %vm206, %v791, %v790
  %v793 = vrot.slane %v656, 2
  %v794 = vsel %vm209, %v793, %v792
  %v795 = vrot.slane %v657, 1
  %v796 = vsel %vm212, %v795, %v794
  %v797 = vrot.slane %v659, 7
  %v798 = vsel %vm194, %v797, %v658
  %v799 = vrot.slane %v660, 6
  %v800 = vsel %vm197, %v799, %v798
  %v801 = vrot.slane %v661, 5
  %v802 = vsel %vm200, %v801, %v800
  %v803 = vrot.slane %v662, 4
  %v804 = vsel %vm203, %v803, %v802
  %v805 = vrot.slane %v663, 3
  %v806 = vsel %vm206, %v805, %v804
  %v807 = vrot.slane %v664, 2
  %v808 = vsel %vm209, %v807, %v806
  %v809 = vrot.slane %v665, 1
  %v810 = vsel %vm212, %v809, %v808
  %v811 = vsel %vm228, %v796, 0
  %v813 = vsel %vm228, %v810, 0
  %815 = vmatprep.subr.mxu0 0.0
  %816 = vmatpush1.msra.mxu0 %v52
  %817 = vmatprep.subr.mxu0 0.0
  %818 = vmatpush1.msra.mxu0 %v53
  %819 = vmatprep.subr.mxu0 0.0
  %820 = vmatpush1.msra.mxu0 %v54
  %821 = vmatprep.subr.mxu0 0.0
  %822 = vmatpush1.msra.mxu0 %v55
  %823 = vmatprep.subr.mxu0 0.0
  %824 = vmatpush1.msra.mxu0 0.0
  %825 = vmatprep.subr.mxu0 0.0
  %826 = vmatpush1.msra.mxu0 0.0
  %827 = vmatprep.subr.mxu0 0.0
  %828 = vmatpush1.msra.mxu0 0.0
  %829 = vmatprep.subr.mxu0 0.0
  %830 = vmatpush1.msra.mxu0 0.0
  %831 = vmatprep.subr.mxu0 0.0
  %832 = vmatpush1.msra.mxu0 0.0
  %833 = vmatprep.subr.mxu0 0.0
  %834 = vmatpush1.msra.mxu0 0.0
  %835 = vmatprep.subr.mxu0 0.0
  %836 = vmatpush1.msra.mxu0 0.0
  %837 = vmatprep.subr.mxu0 0.0
  %838 = vmatpush1.msra.mxu0 0.0
  %839 = vmatprep.subr.mxu0 0.0
  %840 = vmatpush1.msra.mxu0 0.0
  %841 = vmatprep.subr.mxu0 0.0
  %842 = vmatpush1.msra.mxu0 0.0
  %843 = vmatprep.subr.mxu0 0.0
  %844 = vmatpush1.msra.mxu0 0.0
  %845 = vmatprep.subr.mxu0 0.0
  %846 = vmatpush1.msra.mxu0 0.0
  %847 = vmatprep.subr.mxu0 0.0
  %848 = vmatpush1.msra.mxu0 0.0
  %849 = vmatprep.subr.mxu0 0.0
  %850 = vmatpush1.msra.mxu0 0.0
  %851 = vmatprep.subr.mxu0 0.0
  %852 = vmatpush1.msra.mxu0 0.0
  %853 = vmatprep.subr.mxu0 0.0
  %854 = vmatpush1.msra.mxu0 0.0
  %855 = vmatprep.subr.mxu0 0.0
  %856 = vmatpush1.msra.mxu0 0.0
  %857 = vmatprep.subr.mxu0 0.0
  %858 = vmatpush1.msra.mxu0 0.0
  %859 = vmatprep.subr.mxu0 0.0
  %860 = vmatpush1.msra.mxu0 0.0
  %861 = vmatprep.subr.mxu0 0.0
  %862 = vmatpush1.msra.mxu0 0.0
  %863 = vmatprep.subr.mxu0 0.0
  %864 = vmatpush1.msra.mxu0 0.0
  %865 = vmatprep.subr.mxu0 0.0
  %866 = vmatpush1.msra.mxu0 0.0
  %867 = vmatprep.subr.mxu0 0.0
  %868 = vmatpush1.msra.mxu0 0.0
  %869 = vmatprep.subr.mxu0 0.0
  %870 = vmatpush1.msra.mxu0 0.0
  %871 = vmatprep.subr.mxu0 0.0
  %872 = vmatpush1.msra.mxu0 0.0
  %873 = vmatprep.subr.mxu0 0.0
  %874 = vmatpush1.msra.mxu0 0.0
  %875 = vmatprep.subr.mxu0 0.0
  %876 = vmatpush1.msra.mxu0 0.0
  %877 = vmatprep.subr.mxu0 0.0
  %878 = vmatpush1.msra.mxu0 0.0
  %879 = vmatprep.mubr.f32.mxu0 0.0
  %880 = vmatmul.mubr.f32.gmra.mrb[0].mxu0 %v811
  %v881 = vpop.f32.mrb[0].mxu0
  %v882 = vadd.f32 %v759, %v881
  %v883 = vpop.f32.mrb[0].mxu0
  %884 = vmatprep.mubr.f32.mxu0 0.0
  %885 = vmatmul.mubr.f32.gmra.mrb[0].mxu0 %v813
  %v886 = vpop.f32.mrb[0].mxu0
  %v887 = vadd.f32 %v764, %v886
  %v888 = vpop.f32.mrb[0].mxu0
  %889 = vdwg.mxu0
  %v890 = vadd.f32 %v882, %v312
  %v891 = vadd.f32 %v887, %v312
  %v892 = vxor.u32 %v890, 2147483648
  %v893 = vxor.u32 %v891, 2147483648
  %v894 = vmul.f32 %v892, 1.442695
  %v895 = vpow.pop %v894
  %v896 = vmul.f32 %v893, 1.442695
  %v897 = vpow.pop %v896
  %v898 = vadd.f32 %v895, 1.0
  %v899 = vadd.f32 %v897, 1.0
  %v900 = vrcp.pop %v898
  %v901 = vmul.f32 1.0, %v900
  %v902 = vrcp.pop %v899
  %v903 = vmul.f32 1.0, %v902
  %v904 = vtanh.pop %v890
  %v905 = vtanh.pop %v891
  %v906 = vmul.f32 %v901, %v634
  %v907 = vmul.f32 %v903, %v635
  %910 = vrot.lane.b32.xlu0 %v904, 96
  %v911 = vpop.permute.xlu0 %910
  %912 = vrot.lane.b32.xlu0 %v905, 96
  %v913 = vpop.permute.xlu0 %912
  %v916 = vmul.f32 %v901, %v911
  %v917 = vmul.f32 %v903, %v913
  %920 = vrot.lane.b32.xlu0 %v916, 16
  %v921 = vpop.permute.xlu0 %920
  %922 = vrot.lane.b32.xlu0 %v917, 16
  %v923 = vpop.permute.xlu0 %922
  %v926 = vadd.f32 %v906, %v921
  %v927 = vadd.f32 %v907, %v923
  %v928 = vtanh.pop %v926
  %v929 = vtanh.pop %v927
  %932 = vrot.lane.b32.xlu0 %v928, 32
  %v933 = vpop.permute.xlu0 %932
  %934 = vrot.lane.b32.xlu0 %v929, 32
  %v935 = vpop.permute.xlu0 %934
  %v938 = vmul.f32 %v901, %v933
  %v939 = vmul.f32 %v903, %v935
  %942 = vrot.lane.b32.xlu0 %v646, 80
  %v943 = vpop.permute.xlu0 %942
  %944 = vrot.lane.b32.xlu0 %v647, 80
  %v945 = vpop.permute.xlu0 %944
  %v946 = vsel %vm98, %v943, 0
  %v948 = vsel %vm98, %v945, 0
  %950 = vmatprep.subr.mxu0 0.0
  %951 = vmatpush1.msra.mxu0 %v63
  %952 = vmatprep.subr.mxu0 0.0
  %953 = vmatpush1.msra.mxu0 %v64
  %954 = vmatprep.subr.mxu0 0.0
  %955 = vmatpush1.msra.mxu0 0.0
  %956 = vmatprep.subr.mxu0 0.0
  %957 = vmatpush1.msra.mxu0 0.0
  %958 = vmatprep.subr.mxu0 0.0
  %959 = vmatpush1.msra.mxu0 0.0
  %960 = vmatprep.subr.mxu0 0.0
  %961 = vmatpush1.msra.mxu0 0.0
  %962 = vmatprep.subr.mxu0 0.0
  %963 = vmatpush1.msra.mxu0 0.0
  %964 = vmatprep.subr.mxu0 0.0
  %965 = vmatpush1.msra.mxu0 0.0
  %966 = vmatprep.subr.mxu0 0.0
  %967 = vmatpush1.msra.mxu0 0.0
  %968 = vmatprep.subr.mxu0 0.0
  %969 = vmatpush1.msra.mxu0 0.0
  %970 = vmatprep.subr.mxu0 0.0
  %971 = vmatpush1.msra.mxu0 0.0
  %972 = vmatprep.subr.mxu0 0.0
  %973 = vmatpush1.msra.mxu0 0.0
  %974 = vmatprep.subr.mxu0 0.0
  %975 = vmatpush1.msra.mxu0 0.0
  %976 = vmatprep.subr.mxu0 0.0
  %977 = vmatpush1.msra.mxu0 0.0
  %978 = vmatprep.subr.mxu0 0.0
  %979 = vmatpush1.msra.mxu0 0.0
  %980 = vmatprep.subr.mxu0 0.0
  %981 = vmatpush1.msra.mxu0 0.0
  %982 = vmatprep.subr.mxu0 0.0
  %983 = vmatpush1.msra.mxu0 0.0
  %984 = vmatprep.subr.mxu0 0.0
  %985 = vmatpush1.msra.mxu0 0.0
  %986 = vmatprep.subr.mxu0 0.0
  %987 = vmatpush1.msra.mxu0 0.0
  %988 = vmatprep.subr.mxu0 0.0
  %989 = vmatpush1.msra.mxu0 0.0
  %990 = vmatprep.subr.mxu0 0.0
  %991 = vmatpush1.msra.mxu0 0.0
  %992 = vmatprep.subr.mxu0 0.0
  %993 = vmatpush1.msra.mxu0 0.0
  %994 = vmatprep.subr.mxu0 0.0
  %995 = vmatpush1.msra.mxu0 0.0
  %996 = vmatprep.subr.mxu0 0.0
  %997 = vmatpush1.msra.mxu0 0.0
  %998 = vmatprep.subr.mxu0 0.0
  %999 = vmatpush1.msra.mxu0 0.0
  %1000 = vmatprep.subr.mxu0 0.0
  %1001 = vmatpush1.msra.mxu0 0.0
  %1002 = vmatprep.subr.mxu0 0.0
  %1003 = vmatpush1.msra.mxu0 0.0
  %1004 = vmatprep.subr.mxu0 0.0
  %1005 = vmatpush1.msra.mxu0 0.0
  %1006 = vmatprep.subr.mxu0 0.0
  %1007 = vmatpush1.msra.mxu0 0.0
  %1008 = vmatprep.subr.mxu0 0.0
  %1009 = vmatpush1.msra.mxu0 0.0
  %1010 = vmatprep.subr.mxu0 0.0
  %1011 = vmatpush1.msra.mxu0 0.0
  %1012 = vmatprep.subr.mxu0 0.0
  %1013 = vmatpush1.msra.mxu0 0.0
  %1014 = vmatprep.mubr.f32.mxu0 0.0
  %1015 = vmatmul.mubr.f32.gmra.mrb[0].mxu0 %v946
  %v1016 = vpop.f32.mrb[0].mxu0
  %v1017 = vadd.f32 0.0, %v1016
  %v1018 = vpop.f32.mrb[0].mxu0
  %1019 = vmatprep.mubr.f32.mxu0 0.0
  %1020 = vmatmul.mubr.f32.gmra.mrb[0].mxu0 %v948
  %v1021 = vpop.f32.mrb[0].mxu0
  %v1022 = vadd.f32 0.0, %v1021
  %v1023 = vpop.f32.mrb[0].mxu0
  %1024 = vdwg.mxu0
  %v1041 = vrot.slane %v667, 7
  %v1042 = vsel %vm194, %v1041, %v666
  %v1043 = vrot.slane %v668, 6
  %v1044 = vsel %vm197, %v1043, %v1042
  %v1045 = vrot.slane %v669, 5
  %v1046 = vsel %vm200, %v1045, %v1044
  %v1047 = vrot.slane %v670, 4
  %v1048 = vsel %vm203, %v1047, %v1046
  %v1049 = vrot.slane %v671, 3
  %v1050 = vsel %vm206, %v1049, %v1048
  %v1051 = vrot.slane %v672, 2
  %v1052 = vsel %vm209, %v1051, %v1050
  %v1053 = vrot.slane %v673, 1
  %v1054 = vsel %vm212, %v1053, %v1052
  %v1055 = vrot.slane %v675, 7
  %v1056 = vsel %vm194, %v1055, %v674
  %v1057 = vrot.slane %v676, 6
  %v1058 = vsel %vm197, %v1057, %v1056
  %v1059 = vrot.slane %v677, 5
  %v1060 = vsel %vm200, %v1059, %v1058
  %v1061 = vrot.slane %v678, 4
  %v1062 = vsel %vm203, %v1061, %v1060
  %v1063 = vrot.slane %v679, 3
  %v1064 = vsel %vm206, %v1063, %v1062
  %v1065 = vrot.slane %v680, 2
  %v1066 = vsel %vm209, %v1065, %v1064
  %v1067 = vrot.slane %v681, 1
  %v1068 = vsel %vm212, %v1067, %v1066
  %v1069 = vsel %vm228, %v1054, 0
  %v1071 = vsel %vm228, %v1068, 0
  %1073 = vmatprep.subr.mxu0 0.0
  %1074 = vmatpush1.msra.mxu0 %v59
  %1075 = vmatprep.subr.mxu0 0.0
  %1076 = vmatpush1.msra.mxu0 %v60
  %1077 = vmatprep.subr.mxu0 0.0
  %1078 = vmatpush1.msra.mxu0 %v61
  %1079 = vmatprep.subr.mxu0 0.0
  %1080 = vmatpush1.msra.mxu0 %v62
  %1081 = vmatprep.subr.mxu0 0.0
  %1082 = vmatpush1.msra.mxu0 0.0
  %1083 = vmatprep.subr.mxu0 0.0
  %1084 = vmatpush1.msra.mxu0 0.0
  %1085 = vmatprep.subr.mxu0 0.0
  %1086 = vmatpush1.msra.mxu0 0.0
  %1087 = vmatprep.subr.mxu0 0.0
  %1088 = vmatpush1.msra.mxu0 0.0
  %1089 = vmatprep.subr.mxu0 0.0
  %1090 = vmatpush1.msra.mxu0 0.0
  %1091 = vmatprep.subr.mxu0 0.0
  %1092 = vmatpush1.msra.mxu0 0.0
  %1093 = vmatprep.subr.mxu0 0.0
  %1094 = vmatpush1.msra.mxu0 0.0
  %1095 = vmatprep.subr.mxu0 0.0
  %1096 = vmatpush1.msra.mxu0 0.0
  %1097 = vmatprep.subr.mxu0 0.0
  %1098 = vmatpush1.msra.mxu0 0.0
  %1099 = vmatprep.subr.mxu0 0.0
  %1100 = vmatpush1.msra.mxu0 0.0
  %1101 = vmatprep.subr.mxu0 0.0
  %1102 = vmatpush1.msra.mxu0 0.0
  %1103 = vmatprep.subr.mxu0 0.0
  %1104 = vmatpush1.msra.mxu0 0.0
  %1105 = vmatprep.subr.mxu0 0.0
  %1106 = vmatpush1.msra.mxu0 0.0
  %1107 = vmatprep.subr.mxu0 0.0
  %1108 = vmatpush1.msra.mxu0 0.0
  %1109 = vmatprep.subr.mxu0 0.0
  %1110 = vmatpush1.msra.mxu0 0.0
  %1111 = vmatprep.subr.mxu0 0.0
  %1112 = vmatpush1.msra.mxu0 0.0
  %1113 = vmatprep.subr.mxu0 0.0
  %1114 = vmatpush1.msra.mxu0 0.0
  %1115 = vmatprep.subr.mxu0 0.0
  %1116 = vmatpush1.msra.mxu0 0.0
  %1117 = vmatprep.subr.mxu0 0.0
  %1118 = vmatpush1.msra.mxu0 0.0
  %1119 = vmatprep.subr.mxu0 0.0
  %1120 = vmatpush1.msra.mxu0 0.0
  %1121 = vmatprep.subr.mxu0 0.0
  %1122 = vmatpush1.msra.mxu0 0.0
  %1123 = vmatprep.subr.mxu0 0.0
  %1124 = vmatpush1.msra.mxu0 0.0
  %1125 = vmatprep.subr.mxu0 0.0
  %1126 = vmatpush1.msra.mxu0 0.0
  %1127 = vmatprep.subr.mxu0 0.0
  %1128 = vmatpush1.msra.mxu0 0.0
  %1129 = vmatprep.subr.mxu0 0.0
  %1130 = vmatpush1.msra.mxu0 0.0
  %1131 = vmatprep.subr.mxu0 0.0
  %1132 = vmatpush1.msra.mxu0 0.0
  %1133 = vmatprep.subr.mxu0 0.0
  %1134 = vmatpush1.msra.mxu0 0.0
  %1135 = vmatprep.subr.mxu0 0.0
  %1136 = vmatpush1.msra.mxu0 0.0
  %1137 = vmatprep.mubr.f32.mxu0 0.0
  %1138 = vmatmul.mubr.f32.gmra.mrb[0].mxu0 %v1069
  %v1139 = vpop.f32.mrb[0].mxu0
  %v1140 = vadd.f32 %v1017, %v1139
  %v1141 = vpop.f32.mrb[0].mxu0
  %1142 = vmatprep.mubr.f32.mxu0 0.0
  %1143 = vmatmul.mubr.f32.gmra.mrb[0].mxu0 %v1071
  %v1144 = vpop.f32.mrb[0].mxu0
  %v1145 = vadd.f32 %v1022, %v1144
  %v1146 = vpop.f32.mrb[0].mxu0
  %1147 = vdwg.mxu0
  %v1148 = vadd.f32 %v1140, %v566
  %v1149 = vadd.f32 %v1145, %v566
  %v1150 = vxor.u32 %v1148, 2147483648
  %v1151 = vxor.u32 %v1149, 2147483648
  %v1152 = vmul.f32 %v1150, 1.442695
  %v1153 = vpow.pop %v1152
  %v1154 = vmul.f32 %v1151, 1.442695
  %v1155 = vpow.pop %v1154
  %v1156 = vadd.f32 %v1153, 1.0
  %v1157 = vadd.f32 %v1155, 1.0
  %v1158 = vrcp.pop %v1156
  %v1159 = vmul.f32 1.0, %v1158
  %v1160 = vrcp.pop %v1157
  %v1161 = vmul.f32 1.0, %v1160
  %v1162 = vtanh.pop %v1148
  %v1163 = vtanh.pop %v1149
  %v1164 = vmul.f32 %v1159, %v648
  %v1165 = vmul.f32 %v1161, %v649
  %1168 = vrot.lane.b32.xlu0 %v1162, 96
  %v1169 = vpop.permute.xlu0 %1168
  %1170 = vrot.lane.b32.xlu0 %v1163, 96
  %v1171 = vpop.permute.xlu0 %1170
  %v1174 = vmul.f32 %v1159, %v1169
  %v1175 = vmul.f32 %v1161, %v1171
  %1178 = vrot.lane.b32.xlu0 %v1174, 16
  %v1179 = vpop.permute.xlu0 %1178
  %1180 = vrot.lane.b32.xlu0 %v1175, 16
  %v1181 = vpop.permute.xlu0 %1180
  %v1184 = vadd.f32 %v1164, %v1179
  %v1185 = vadd.f32 %v1165, %v1181
  %v1186 = vtanh.pop %v1184
  %v1187 = vtanh.pop %v1185
  %1190 = vrot.lane.b32.xlu0 %v1186, 32
  %v1191 = vpop.permute.xlu0 %1190
  %1192 = vrot.lane.b32.xlu0 %v1187, 32
  %v1193 = vpop.permute.xlu0 %1192
  %v1196 = vmul.f32 %v1159, %v1191
  %v1197 = vmul.f32 %v1161, %v1193
  %vm1198 = vcmp.gt.s32.totalorder %v50, 1
  %vm1199 = vcmp.gt.s32.totalorder %v51, 1
  %vm1200 = vcmp.gt.s32.totalorder %v50, 6
  %vm1201 = vcmp.gt.s32.totalorder %v51, 6
  %v1202 = vsel %vm1198, 1, 0
  %v1203 = vsel %vm1199, 1, 0
  %1204 = vset.pattern.permute.xlu0 0
  %1205 = vperm.xlu0 %1204, %v1202
  %v1206 = vpop.permute.xlu0 %1205
  %1207 = vset.pattern.permute.xlu0 0
  %1208 = vperm.xlu0 %1207, %v1203
  %v1209 = vpop.permute.xlu0 %1208
  %vm1210 = vcmp.eq.s32.totalorder %v1206, 1
  %vm1211 = vcmp.eq.s32.totalorder %v1209, 1
  %v1212 = vsel %vm1210, %v938, %v632
  %v1213 = vsel %vm1211, %v939, %v633
  %v1214 = vsel %vm1210, %v926, %v634
  %v1215 = vsel %vm1211, %v927, %v635
  %v1216 = vsel %vm1200, 1, 0
  %v1217 = vsel %vm1201, 1, 0
  %1218 = vset.pattern.permute.xlu0 0
  %1219 = vperm.xlu0 %1218, %v1216
  %v1220 = vpop.permute.xlu0 %1219
  %1221 = vset.pattern.permute.xlu0 0
  %1222 = vperm.xlu0 %1221, %v1217
  %v1223 = vpop.permute.xlu0 %1222
  %vm1224 = vcmp.eq.s32.totalorder %v1220, 1
  %vm1225 = vcmp.eq.s32.totalorder %v1223, 1
  %v1226 = vsel %vm1224, %v1196, %v646
  %v1227 = vsel %vm1225, %v1197, %v647
  %v1228 = vsel %vm1224, %v1184, %v648
  %v1229 = vsel %vm1225, %v1185, %v649
  %v1230 = vld [vmem:[%s0 + $0x2] sm:$0x1]
  %v1231 = vld [vmem:[%s0 + $0xa] sm:$0x1]
  %v1232 = vld [vmem:[%s0 + $0x12] sm:$0x1]
  %v1233 = vld [vmem:[%s0 + $0x1a] sm:$0x1]
  %v1234 = vld [vmem:[%s0 + $0x22] sm:$0x1]
  %v1235 = vld [vmem:[%s0 + $0x2a] sm:$0x1]
  %v1236 = vld [vmem:[%s0 + $0x32] sm:$0x1]
  %v1237 = vld [vmem:[%s0 + $0x3a] sm:$0x1]
  %v1238 = vld [vmem:[%s0 + $0x42] sm:$0x1]
  %v1239 = vld [vmem:[%s0 + $0x4a] sm:$0x1]
  %v1240 = vld [vmem:[%s0 + $0x52] sm:$0x1]
  %v1241 = vld [vmem:[%s0 + $0x5a] sm:$0x1]
  %v1242 = vld [vmem:[%s0 + $0x62] sm:$0x1]
  %v1243 = vld [vmem:[%s0 + $0x6a] sm:$0x1]
  %v1244 = vld [vmem:[%s0 + $0x72] sm:$0x1]
  %v1245 = vld [vmem:[%s0 + $0x7a] sm:$0x1]
  %v1246 = vld [vmem:[%s0 + $0x5] sm:$0x1]
  %v1247 = vld [vmem:[%s0 + $0xd] sm:$0x1]
  %v1248 = vld [vmem:[%s0 + $0x15] sm:$0x1]
  %v1249 = vld [vmem:[%s0 + $0x1d] sm:$0x1]
  %v1250 = vld [vmem:[%s0 + $0x25] sm:$0x1]
  %v1251 = vld [vmem:[%s0 + $0x2d] sm:$0x1]
  %v1252 = vld [vmem:[%s0 + $0x35] sm:$0x1]
  %v1253 = vld [vmem:[%s0 + $0x3d] sm:$0x1]
  %v1254 = vld [vmem:[%s0 + $0x45] sm:$0x1]
  %v1255 = vld [vmem:[%s0 + $0x4d] sm:$0x1]
  %v1256 = vld [vmem:[%s0 + $0x55] sm:$0x1]
  %v1257 = vld [vmem:[%s0 + $0x5d] sm:$0x1]
  %v1258 = vld [vmem:[%s0 + $0x65] sm:$0x1]
  %v1259 = vld [vmem:[%s0 + $0x6d] sm:$0x1]
  %v1260 = vld [vmem:[%s0 + $0x75] sm:$0x1]
  %v1261 = vld [vmem:[%s0 + $0x7d] sm:$0x1]
  %1264 = vrot.lane.b32.xlu0 %v1212, 80
  %v1265 = vpop.permute.xlu0 %1264
  %1266 = vrot.lane.b32.xlu0 %v1213, 80
  %v1267 = vpop.permute.xlu0 %1266
  %v1268 = vsel %vm98, %v1265, 0
  %v1270 = vsel %vm98, %v1267, 0
  %1272 = vmatprep.subr.mxu0 0.0
  %1273 = vmatpush1.msra.mxu0 %v56
  %1274 = vmatprep.subr.mxu0 0.0
  %1275 = vmatpush1.msra.mxu0 %v57
  %1276 = vmatprep.subr.mxu0 0.0
  %1277 = vmatpush1.msra.mxu0 0.0
  %1278 = vmatprep.subr.mxu0 0.0
  %1279 = vmatpush1.msra.mxu0 0.0
  %1280 = vmatprep.subr.mxu0 0.0
  %1281 = vmatpush1.msra.mxu0 0.0
  %1282 = vmatprep.subr.mxu0 0.0
  %1283 = vmatpush1.msra.mxu0 0.0
  %1284 = vmatprep.subr.mxu0 0.0
  %1285 = vmatpush1.msra.mxu0 0.0
  %1286 = vmatprep.subr.mxu0 0.0
  %1287 = vmatpush1.msra.mxu0 0.0
  %1288 = vmatprep.subr.mxu0 0.0
  %1289 = vmatpush1.msra.mxu0 0.0
  %1290 = vmatprep.subr.mxu0 0.0
  %1291 = vmatpush1.msra.mxu0 0.0
  %1292 = vmatprep.subr.mxu0 0.0
  %1293 = vmatpush1.msra.mxu0 0.0
  %1294 = vmatprep.subr.mxu0 0.0
  %1295 = vmatpush1.msra.mxu0 0.0
  %1296 = vmatprep.subr.mxu0 0.0
  %1297 = vmatpush1.msra.mxu0 0.0
  %1298 = vmatprep.subr.mxu0 0.0
  %1299 = vmatpush1.msra.mxu0 0.0
  %1300 = vmatprep.subr.mxu0 0.0
  %1301 = vmatpush1.msra.mxu0 0.0
  %1302 = vmatprep.subr.mxu0 0.0
  %1303 = vmatpush1.msra.mxu0 0.0
  %1304 = vmatprep.subr.mxu0 0.0
  %1305 = vmatpush1.msra.mxu0 0.0
  %1306 = vmatprep.subr.mxu0 0.0
  %1307 = vmatpush1.msra.mxu0 0.0
  %1308 = vmatprep.subr.mxu0 0.0
  %1309 = vmatpush1.msra.mxu0 0.0
  %1310 = vmatprep.subr.mxu0 0.0
  %1311 = vmatpush1.msra.mxu0 0.0
  %1312 = vmatprep.subr.mxu0 0.0
  %1313 = vmatpush1.msra.mxu0 0.0
  %1314 = vmatprep.subr.mxu0 0.0
  %1315 = vmatpush1.msra.mxu0 0.0
  %1316 = vmatprep.subr.mxu0 0.0
  %1317 = vmatpush1.msra.mxu0 0.0
  %1318 = vmatprep.subr.mxu0 0.0
  %1319 = vmatpush1.msra.mxu0 0.0
  %1320 = vmatprep.subr.mxu0 0.0
  %1321 = vmatpush1.msra.mxu0 0.0
  %1322 = vmatprep.subr.mxu0 0.0
  %1323 = vmatpush1.msra.mxu0 0.0
  %1324 = vmatprep.subr.mxu0 0.0
  %1325 = vmatpush1.msra.mxu0 0.0
  %1326 = vmatprep.subr.mxu0 0.0
  %1327 = vmatpush1.msra.mxu0 0.0
  %1328 = vmatprep.subr.mxu0 0.0
  %1329 = vmatpush1.msra.mxu0 0.0
  %1330 = vmatprep.subr.mxu0 0.0
  %1331 = vmatpush1.msra.mxu0 0.0
  %1332 = vmatprep.subr.mxu0 0.0
  %1333 = vmatpush1.msra.mxu0 0.0
  %1334 = vmatprep.subr.mxu0 0.0
  %1335 = vmatpush1.msra.mxu0 0.0
  %1336 = vmatprep.mubr.f32.mxu0 0.0
  %1337 = vmatmul.mubr.f32.gmra.mrb[0].mxu0 %v1268
  %v1338 = vpop.f32.mrb[0].mxu0
  %v1339 = vadd.f32 0.0, %v1338
  %v1340 = vpop.f32.mrb[0].mxu0
  %1341 = vmatprep.mubr.f32.mxu0 0.0
  %1342 = vmatmul.mubr.f32.gmra.mrb[0].mxu0 %v1270
  %v1343 = vpop.f32.mrb[0].mxu0
  %v1344 = vadd.f32 0.0, %v1343
  %v1345 = vpop.f32.mrb[0].mxu0
  %1346 = vdwg.mxu0
  %v1363 = vrot.slane %v1231, 7
  %v1364 = vsel %vm194, %v1363, %v1230
  %v1365 = vrot.slane %v1232, 6
  %v1366 = vsel %vm197, %v1365, %v1364
  %v1367 = vrot.slane %v1233, 5
  %v1368 = vsel %vm200, %v1367, %v1366
  %v1369 = vrot.slane %v1234, 4
  %v1370 = vsel %vm203, %v1369, %v1368
  %v1371 = vrot.slane %v1235, 3
  %v1372 = vsel %vm206, %v1371, %v1370
  %v1373 = vrot.slane %v1236, 2
  %v1374 = vsel %vm209, %v1373, %v1372
  %v1375 = vrot.slane %v1237, 1
  %v1376 = vsel %vm212, %v1375, %v1374
  %v1377 = vrot.slane %v1239, 7
  %v1378 = vsel %vm194, %v1377, %v1238
  %v1379 = vrot.slane %v1240, 6
  %v1380 = vsel %vm197, %v1379, %v1378
  %v1381 = vrot.slane %v1241, 5
  %v1382 = vsel %vm200, %v1381, %v1380
  %v1383 = vrot.slane %v1242, 4
  %v1384 = vsel %vm203, %v1383, %v1382
  %v1385 = vrot.slane %v1243, 3
  %v1386 = vsel %vm206, %v1385, %v1384
  %v1387 = vrot.slane %v1244, 2
  %v1388 = vsel %vm209, %v1387, %v1386
  %v1389 = vrot.slane %v1245, 1
  %v1390 = vsel %vm212, %v1389, %v1388
  %v1391 = vsel %vm228, %v1376, 0
  %v1393 = vsel %vm228, %v1390, 0
  %1395 = vmatprep.subr.mxu0 0.0
  %1396 = vmatpush1.msra.mxu0 %v52
  %1397 = vmatprep.subr.mxu0 0.0
  %1398 = vmatpush1.msra.mxu0 %v53
  %1399 = vmatprep.subr.mxu0 0.0
  %1400 = vmatpush1.msra.mxu0 %v54
  %1401 = vmatprep.subr.mxu0 0.0
  %1402 = vmatpush1.msra.mxu0 %v55
  %1403 = vmatprep.subr.mxu0 0.0
  %1404 = vmatpush1.msra.mxu0 0.0
  %1405 = vmatprep.subr.mxu0 0.0
  %1406 = vmatpush1.msra.mxu0 0.0
  %1407 = vmatprep.subr.mxu0 0.0
  %1408 = vmatpush1.msra.mxu0 0.0
  %1409 = vmatprep.subr.mxu0 0.0
  %1410 = vmatpush1.msra.mxu0 0.0
  %1411 = vmatprep.subr.mxu0 0.0
  %1412 = vmatpush1.msra.mxu0 0.0
  %1413 = vmatprep.subr.mxu0 0.0
  %1414 = vmatpush1.msra.mxu0 0.0
  %1415 = vmatprep.subr.mxu0 0.0
  %1416 = vmatpush1.msra.mxu0 0.0
  %1417 = vmatprep.subr.mxu0 0.0
  %1418 = vmatpush1.msra.mxu0 0.0
  %1419 = vmatprep.subr.mxu0 0.0
  %1420 = vmatpush1.msra.mxu0 0.0
  %1421 = vmatprep.subr.mxu0 0.0
  %1422 = vmatpush1.msra.mxu0 0.0
  %1423 = vmatprep.subr.mxu0 0.0
  %1424 = vmatpush1.msra.mxu0 0.0
  %1425 = vmatprep.subr.mxu0 0.0
  %1426 = vmatpush1.msra.mxu0 0.0
  %1427 = vmatprep.subr.mxu0 0.0
  %1428 = vmatpush1.msra.mxu0 0.0
  %1429 = vmatprep.subr.mxu0 0.0
  %1430 = vmatpush1.msra.mxu0 0.0
  %1431 = vmatprep.subr.mxu0 0.0
  %1432 = vmatpush1.msra.mxu0 0.0
  %1433 = vmatprep.subr.mxu0 0.0
  %1434 = vmatpush1.msra.mxu0 0.0
  %1435 = vmatprep.subr.mxu0 0.0
  %1436 = vmatpush1.msra.mxu0 0.0
  %1437 = vmatprep.subr.mxu0 0.0
  %1438 = vmatpush1.msra.mxu0 0.0
  %1439 = vmatprep.subr.mxu0 0.0
  %1440 = vmatpush1.msra.mxu0 0.0
  %1441 = vmatprep.subr.mxu0 0.0
  %1442 = vmatpush1.msra.mxu0 0.0
  %1443 = vmatprep.subr.mxu0 0.0
  %1444 = vmatpush1.msra.mxu0 0.0
  %1445 = vmatprep.subr.mxu0 0.0
  %1446 = vmatpush1.msra.mxu0 0.0
  %1447 = vmatprep.subr.mxu0 0.0
  %1448 = vmatpush1.msra.mxu0 0.0
  %1449 = vmatprep.subr.mxu0 0.0
  %1450 = vmatpush1.msra.mxu0 0.0
  %1451 = vmatprep.subr.mxu0 0.0
  %1452 = vmatpush1.msra.mxu0 0.0
  %1453 = vmatprep.subr.mxu0 0.0
  %1454 = vmatpush1.msra.mxu0 0.0
  %1455 = vmatprep.subr.mxu0 0.0
  %1456 = vmatpush1.msra.mxu0 0.0
  %1457 = vmatprep.subr.mxu0 0.0
  %1458 = vmatpush1.msra.mxu0 0.0
  %1459 = vmatprep.mubr.f32.mxu0 0.0
  %1460 = vmatmul.mubr.f32.gmra.mrb[0].mxu0 %v1391
  %v1461 = vpop.f32.mrb[0].mxu0
  %v1462 = vadd.f32 %v1339, %v1461
  %v1463 = vpop.f32.mrb[0].mxu0
  %1464 = vmatprep.mubr.f32.mxu0 0.0
  %1465 = vmatmul.mubr.f32.gmra.mrb[0].mxu0 %v1393
  %v1466 = vpop.f32.mrb[0].mxu0
  %v1467 = vadd.f32 %v1344, %v1466
  %v1468 = vpop.f32.mrb[0].mxu0
  %1469 = vdwg.mxu0
  %v1470 = vadd.f32 %v1462, %v312
  %v1471 = vadd.f32 %v1467, %v312
  %v1472 = vxor.u32 %v1470, 2147483648
  %v1473 = vxor.u32 %v1471, 2147483648
  %v1474 = vmul.f32 %v1472, 1.442695
  %v1475 = vpow.pop %v1474
  %v1476 = vmul.f32 %v1473, 1.442695
  %v1477 = vpow.pop %v1476
  %v1478 = vadd.f32 %v1475, 1.0
  %v1479 = vadd.f32 %v1477, 1.0
  %v1480 = vrcp.pop %v1478
  %v1481 = vmul.f32 1.0, %v1480
  %v1482 = vrcp.pop %v1479
  %v1483 = vmul.f32 1.0, %v1482
  %v1484 = vtanh.pop %v1470
  %v1485 = vtanh.pop %v1471
  %v1486 = vmul.f32 %v1481, %v1214
  %v1487 = vmul.f32 %v1483, %v1215
  %1490 = vrot.lane.b32.xlu0 %v1484, 96
  %v1491 = vpop.permute.xlu0 %1490
  %1492 = vrot.lane.b32.xlu0 %v1485, 96
  %v1493 = vpop.permute.xlu0 %1492
  %v1496 = vmul.f32 %v1481, %v1491
  %v1497 = vmul.f32 %v1483, %v1493
  %1500 = vrot.lane.b32.xlu0 %v1496, 16
  %v1501 = vpop.permute.xlu0 %1500
  %1502 = vrot.lane.b32.xlu0 %v1497, 16
  %v1503 = vpop.permute.xlu0 %1502
  %v1506 = vadd.f32 %v1486, %v1501
  %v1507 = vadd.f32 %v1487, %v1503
  %v1508 = vtanh.pop %v1506
  %v1509 = vtanh.pop %v1507
  %1512 = vrot.lane.b32.xlu0 %v1508, 32
  %v1513 = vpop.permute.xlu0 %1512
  %1514 = vrot.lane.b32.xlu0 %v1509, 32
  %v1515 = vpop.permute.xlu0 %1514
  %v1518 = vmul.f32 %v1481, %v1513
  %v1519 = vmul.f32 %v1483, %v1515
  %1522 = vrot.lane.b32.xlu0 %v1226, 80
  %v1523 = vpop.permute.xlu0 %1522
  %1524 = vrot.lane.b32.xlu0 %v1227, 80
  %v1525 = vpop.permute.xlu0 %1524
  %v1526 = vsel %vm98, %v1523, 0
  %v1528 = vsel %vm98, %v1525, 0
  %1530 = vmatprep.subr.mxu0 0.0
  %1531 = vmatpush1.msra.mxu0 %v63
  %1532 = vmatprep.subr.mxu0 0.0
  %1533 = vmatpush1.msra.mxu0 %v64
  %1534 = vmatprep.subr.mxu0 0.0
  %1535 = vmatpush1.msra.mxu0 0.0
  %1536 = vmatprep.subr.mxu0 0.0
  %1537 = vmatpush1.msra.mxu0 0.0
  %1538 = vmatprep.subr.mxu0 0.0
  %1539 = vmatpush1.msra.mxu0 0.0
  %1540 = vmatprep.subr.mxu0 0.0
  %1541 = vmatpush1.msra.mxu0 0.0
  %1542 = vmatprep.subr.mxu0 0.0
  %1543 = vmatpush1.msra.mxu0 0.0
  %1544 = vmatprep.subr.mxu0 0.0
  %1545 = vmatpush1.msra.mxu0 0.0
  %1546 = vmatprep.subr.mxu0 0.0
  %1547 = vmatpush1.msra.mxu0 0.0
  %1548 = vmatprep.subr.mxu0 0.0
  %1549 = vmatpush1.msra.mxu0 0.0
  %1550 = vmatprep.subr.mxu0 0.0
  %1551 = vmatpush1.msra.mxu0 0.0
  %1552 = vmatprep.subr.mxu0 0.0
  %1553 = vmatpush1.msra.mxu0 0.0
  %1554 = vmatprep.subr.mxu0 0.0
  %1555 = vmatpush1.msra.mxu0 0.0
  %1556 = vmatprep.subr.mxu0 0.0
  %1557 = vmatpush1.msra.mxu0 0.0
  %1558 = vmatprep.subr.mxu0 0.0
  %1559 = vmatpush1.msra.mxu0 0.0
  %1560 = vmatprep.subr.mxu0 0.0
  %1561 = vmatpush1.msra.mxu0 0.0
  %1562 = vmatprep.subr.mxu0 0.0
  %1563 = vmatpush1.msra.mxu0 0.0
  %1564 = vmatprep.subr.mxu0 0.0
  %1565 = vmatpush1.msra.mxu0 0.0
  %1566 = vmatprep.subr.mxu0 0.0
  %1567 = vmatpush1.msra.mxu0 0.0
  %1568 = vmatprep.subr.mxu0 0.0
  %1569 = vmatpush1.msra.mxu0 0.0
  %1570 = vmatprep.subr.mxu0 0.0
  %1571 = vmatpush1.msra.mxu0 0.0
  %1572 = vmatprep.subr.mxu0 0.0
  %1573 = vmatpush1.msra.mxu0 0.0
  %1574 = vmatprep.subr.mxu0 0.0
  %1575 = vmatpush1.msra.mxu0 0.0
  %1576 = vmatprep.subr.mxu0 0.0
  %1577 = vmatpush1.msra.mxu0 0.0
  %1578 = vmatprep.subr.mxu0 0.0
  %1579 = vmatpush1.msra.mxu0 0.0
  %1580 = vmatprep.subr.mxu0 0.0
  %1581 = vmatpush1.msra.mxu0 0.0
  %1582 = vmatprep.subr.mxu0 0.0
  %1583 = vmatpush1.msra.mxu0 0.0
  %1584 = vmatprep.subr.mxu0 0.0
  %1585 = vmatpush1.msra.mxu0 0.0
  %1586 = vmatprep.subr.mxu0 0.0
  %1587 = vmatpush1.msra.mxu0 0.0
  %1588 = vmatprep.subr.mxu0 0.0
  %1589 = vmatpush1.msra.mxu0 0.0
  %1590 = vmatprep.subr.mxu0 0.0
  %1591 = vmatpush1.msra.mxu0 0.0
  %1592 = vmatprep.subr.mxu0 0.0
  %1593 = vmatpush1.msra.mxu0 0.0
  %1594 = vmatprep.mubr.f32.mxu0 0.0
  %1595 = vmatmul.mubr.f32.gmra.mrb[0].mxu0 %v1526
  %v1596 = vpop.f32.mrb[0].mxu0
  %v1597 = vadd.f32 0.0, %v1596
  %v1598 = vpop.f32.mrb[0].mxu0
  %1599 = vmatprep.mubr.f32.mxu0 0.0
  %1600 = vmatmul.mubr.f32.gmra.mrb[0].mxu0 %v1528
  %v1601 = vpop.f32.mrb[0].mxu0
  %v1602 = vadd.f32 0.0, %v1601
  %v1603 = vpop.f32.mrb[0].mxu0
  %1604 = vdwg.mxu0
  %v1621 = vrot.slane %v1247, 7
  %v1622 = vsel %vm194, %v1621, %v1246
  %v1623 = vrot.slane %v1248, 6
  %v1624 = vsel %vm197, %v1623, %v1622
  %v1625 = vrot.slane %v1249, 5
  %v1626 = vsel %vm200, %v1625, %v1624
  %v1627 = vrot.slane %v1250, 4
  %v1628 = vsel %vm203, %v1627, %v1626
  %v1629 = vrot.slane %v1251, 3
  %v1630 = vsel %vm206, %v1629, %v1628
  %v1631 = vrot.slane %v1252, 2
  %v1632 = vsel %vm209, %v1631, %v1630
  %v1633 = vrot.slane %v1253, 1
  %v1634 = vsel %vm212, %v1633, %v1632
  %v1635 = vrot.slane %v1255, 7
  %v1636 = vsel %vm194, %v1635, %v1254
  %v1637 = vrot.slane %v1256, 6
  %v1638 = vsel %vm197, %v1637, %v1636
  %v1639 = vrot.slane %v1257, 5
  %v1640 = vsel %vm200, %v1639, %v1638
  %v1641 = vrot.slane %v1258, 4
  %v1642 = vsel %vm203, %v1641, %v1640
  %v1643 = vrot.slane %v1259, 3
  %v1644 = vsel %vm206, %v1643, %v1642
  %v1645 = vrot.slane %v1260, 2
  %v1646 = vsel %vm209, %v1645, %v1644
  %v1647 = vrot.slane %v1261, 1
  %v1648 = vsel %vm212, %v1647, %v1646
  %v1649 = vsel %vm228, %v1634, 0
  %v1651 = vsel %vm228, %v1648, 0
  %1653 = vmatprep.subr.mxu0 0.0
  %1654 = vmatpush1.msra.mxu0 %v59
  %1655 = vmatprep.subr.mxu0 0.0
  %1656 = vmatpush1.msra.mxu0 %v60
  %1657 = vmatprep.subr.mxu0 0.0
  %1658 = vmatpush1.msra.mxu0 %v61
  %1659 = vmatprep.subr.mxu0 0.0
  %1660 = vmatpush1.msra.mxu0 %v62
  %1661 = vmatprep.subr.mxu0 0.0
  %1662 = vmatpush1.msra.mxu0 0.0
  %1663 = vmatprep.subr.mxu0 0.0
  %1664 = vmatpush1.msra.mxu0 0.0
  %1665 = vmatprep.subr.mxu0 0.0
  %1666 = vmatpush1.msra.mxu0 0.0
  %1667 = vmatprep.subr.mxu0 0.0
  %1668 = vmatpush1.msra.mxu0 0.0
  %1669 = vmatprep.subr.mxu0 0.0
  %1670 = vmatpush1.msra.mxu0 0.0
  %1671 = vmatprep.subr.mxu0 0.0
  %1672 = vmatpush1.msra.mxu0 0.0
  %1673 = vmatprep.subr.mxu0 0.0
  %1674 = vmatpush1.msra.mxu0 0.0
  %1675 = vmatprep.subr.mxu0 0.0
  %1676 = vmatpush1.msra.mxu0 0.0
  %1677 = vmatprep.subr.mxu0 0.0
  %1678 = vmatpush1.msra.mxu0 0.0
  %1679 = vmatprep.subr.mxu0 0.0
  %1680 = vmatpush1.msra.mxu0 0.0
  %1681 = vmatprep.subr.mxu0 0.0
  %1682 = vmatpush1.msra.mxu0 0.0
  %1683 = vmatprep.subr.mxu0 0.0
  %1684 = vmatpush1.msra.mxu0 0.0
  %1685 = vmatprep.subr.mxu0 0.0
  %1686 = vmatpush1.msra.mxu0 0.0
  %1687 = vmatprep.subr.mxu0 0.0
  %1688 = vmatpush1.msra.mxu0 0.0
  %1689 = vmatprep.subr.mxu0 0.0
  %1690 = vmatpush1.msra.mxu0 0.0
  %1691 = vmatprep.subr.mxu0 0.0
  %1692 = vmatpush1.msra.mxu0 0.0
  %1693 = vmatprep.subr.mxu0 0.0
  %1694 = vmatpush1.msra.mxu0 0.0
  %1695 = vmatprep.subr.mxu0 0.0
  %1696 = vmatpush1.msra.mxu0 0.0
  %1697 = vmatprep.subr.mxu0 0.0
  %1698 = vmatpush1.msra.mxu0 0.0
  %1699 = vmatprep.subr.mxu0 0.0
  %1700 = vmatpush1.msra.mxu0 0.0
  %1701 = vmatprep.subr.mxu0 0.0
  %1702 = vmatpush1.msra.mxu0 0.0
  %1703 = vmatprep.subr.mxu0 0.0
  %1704 = vmatpush1.msra.mxu0 0.0
  %1705 = vmatprep.subr.mxu0 0.0
  %1706 = vmatpush1.msra.mxu0 0.0
  %1707 = vmatprep.subr.mxu0 0.0
  %1708 = vmatpush1.msra.mxu0 0.0
  %1709 = vmatprep.subr.mxu0 0.0
  %1710 = vmatpush1.msra.mxu0 0.0
  %1711 = vmatprep.subr.mxu0 0.0
  %1712 = vmatpush1.msra.mxu0 0.0
  %1713 = vmatprep.subr.mxu0 0.0
  %1714 = vmatpush1.msra.mxu0 0.0
  %1715 = vmatprep.subr.mxu0 0.0
  %1716 = vmatpush1.msra.mxu0 0.0
  %1717 = vmatprep.mubr.f32.mxu0 0.0
  %1718 = vmatmul.mubr.f32.gmra.mrb[0].mxu0 %v1649
  %v1719 = vpop.f32.mrb[0].mxu0
  %v1720 = vadd.f32 %v1597, %v1719
  %v1721 = vpop.f32.mrb[0].mxu0
  %1722 = vmatprep.mubr.f32.mxu0 0.0
  %1723 = vmatmul.mubr.f32.gmra.mrb[0].mxu0 %v1651
  %v1724 = vpop.f32.mrb[0].mxu0
  %v1725 = vadd.f32 %v1602, %v1724
  %v1726 = vpop.f32.mrb[0].mxu0
  %1727 = vdwg.mxu0
  %v1728 = vadd.f32 %v1720, %v566
  %v1729 = vadd.f32 %v1725, %v566
  %v1730 = vxor.u32 %v1728, 2147483648
  %v1731 = vxor.u32 %v1729, 2147483648
  %v1732 = vmul.f32 %v1730, 1.442695
  %v1733 = vpow.pop %v1732
  %v1734 = vmul.f32 %v1731, 1.442695
  %v1735 = vpow.pop %v1734
  %v1736 = vadd.f32 %v1733, 1.0
  %v1737 = vadd.f32 %v1735, 1.0
  %v1738 = vrcp.pop %v1736
  %v1739 = vmul.f32 1.0, %v1738
  %v1740 = vrcp.pop %v1737
  %v1741 = vmul.f32 1.0, %v1740
  %v1742 = vtanh.pop %v1728
  %v1743 = vtanh.pop %v1729
  %v1744 = vmul.f32 %v1739, %v1228
  %v1745 = vmul.f32 %v1741, %v1229
  %1748 = vrot.lane.b32.xlu0 %v1742, 96
  %v1749 = vpop.permute.xlu0 %1748
  %1750 = vrot.lane.b32.xlu0 %v1743, 96
  %v1751 = vpop.permute.xlu0 %1750
  %v1754 = vmul.f32 %v1739, %v1749
  %v1755 = vmul.f32 %v1741, %v1751
  %1758 = vrot.lane.b32.xlu0 %v1754, 16
  %v1759 = vpop.permute.xlu0 %1758
  %1760 = vrot.lane.b32.xlu0 %v1755, 16
  %v1761 = vpop.permute.xlu0 %1760
  %v1764 = vadd.f32 %v1744, %v1759
  %v1765 = vadd.f32 %v1745, %v1761
  %v1766 = vtanh.pop %v1764
  %v1767 = vtanh.pop %v1765
  %1770 = vrot.lane.b32.xlu0 %v1766, 32
  %v1771 = vpop.permute.xlu0 %1770
  %1772 = vrot.lane.b32.xlu0 %v1767, 32
  %v1773 = vpop.permute.xlu0 %1772
  %v1776 = vmul.f32 %v1739, %v1771
  %v1777 = vmul.f32 %v1741, %v1773
  %vm1778 = vcmp.gt.s32.totalorder %v50, 2
  %vm1779 = vcmp.gt.s32.totalorder %v51, 2
  %vm1780 = vcmp.gt.s32.totalorder %v50, 5
  %vm1781 = vcmp.gt.s32.totalorder %v51, 5
  %v1782 = vsel %vm1778, 1, 0
  %v1783 = vsel %vm1779, 1, 0
  %1784 = vset.pattern.permute.xlu0 0
  %1785 = vperm.xlu0 %1784, %v1782
  %v1786 = vpop.permute.xlu0 %1785
  %1787 = vset.pattern.permute.xlu0 0
  %1788 = vperm.xlu0 %1787, %v1783
  %v1789 = vpop.permute.xlu0 %1788
  %vm1790 = vcmp.eq.s32.totalorder %v1786, 1
  %vm1791 = vcmp.eq.s32.totalorder %v1789, 1
  %v1792 = vsel %vm1790, %v1518, %v1212
  %v1793 = vsel %vm1791, %v1519, %v1213
  %v1794 = vsel %vm1790, %v1506, %v1214
  %v1795 = vsel %vm1791, %v1507, %v1215
  %v1796 = vsel %vm1780, 1, 0
  %v1797 = vsel %vm1781, 1, 0
  %1798 = vset.pattern.permute.xlu0 0
  %1799 = vperm.xlu0 %1798, %v1796
  %v1800 = vpop.permute.xlu0 %1799
  %1801 = vset.pattern.permute.xlu0 0
  %1802 = vperm.xlu0 %1801, %v1797
  %v1803 = vpop.permute.xlu0 %1802
  %vm1804 = vcmp.eq.s32.totalorder %v1800, 1
  %vm1805 = vcmp.eq.s32.totalorder %v1803, 1
  %v1806 = vsel %vm1804, %v1776, %v1226
  %v1807 = vsel %vm1805, %v1777, %v1227
  %v1808 = vsel %vm1804, %v1764, %v1228
  %v1809 = vsel %vm1805, %v1765, %v1229
  %v1810 = vld [vmem:[%s0 + $0x3] sm:$0x1]
  %v1811 = vld [vmem:[%s0 + $0xb] sm:$0x1]
  %v1812 = vld [vmem:[%s0 + $0x13] sm:$0x1]
  %v1813 = vld [vmem:[%s0 + $0x1b] sm:$0x1]
  %v1814 = vld [vmem:[%s0 + $0x23] sm:$0x1]
  %v1815 = vld [vmem:[%s0 + $0x2b] sm:$0x1]
  %v1816 = vld [vmem:[%s0 + $0x33] sm:$0x1]
  %v1817 = vld [vmem:[%s0 + $0x3b] sm:$0x1]
  %v1818 = vld [vmem:[%s0 + $0x43] sm:$0x1]
  %v1819 = vld [vmem:[%s0 + $0x4b] sm:$0x1]
  %v1820 = vld [vmem:[%s0 + $0x53] sm:$0x1]
  %v1821 = vld [vmem:[%s0 + $0x5b] sm:$0x1]
  %v1822 = vld [vmem:[%s0 + $0x63] sm:$0x1]
  %v1823 = vld [vmem:[%s0 + $0x6b] sm:$0x1]
  %v1824 = vld [vmem:[%s0 + $0x73] sm:$0x1]
  %v1825 = vld [vmem:[%s0 + $0x7b] sm:$0x1]
  %v1826 = vld [vmem:[%s0 + $0x4] sm:$0x1]
  %v1827 = vld [vmem:[%s0 + $0xc] sm:$0x1]
  %v1828 = vld [vmem:[%s0 + $0x14] sm:$0x1]
  %v1829 = vld [vmem:[%s0 + $0x1c] sm:$0x1]
  %v1830 = vld [vmem:[%s0 + $0x24] sm:$0x1]
  %v1831 = vld [vmem:[%s0 + $0x2c] sm:$0x1]
  %v1832 = vld [vmem:[%s0 + $0x34] sm:$0x1]
  %v1833 = vld [vmem:[%s0 + $0x3c] sm:$0x1]
  %v1834 = vld [vmem:[%s0 + $0x44] sm:$0x1]
  %v1835 = vld [vmem:[%s0 + $0x4c] sm:$0x1]
  %v1836 = vld [vmem:[%s0 + $0x54] sm:$0x1]
  %v1837 = vld [vmem:[%s0 + $0x5c] sm:$0x1]
  %v1838 = vld [vmem:[%s0 + $0x64] sm:$0x1]
  %v1839 = vld [vmem:[%s0 + $0x6c] sm:$0x1]
  %v1840 = vld [vmem:[%s0 + $0x74] sm:$0x1]
  %v1841 = vld [vmem:[%s0 + $0x7c] sm:$0x1]
  %1844 = vrot.lane.b32.xlu0 %v1792, 80
  %v1845 = vpop.permute.xlu0 %1844
  %1846 = vrot.lane.b32.xlu0 %v1793, 80
  %v1847 = vpop.permute.xlu0 %1846
  %v1848 = vsel %vm98, %v1845, 0
  %v1850 = vsel %vm98, %v1847, 0
  %1852 = vmatprep.subr.mxu0 0.0
  %1853 = vmatpush1.msra.mxu0 %v56
  %1854 = vmatprep.subr.mxu0 0.0
  %1855 = vmatpush1.msra.mxu0 %v57
  %1856 = vmatprep.subr.mxu0 0.0
  %1857 = vmatpush1.msra.mxu0 0.0
  %1858 = vmatprep.subr.mxu0 0.0
  %1859 = vmatpush1.msra.mxu0 0.0
  %1860 = vmatprep.subr.mxu0 0.0
  %1861 = vmatpush1.msra.mxu0 0.0
  %1862 = vmatprep.subr.mxu0 0.0
  %1863 = vmatpush1.msra.mxu0 0.0
  %1864 = vmatprep.subr.mxu0 0.0
  %1865 = vmatpush1.msra.mxu0 0.0
  %1866 = vmatprep.subr.mxu0 0.0
  %1867 = vmatpush1.msra.mxu0 0.0
  %1868 = vmatprep.subr.mxu0 0.0
  %1869 = vmatpush1.msra.mxu0 0.0
  %1870 = vmatprep.subr.mxu0 0.0
  %1871 = vmatpush1.msra.mxu0 0.0
  %1872 = vmatprep.subr.mxu0 0.0
  %1873 = vmatpush1.msra.mxu0 0.0
  %1874 = vmatprep.subr.mxu0 0.0
  %1875 = vmatpush1.msra.mxu0 0.0
  %1876 = vmatprep.subr.mxu0 0.0
  %1877 = vmatpush1.msra.mxu0 0.0
  %1878 = vmatprep.subr.mxu0 0.0
  %1879 = vmatpush1.msra.mxu0 0.0
  %1880 = vmatprep.subr.mxu0 0.0
  %1881 = vmatpush1.msra.mxu0 0.0
  %1882 = vmatprep.subr.mxu0 0.0
  %1883 = vmatpush1.msra.mxu0 0.0
  %1884 = vmatprep.subr.mxu0 0.0
  %1885 = vmatpush1.msra.mxu0 0.0
  %1886 = vmatprep.subr.mxu0 0.0
  %1887 = vmatpush1.msra.mxu0 0.0
  %1888 = vmatprep.subr.mxu0 0.0
  %1889 = vmatpush1.msra.mxu0 0.0
  %1890 = vmatprep.subr.mxu0 0.0
  %1891 = vmatpush1.msra.mxu0 0.0
  %1892 = vmatprep.subr.mxu0 0.0
  %1893 = vmatpush1.msra.mxu0 0.0
  %1894 = vmatprep.subr.mxu0 0.0
  %1895 = vmatpush1.msra.mxu0 0.0
  %1896 = vmatprep.subr.mxu0 0.0
  %1897 = vmatpush1.msra.mxu0 0.0
  %1898 = vmatprep.subr.mxu0 0.0
  %1899 = vmatpush1.msra.mxu0 0.0
  %1900 = vmatprep.subr.mxu0 0.0
  %1901 = vmatpush1.msra.mxu0 0.0
  %1902 = vmatprep.subr.mxu0 0.0
  %1903 = vmatpush1.msra.mxu0 0.0
  %1904 = vmatprep.subr.mxu0 0.0
  %1905 = vmatpush1.msra.mxu0 0.0
  %1906 = vmatprep.subr.mxu0 0.0
  %1907 = vmatpush1.msra.mxu0 0.0
  %1908 = vmatprep.subr.mxu0 0.0
  %1909 = vmatpush1.msra.mxu0 0.0
  %1910 = vmatprep.subr.mxu0 0.0
  %1911 = vmatpush1.msra.mxu0 0.0
  %1912 = vmatprep.subr.mxu0 0.0
  %1913 = vmatpush1.msra.mxu0 0.0
  %1914 = vmatprep.subr.mxu0 0.0
  %1915 = vmatpush1.msra.mxu0 0.0
  %1916 = vmatprep.mubr.f32.mxu0 0.0
  %1917 = vmatmul.mubr.f32.gmra.mrb[0].mxu0 %v1848
  %v1918 = vpop.f32.mrb[0].mxu0
  %v1919 = vadd.f32 0.0, %v1918
  %v1920 = vpop.f32.mrb[0].mxu0
  %1921 = vmatprep.mubr.f32.mxu0 0.0
  %1922 = vmatmul.mubr.f32.gmra.mrb[0].mxu0 %v1850
  %v1923 = vpop.f32.mrb[0].mxu0
  %v1924 = vadd.f32 0.0, %v1923
  %v1925 = vpop.f32.mrb[0].mxu0
  %1926 = vdwg.mxu0
  %v1943 = vrot.slane %v1811, 7
  %v1944 = vsel %vm194, %v1943, %v1810
  %v1945 = vrot.slane %v1812, 6
  %v1946 = vsel %vm197, %v1945, %v1944
  %v1947 = vrot.slane %v1813, 5
  %v1948 = vsel %vm200, %v1947, %v1946
  %v1949 = vrot.slane %v1814, 4
  %v1950 = vsel %vm203, %v1949, %v1948
  %v1951 = vrot.slane %v1815, 3
  %v1952 = vsel %vm206, %v1951, %v1950
  %v1953 = vrot.slane %v1816, 2
  %v1954 = vsel %vm209, %v1953, %v1952
  %v1955 = vrot.slane %v1817, 1
  %v1956 = vsel %vm212, %v1955, %v1954
  %v1957 = vrot.slane %v1819, 7
  %v1958 = vsel %vm194, %v1957, %v1818
  %v1959 = vrot.slane %v1820, 6
  %v1960 = vsel %vm197, %v1959, %v1958
  %v1961 = vrot.slane %v1821, 5
  %v1962 = vsel %vm200, %v1961, %v1960
  %v1963 = vrot.slane %v1822, 4
  %v1964 = vsel %vm203, %v1963, %v1962
  %v1965 = vrot.slane %v1823, 3
  %v1966 = vsel %vm206, %v1965, %v1964
  %v1967 = vrot.slane %v1824, 2
  %v1968 = vsel %vm209, %v1967, %v1966
  %v1969 = vrot.slane %v1825, 1
  %v1970 = vsel %vm212, %v1969, %v1968
  %v1971 = vsel %vm228, %v1956, 0
  %v1973 = vsel %vm228, %v1970, 0
  %1975 = vmatprep.subr.mxu0 0.0
  %1976 = vmatpush1.msra.mxu0 %v52
  %1977 = vmatprep.subr.mxu0 0.0
  %1978 = vmatpush1.msra.mxu0 %v53
  %1979 = vmatprep.subr.mxu0 0.0
  %1980 = vmatpush1.msra.mxu0 %v54
  %1981 = vmatprep.subr.mxu0 0.0
  %1982 = vmatpush1.msra.mxu0 %v55
  %1983 = vmatprep.subr.mxu0 0.0
  %1984 = vmatpush1.msra.mxu0 0.0
  %1985 = vmatprep.subr.mxu0 0.0
  %1986 = vmatpush1.msra.mxu0 0.0
  %1987 = vmatprep.subr.mxu0 0.0
  %1988 = vmatpush1.msra.mxu0 0.0
  %1989 = vmatprep.subr.mxu0 0.0
  %1990 = vmatpush1.msra.mxu0 0.0
  %1991 = vmatprep.subr.mxu0 0.0
  %1992 = vmatpush1.msra.mxu0 0.0
  %1993 = vmatprep.subr.mxu0 0.0
  %1994 = vmatpush1.msra.mxu0 0.0
  %1995 = vmatprep.subr.mxu0 0.0
  %1996 = vmatpush1.msra.mxu0 0.0
  %1997 = vmatprep.subr.mxu0 0.0
  %1998 = vmatpush1.msra.mxu0 0.0
  %1999 = vmatprep.subr.mxu0 0.0
  %2000 = vmatpush1.msra.mxu0 0.0
  %2001 = vmatprep.subr.mxu0 0.0
  %2002 = vmatpush1.msra.mxu0 0.0
  %2003 = vmatprep.subr.mxu0 0.0
  %2004 = vmatpush1.msra.mxu0 0.0
  %2005 = vmatprep.subr.mxu0 0.0
  %2006 = vmatpush1.msra.mxu0 0.0
  %2007 = vmatprep.subr.mxu0 0.0
  %2008 = vmatpush1.msra.mxu0 0.0
  %2009 = vmatprep.subr.mxu0 0.0
  %2010 = vmatpush1.msra.mxu0 0.0
  %2011 = vmatprep.subr.mxu0 0.0
  %2012 = vmatpush1.msra.mxu0 0.0
  %2013 = vmatprep.subr.mxu0 0.0
  %2014 = vmatpush1.msra.mxu0 0.0
  %2015 = vmatprep.subr.mxu0 0.0
  %2016 = vmatpush1.msra.mxu0 0.0
  %2017 = vmatprep.subr.mxu0 0.0
  %2018 = vmatpush1.msra.mxu0 0.0
  %2019 = vmatprep.subr.mxu0 0.0
  %2020 = vmatpush1.msra.mxu0 0.0
  %2021 = vmatprep.subr.mxu0 0.0
  %2022 = vmatpush1.msra.mxu0 0.0
  %2023 = vmatprep.subr.mxu0 0.0
  %2024 = vmatpush1.msra.mxu0 0.0
  %2025 = vmatprep.subr.mxu0 0.0
  %2026 = vmatpush1.msra.mxu0 0.0
  %2027 = vmatprep.subr.mxu0 0.0
  %2028 = vmatpush1.msra.mxu0 0.0
  %2029 = vmatprep.subr.mxu0 0.0
  %2030 = vmatpush1.msra.mxu0 0.0
  %2031 = vmatprep.subr.mxu0 0.0
  %2032 = vmatpush1.msra.mxu0 0.0
  %2033 = vmatprep.subr.mxu0 0.0
  %2034 = vmatpush1.msra.mxu0 0.0
  %2035 = vmatprep.subr.mxu0 0.0
  %2036 = vmatpush1.msra.mxu0 0.0
  %2037 = vmatprep.subr.mxu0 0.0
  %2038 = vmatpush1.msra.mxu0 0.0
  %2039 = vmatprep.mubr.f32.mxu0 0.0
  %2040 = vmatmul.mubr.f32.gmra.mrb[0].mxu0 %v1971
  %v2041 = vpop.f32.mrb[0].mxu0
  %v2042 = vadd.f32 %v1919, %v2041
  %v2043 = vpop.f32.mrb[0].mxu0
  %2044 = vmatprep.mubr.f32.mxu0 0.0
  %2045 = vmatmul.mubr.f32.gmra.mrb[0].mxu0 %v1973
  %v2046 = vpop.f32.mrb[0].mxu0
  %v2047 = vadd.f32 %v1924, %v2046
  %v2048 = vpop.f32.mrb[0].mxu0
  %2049 = vdwg.mxu0
  %v2050 = vadd.f32 %v2042, %v312
  %v2051 = vadd.f32 %v2047, %v312
  %v2052 = vxor.u32 %v2050, 2147483648
  %v2053 = vxor.u32 %v2051, 2147483648
  %v2054 = vmul.f32 %v2052, 1.442695
  %v2055 = vpow.pop %v2054
  %v2056 = vmul.f32 %v2053, 1.442695
  %v2057 = vpow.pop %v2056
  %v2058 = vadd.f32 %v2055, 1.0
  %v2059 = vadd.f32 %v2057, 1.0
  %v2060 = vrcp.pop %v2058
  %v2061 = vmul.f32 1.0, %v2060
  %v2062 = vrcp.pop %v2059
  %v2063 = vmul.f32 1.0, %v2062
  %v2064 = vtanh.pop %v2050
  %v2065 = vtanh.pop %v2051
  %v2066 = vmul.f32 %v2061, %v1794
  %v2067 = vmul.f32 %v2063, %v1795
  %2070 = vrot.lane.b32.xlu0 %v2064, 96
  %v2071 = vpop.permute.xlu0 %2070
  %2072 = vrot.lane.b32.xlu0 %v2065, 96
  %v2073 = vpop.permute.xlu0 %2072
  %v2076 = vmul.f32 %v2061, %v2071
  %v2077 = vmul.f32 %v2063, %v2073
  %2080 = vrot.lane.b32.xlu0 %v2076, 16
  %v2081 = vpop.permute.xlu0 %2080
  %2082 = vrot.lane.b32.xlu0 %v2077, 16
  %v2083 = vpop.permute.xlu0 %2082
  %v2086 = vadd.f32 %v2066, %v2081
  %v2087 = vadd.f32 %v2067, %v2083
  %v2088 = vtanh.pop %v2086
  %v2089 = vtanh.pop %v2087
  %2092 = vrot.lane.b32.xlu0 %v2088, 32
  %v2093 = vpop.permute.xlu0 %2092
  %2094 = vrot.lane.b32.xlu0 %v2089, 32
  %v2095 = vpop.permute.xlu0 %2094
  %v2098 = vmul.f32 %v2061, %v2093
  %v2099 = vmul.f32 %v2063, %v2095
  %2102 = vrot.lane.b32.xlu0 %v1806, 80
  %v2103 = vpop.permute.xlu0 %2102
  %2104 = vrot.lane.b32.xlu0 %v1807, 80
  %v2105 = vpop.permute.xlu0 %2104
  %v2106 = vsel %vm98, %v2103, 0
  %v2108 = vsel %vm98, %v2105, 0
  %2110 = vmatprep.subr.mxu0 0.0
  %2111 = vmatpush1.msra.mxu0 %v63
  %2112 = vmatprep.subr.mxu0 0.0
  %2113 = vmatpush1.msra.mxu0 %v64
  %2114 = vmatprep.subr.mxu0 0.0
  %2115 = vmatpush1.msra.mxu0 0.0
  %2116 = vmatprep.subr.mxu0 0.0
  %2117 = vmatpush1.msra.mxu0 0.0
  %2118 = vmatprep.subr.mxu0 0.0
  %2119 = vmatpush1.msra.mxu0 0.0
  %2120 = vmatprep.subr.mxu0 0.0
  %2121 = vmatpush1.msra.mxu0 0.0
  %2122 = vmatprep.subr.mxu0 0.0
  %2123 = vmatpush1.msra.mxu0 0.0
  %2124 = vmatprep.subr.mxu0 0.0
  %2125 = vmatpush1.msra.mxu0 0.0
  %2126 = vmatprep.subr.mxu0 0.0
  %2127 = vmatpush1.msra.mxu0 0.0
  %2128 = vmatprep.subr.mxu0 0.0
  %2129 = vmatpush1.msra.mxu0 0.0
  %2130 = vmatprep.subr.mxu0 0.0
  %2131 = vmatpush1.msra.mxu0 0.0
  %2132 = vmatprep.subr.mxu0 0.0
  %2133 = vmatpush1.msra.mxu0 0.0
  %2134 = vmatprep.subr.mxu0 0.0
  %2135 = vmatpush1.msra.mxu0 0.0
  %2136 = vmatprep.subr.mxu0 0.0
  %2137 = vmatpush1.msra.mxu0 0.0
  %2138 = vmatprep.subr.mxu0 0.0
  %2139 = vmatpush1.msra.mxu0 0.0
  %2140 = vmatprep.subr.mxu0 0.0
  %2141 = vmatpush1.msra.mxu0 0.0
  %2142 = vmatprep.subr.mxu0 0.0
  %2143 = vmatpush1.msra.mxu0 0.0
  %2144 = vmatprep.subr.mxu0 0.0
  %2145 = vmatpush1.msra.mxu0 0.0
  %2146 = vmatprep.subr.mxu0 0.0
  %2147 = vmatpush1.msra.mxu0 0.0
  %2148 = vmatprep.subr.mxu0 0.0
  %2149 = vmatpush1.msra.mxu0 0.0
  %2150 = vmatprep.subr.mxu0 0.0
  %2151 = vmatpush1.msra.mxu0 0.0
  %2152 = vmatprep.subr.mxu0 0.0
  %2153 = vmatpush1.msra.mxu0 0.0
  %2154 = vmatprep.subr.mxu0 0.0
  %2155 = vmatpush1.msra.mxu0 0.0
  %2156 = vmatprep.subr.mxu0 0.0
  %2157 = vmatpush1.msra.mxu0 0.0
  %2158 = vmatprep.subr.mxu0 0.0
  %2159 = vmatpush1.msra.mxu0 0.0
  %2160 = vmatprep.subr.mxu0 0.0
  %2161 = vmatpush1.msra.mxu0 0.0
  %2162 = vmatprep.subr.mxu0 0.0
  %2163 = vmatpush1.msra.mxu0 0.0
  %2164 = vmatprep.subr.mxu0 0.0
  %2165 = vmatpush1.msra.mxu0 0.0
  %2166 = vmatprep.subr.mxu0 0.0
  %2167 = vmatpush1.msra.mxu0 0.0
  %2168 = vmatprep.subr.mxu0 0.0
  %2169 = vmatpush1.msra.mxu0 0.0
  %2170 = vmatprep.subr.mxu0 0.0
  %2171 = vmatpush1.msra.mxu0 0.0
  %2172 = vmatprep.subr.mxu0 0.0
  %2173 = vmatpush1.msra.mxu0 0.0
  %2174 = vmatprep.mubr.f32.mxu0 0.0
  %2175 = vmatmul.mubr.f32.gmra.mrb[0].mxu0 %v2106
  %v2176 = vpop.f32.mrb[0].mxu0
  %v2177 = vadd.f32 0.0, %v2176
  %v2178 = vpop.f32.mrb[0].mxu0
  %2179 = vmatprep.mubr.f32.mxu0 0.0
  %2180 = vmatmul.mubr.f32.gmra.mrb[0].mxu0 %v2108
  %v2181 = vpop.f32.mrb[0].mxu0
  %v2182 = vadd.f32 0.0, %v2181
  %v2183 = vpop.f32.mrb[0].mxu0
  %2184 = vdwg.mxu0
  %v2201 = vrot.slane %v1827, 7
  %v2202 = vsel %vm194, %v2201, %v1826
  %v2203 = vrot.slane %v1828, 6
  %v2204 = vsel %vm197, %v2203, %v2202
  %v2205 = vrot.slane %v1829, 5
  %v2206 = vsel %vm200, %v2205, %v2204
  %v2207 = vrot.slane %v1830, 4
  %v2208 = vsel %vm203, %v2207, %v2206
  %v2209 = vrot.slane %v1831, 3
  %v2210 = vsel %vm206, %v2209, %v2208
  %v2211 = vrot.slane %v1832, 2
  %v2212 = vsel %vm209, %v2211, %v2210
  %v2213 = vrot.slane %v1833, 1
  %v2214 = vsel %vm212, %v2213, %v2212
  %v2215 = vrot.slane %v1835, 7
  %v2216 = vsel %vm194, %v2215, %v1834
  %v2217 = vrot.slane %v1836, 6
  %v2218 = vsel %vm197, %v2217, %v2216
  %v2219 = vrot.slane %v1837, 5
  %v2220 = vsel %vm200, %v2219, %v2218
  %v2221 = vrot.slane %v1838, 4
  %v2222 = vsel %vm203, %v2221, %v2220
  %v2223 = vrot.slane %v1839, 3
  %v2224 = vsel %vm206, %v2223, %v2222
  %v2225 = vrot.slane %v1840, 2
  %v2226 = vsel %vm209, %v2225, %v2224
  %v2227 = vrot.slane %v1841, 1
  %v2228 = vsel %vm212, %v2227, %v2226
  %v2229 = vsel %vm228, %v2214, 0
  %v2231 = vsel %vm228, %v2228, 0
  %2233 = vmatprep.subr.mxu0 0.0
  %2234 = vmatpush1.msra.mxu0 %v59
  %2235 = vmatprep.subr.mxu0 0.0
  %2236 = vmatpush1.msra.mxu0 %v60
  %2237 = vmatprep.subr.mxu0 0.0
  %2238 = vmatpush1.msra.mxu0 %v61
  %2239 = vmatprep.subr.mxu0 0.0
  %2240 = vmatpush1.msra.mxu0 %v62
  %2241 = vmatprep.subr.mxu0 0.0
  %2242 = vmatpush1.msra.mxu0 0.0
  %2243 = vmatprep.subr.mxu0 0.0
  %2244 = vmatpush1.msra.mxu0 0.0
  %2245 = vmatprep.subr.mxu0 0.0
  %2246 = vmatpush1.msra.mxu0 0.0
  %2247 = vmatprep.subr.mxu0 0.0
  %2248 = vmatpush1.msra.mxu0 0.0
  %2249 = vmatprep.subr.mxu0 0.0
  %2250 = vmatpush1.msra.mxu0 0.0
  %2251 = vmatprep.subr.mxu0 0.0
  %2252 = vmatpush1.msra.mxu0 0.0
  %2253 = vmatprep.subr.mxu0 0.0
  %2254 = vmatpush1.msra.mxu0 0.0
  %2255 = vmatprep.subr.mxu0 0.0
  %2256 = vmatpush1.msra.mxu0 0.0
  %2257 = vmatprep.subr.mxu0 0.0
  %2258 = vmatpush1.msra.mxu0 0.0
  %2259 = vmatprep.subr.mxu0 0.0
  %2260 = vmatpush1.msra.mxu0 0.0
  %2261 = vmatprep.subr.mxu0 0.0
  %2262 = vmatpush1.msra.mxu0 0.0
  %2263 = vmatprep.subr.mxu0 0.0
  %2264 = vmatpush1.msra.mxu0 0.0
  %2265 = vmatprep.subr.mxu0 0.0
  %2266 = vmatpush1.msra.mxu0 0.0
  %2267 = vmatprep.subr.mxu0 0.0
  %2268 = vmatpush1.msra.mxu0 0.0
  %2269 = vmatprep.subr.mxu0 0.0
  %2270 = vmatpush1.msra.mxu0 0.0
  %2271 = vmatprep.subr.mxu0 0.0
  %2272 = vmatpush1.msra.mxu0 0.0
  %2273 = vmatprep.subr.mxu0 0.0
  %2274 = vmatpush1.msra.mxu0 0.0
  %2275 = vmatprep.subr.mxu0 0.0
  %2276 = vmatpush1.msra.mxu0 0.0
  %2277 = vmatprep.subr.mxu0 0.0
  %2278 = vmatpush1.msra.mxu0 0.0
  %2279 = vmatprep.subr.mxu0 0.0
  %2280 = vmatpush1.msra.mxu0 0.0
  %2281 = vmatprep.subr.mxu0 0.0
  %2282 = vmatpush1.msra.mxu0 0.0
  %2283 = vmatprep.subr.mxu0 0.0
  %2284 = vmatpush1.msra.mxu0 0.0
  %2285 = vmatprep.subr.mxu0 0.0
  %2286 = vmatpush1.msra.mxu0 0.0
  %2287 = vmatprep.subr.mxu0 0.0
  %2288 = vmatpush1.msra.mxu0 0.0
  %2289 = vmatprep.subr.mxu0 0.0
  %2290 = vmatpush1.msra.mxu0 0.0
  %2291 = vmatprep.subr.mxu0 0.0
  %2292 = vmatpush1.msra.mxu0 0.0
  %2293 = vmatprep.subr.mxu0 0.0
  %2294 = vmatpush1.msra.mxu0 0.0
  %2295 = vmatprep.subr.mxu0 0.0
  %2296 = vmatpush1.msra.mxu0 0.0
  %2297 = vmatprep.mubr.f32.mxu0 0.0
  %2298 = vmatmul.mubr.f32.gmra.mrb[0].mxu0 %v2229
  %v2299 = vpop.f32.mrb[0].mxu0
  %v2300 = vadd.f32 %v2177, %v2299
  %v2301 = vpop.f32.mrb[0].mxu0
  %2302 = vmatprep.mubr.f32.mxu0 0.0
  %2303 = vmatmul.mubr.f32.gmra.mrb[0].mxu0 %v2231
  %v2304 = vpop.f32.mrb[0].mxu0
  %v2305 = vadd.f32 %v2182, %v2304
  %v2306 = vpop.f32.mrb[0].mxu0
  %2307 = vdwg.mxu0
  %v2308 = vadd.f32 %v2300, %v566
  %v2309 = vadd.f32 %v2305, %v566
  %v2310 = vxor.u32 %v2308, 2147483648
  %v2311 = vxor.u32 %v2309, 2147483648
  %v2312 = vmul.f32 %v2310, 1.442695
  %v2313 = vpow.pop %v2312
  %v2314 = vmul.f32 %v2311, 1.442695
  %v2315 = vpow.pop %v2314
  %v2316 = vadd.f32 %v2313, 1.0
  %v2317 = vadd.f32 %v2315, 1.0
  %v2318 = vrcp.pop %v2316
  %v2319 = vmul.f32 1.0, %v2318
  %v2320 = vrcp.pop %v2317
  %v2321 = vmul.f32 1.0, %v2320
  %v2322 = vtanh.pop %v2308
  %v2323 = vtanh.pop %v2309
  %v2324 = vmul.f32 %v2319, %v1808
  %v2325 = vmul.f32 %v2321, %v1809
  %2328 = vrot.lane.b32.xlu0 %v2322, 96
  %v2329 = vpop.permute.xlu0 %2328
  %2330 = vrot.lane.b32.xlu0 %v2323, 96
  %v2331 = vpop.permute.xlu0 %2330
  %v2334 = vmul.f32 %v2319, %v2329
  %v2335 = vmul.f32 %v2321, %v2331
  %2338 = vrot.lane.b32.xlu0 %v2334, 16
  %v2339 = vpop.permute.xlu0 %2338
  %2340 = vrot.lane.b32.xlu0 %v2335, 16
  %v2341 = vpop.permute.xlu0 %2340
  %v2344 = vadd.f32 %v2324, %v2339
  %v2345 = vadd.f32 %v2325, %v2341
  %v2346 = vtanh.pop %v2344
  %v2347 = vtanh.pop %v2345
  %2350 = vrot.lane.b32.xlu0 %v2346, 32
  %v2351 = vpop.permute.xlu0 %2350
  %2352 = vrot.lane.b32.xlu0 %v2347, 32
  %v2353 = vpop.permute.xlu0 %2352
  %v2356 = vmul.f32 %v2319, %v2351
  %v2357 = vmul.f32 %v2321, %v2353
  %vm2358 = vcmp.gt.s32.totalorder %v50, 3
  %vm2359 = vcmp.gt.s32.totalorder %v51, 3
  %vm2360 = vcmp.gt.s32.totalorder %v50, 4
  %vm2361 = vcmp.gt.s32.totalorder %v51, 4
  %v2362 = vsel %vm2358, 1, 0
  %v2363 = vsel %vm2359, 1, 0
  %2364 = vset.pattern.permute.xlu0 0
  %2365 = vperm.xlu0 %2364, %v2362
  %v2366 = vpop.permute.xlu0 %2365
  %2367 = vset.pattern.permute.xlu0 0
  %2368 = vperm.xlu0 %2367, %v2363
  %v2369 = vpop.permute.xlu0 %2368
  %vm2370 = vcmp.eq.s32.totalorder %v2366, 1
  %vm2371 = vcmp.eq.s32.totalorder %v2369, 1
  %v2372 = vsel %vm2370, %v2098, %v1792
  %v2373 = vsel %vm2371, %v2099, %v1793
  %v2374 = vsel %vm2370, %v2086, %v1794
  %v2375 = vsel %vm2371, %v2087, %v1795
  %v2376 = vsel %vm2360, 1, 0
  %v2377 = vsel %vm2361, 1, 0
  %2378 = vset.pattern.permute.xlu0 0
  %2379 = vperm.xlu0 %2378, %v2376
  %v2380 = vpop.permute.xlu0 %2379
  %2381 = vset.pattern.permute.xlu0 0
  %2382 = vperm.xlu0 %2381, %v2377
  %v2383 = vpop.permute.xlu0 %2382
  %vm2384 = vcmp.eq.s32.totalorder %v2380, 1
  %vm2385 = vcmp.eq.s32.totalorder %v2383, 1
  %v2386 = vsel %vm2384, %v2356, %v1806
  %v2387 = vsel %vm2385, %v2357, %v1807
  %v2388 = vsel %vm2384, %v2344, %v1808
  %v2389 = vsel %vm2385, %v2345, %v1809
  %2392 = vrot.lane.b32.xlu0 %v2372, 80
  %v2393 = vpop.permute.xlu0 %2392
  %2394 = vrot.lane.b32.xlu0 %v2373, 80
  %v2395 = vpop.permute.xlu0 %2394
  %v2396 = vsel %vm98, %v2393, 0
  %v2398 = vsel %vm98, %v2395, 0
  %2400 = vmatprep.subr.mxu0 0.0
  %2401 = vmatpush1.msra.mxu0 %v56
  %2402 = vmatprep.subr.mxu0 0.0
  %2403 = vmatpush1.msra.mxu0 %v57
  %2404 = vmatprep.subr.mxu0 0.0
  %2405 = vmatpush1.msra.mxu0 0.0
  %2406 = vmatprep.subr.mxu0 0.0
  %2407 = vmatpush1.msra.mxu0 0.0
  %2408 = vmatprep.subr.mxu0 0.0
  %2409 = vmatpush1.msra.mxu0 0.0
  %2410 = vmatprep.subr.mxu0 0.0
  %2411 = vmatpush1.msra.mxu0 0.0
  %2412 = vmatprep.subr.mxu0 0.0
  %2413 = vmatpush1.msra.mxu0 0.0
  %2414 = vmatprep.subr.mxu0 0.0
  %2415 = vmatpush1.msra.mxu0 0.0
  %2416 = vmatprep.subr.mxu0 0.0
  %2417 = vmatpush1.msra.mxu0 0.0
  %2418 = vmatprep.subr.mxu0 0.0
  %2419 = vmatpush1.msra.mxu0 0.0
  %2420 = vmatprep.subr.mxu0 0.0
  %2421 = vmatpush1.msra.mxu0 0.0
  %2422 = vmatprep.subr.mxu0 0.0
  %2423 = vmatpush1.msra.mxu0 0.0
  %2424 = vmatprep.subr.mxu0 0.0
  %2425 = vmatpush1.msra.mxu0 0.0
  %2426 = vmatprep.subr.mxu0 0.0
  %2427 = vmatpush1.msra.mxu0 0.0
  %2428 = vmatprep.subr.mxu0 0.0
  %2429 = vmatpush1.msra.mxu0 0.0
  %2430 = vmatprep.subr.mxu0 0.0
  %2431 = vmatpush1.msra.mxu0 0.0
  %2432 = vmatprep.subr.mxu0 0.0
  %2433 = vmatpush1.msra.mxu0 0.0
  %2434 = vmatprep.subr.mxu0 0.0
  %2435 = vmatpush1.msra.mxu0 0.0
  %2436 = vmatprep.subr.mxu0 0.0
  %2437 = vmatpush1.msra.mxu0 0.0
  %2438 = vmatprep.subr.mxu0 0.0
  %2439 = vmatpush1.msra.mxu0 0.0
  %2440 = vmatprep.subr.mxu0 0.0
  %2441 = vmatpush1.msra.mxu0 0.0
  %2442 = vmatprep.subr.mxu0 0.0
  %2443 = vmatpush1.msra.mxu0 0.0
  %2444 = vmatprep.subr.mxu0 0.0
  %2445 = vmatpush1.msra.mxu0 0.0
  %2446 = vmatprep.subr.mxu0 0.0
  %2447 = vmatpush1.msra.mxu0 0.0
  %2448 = vmatprep.subr.mxu0 0.0
  %2449 = vmatpush1.msra.mxu0 0.0
  %2450 = vmatprep.subr.mxu0 0.0
  %2451 = vmatpush1.msra.mxu0 0.0
  %2452 = vmatprep.subr.mxu0 0.0
  %2453 = vmatpush1.msra.mxu0 0.0
  %2454 = vmatprep.subr.mxu0 0.0
  %2455 = vmatpush1.msra.mxu0 0.0
  %2456 = vmatprep.subr.mxu0 0.0
  %2457 = vmatpush1.msra.mxu0 0.0
  %2458 = vmatprep.subr.mxu0 0.0
  %2459 = vmatpush1.msra.mxu0 0.0
  %2460 = vmatprep.subr.mxu0 0.0
  %2461 = vmatpush1.msra.mxu0 0.0
  %2462 = vmatprep.subr.mxu0 0.0
  %2463 = vmatpush1.msra.mxu0 0.0
  %2464 = vmatprep.mubr.f32.mxu0 0.0
  %2465 = vmatmul.mubr.f32.gmra.mrb[0].mxu0 %v2396
  %v2466 = vpop.f32.mrb[0].mxu0
  %v2467 = vadd.f32 0.0, %v2466
  %v2468 = vpop.f32.mrb[0].mxu0
  %2469 = vmatprep.mubr.f32.mxu0 0.0
  %2470 = vmatmul.mubr.f32.gmra.mrb[0].mxu0 %v2398
  %v2471 = vpop.f32.mrb[0].mxu0
  %v2472 = vadd.f32 0.0, %v2471
  %v2473 = vpop.f32.mrb[0].mxu0
  %2474 = vdwg.mxu0
  %2475 = vmatprep.subr.mxu0 0.0
  %2476 = vmatpush1.msra.mxu0 %v52
  %2477 = vmatprep.subr.mxu0 0.0
  %2478 = vmatpush1.msra.mxu0 %v53
  %2479 = vmatprep.subr.mxu0 0.0
  %2480 = vmatpush1.msra.mxu0 %v54
  %2481 = vmatprep.subr.mxu0 0.0
  %2482 = vmatpush1.msra.mxu0 %v55
  %2483 = vmatprep.subr.mxu0 0.0
  %2484 = vmatpush1.msra.mxu0 0.0
  %2485 = vmatprep.subr.mxu0 0.0
  %2486 = vmatpush1.msra.mxu0 0.0
  %2487 = vmatprep.subr.mxu0 0.0
  %2488 = vmatpush1.msra.mxu0 0.0
  %2489 = vmatprep.subr.mxu0 0.0
  %2490 = vmatpush1.msra.mxu0 0.0
  %2491 = vmatprep.subr.mxu0 0.0
  %2492 = vmatpush1.msra.mxu0 0.0
  %2493 = vmatprep.subr.mxu0 0.0
  %2494 = vmatpush1.msra.mxu0 0.0
  %2495 = vmatprep.subr.mxu0 0.0
  %2496 = vmatpush1.msra.mxu0 0.0
  %2497 = vmatprep.subr.mxu0 0.0
  %2498 = vmatpush1.msra.mxu0 0.0
  %2499 = vmatprep.subr.mxu0 0.0
  %2500 = vmatpush1.msra.mxu0 0.0
  %2501 = vmatprep.subr.mxu0 0.0
  %2502 = vmatpush1.msra.mxu0 0.0
  %2503 = vmatprep.subr.mxu0 0.0
  %2504 = vmatpush1.msra.mxu0 0.0
  %2505 = vmatprep.subr.mxu0 0.0
  %2506 = vmatpush1.msra.mxu0 0.0
  %2507 = vmatprep.subr.mxu0 0.0
  %2508 = vmatpush1.msra.mxu0 0.0
  %2509 = vmatprep.subr.mxu0 0.0
  %2510 = vmatpush1.msra.mxu0 0.0
  %2511 = vmatprep.subr.mxu0 0.0
  %2512 = vmatpush1.msra.mxu0 0.0
  %2513 = vmatprep.subr.mxu0 0.0
  %2514 = vmatpush1.msra.mxu0 0.0
  %2515 = vmatprep.subr.mxu0 0.0
  %2516 = vmatpush1.msra.mxu0 0.0
  %2517 = vmatprep.subr.mxu0 0.0
  %2518 = vmatpush1.msra.mxu0 0.0
  %2519 = vmatprep.subr.mxu0 0.0
  %2520 = vmatpush1.msra.mxu0 0.0
  %2521 = vmatprep.subr.mxu0 0.0
  %2522 = vmatpush1.msra.mxu0 0.0
  %2523 = vmatprep.subr.mxu0 0.0
  %2524 = vmatpush1.msra.mxu0 0.0
  %2525 = vmatprep.subr.mxu0 0.0
  %2526 = vmatpush1.msra.mxu0 0.0
  %2527 = vmatprep.subr.mxu0 0.0
  %2528 = vmatpush1.msra.mxu0 0.0
  %2529 = vmatprep.subr.mxu0 0.0
  %2530 = vmatpush1.msra.mxu0 0.0
  %2531 = vmatprep.subr.mxu0 0.0
  %2532 = vmatpush1.msra.mxu0 0.0
  %2533 = vmatprep.subr.mxu0 0.0
  %2534 = vmatpush1.msra.mxu0 0.0
  %2535 = vmatprep.subr.mxu0 0.0
  %2536 = vmatpush1.msra.mxu0 0.0
  %2537 = vmatprep.subr.mxu0 0.0
  %2538 = vmatpush1.msra.mxu0 0.0
  %2539 = vmatprep.mubr.f32.mxu0 0.0
  %2540 = vmatmul.mubr.f32.gmra.mrb[0].mxu0 %v2229
  %v2541 = vpop.f32.mrb[0].mxu0
  %v2542 = vadd.f32 %v2467, %v2541
  %v2543 = vpop.f32.mrb[0].mxu0
  %2544 = vmatprep.mubr.f32.mxu0 0.0
  %2545 = vmatmul.mubr.f32.gmra.mrb[0].mxu0 %v2231
  %v2546 = vpop.f32.mrb[0].mxu0
  %v2547 = vadd.f32 %v2472, %v2546
  %v2548 = vpop.f32.mrb[0].mxu0
  %2549 = vdwg.mxu0
  %v2550 = vadd.f32 %v2542, %v312
  %v2551 = vadd.f32 %v2547, %v312
  %v2552 = vxor.u32 %v2550, 2147483648
  %v2553 = vxor.u32 %v2551, 2147483648
  %v2554 = vmul.f32 %v2552, 1.442695
  %v2555 = vpow.pop %v2554
  %v2556 = vmul.f32 %v2553, 1.442695
  %v2557 = vpow.pop %v2556
  %v2558 = vadd.f32 %v2555, 1.0
  %v2559 = vadd.f32 %v2557, 1.0
  %v2560 = vrcp.pop %v2558
  %v2561 = vmul.f32 1.0, %v2560
  %v2562 = vrcp.pop %v2559
  %v2563 = vmul.f32 1.0, %v2562
  %v2564 = vtanh.pop %v2550
  %v2565 = vtanh.pop %v2551
  %v2566 = vmul.f32 %v2561, %v2374
  %v2567 = vmul.f32 %v2563, %v2375
  %2570 = vrot.lane.b32.xlu0 %v2564, 96
  %v2571 = vpop.permute.xlu0 %2570
  %2572 = vrot.lane.b32.xlu0 %v2565, 96
  %v2573 = vpop.permute.xlu0 %2572
  %v2576 = vmul.f32 %v2561, %v2571
  %v2577 = vmul.f32 %v2563, %v2573
  %2580 = vrot.lane.b32.xlu0 %v2576, 16
  %v2581 = vpop.permute.xlu0 %2580
  %2582 = vrot.lane.b32.xlu0 %v2577, 16
  %v2583 = vpop.permute.xlu0 %2582
  %v2586 = vadd.f32 %v2566, %v2581
  %v2587 = vadd.f32 %v2567, %v2583
  %v2588 = vtanh.pop %v2586
  %v2589 = vtanh.pop %v2587
  %2592 = vrot.lane.b32.xlu0 %v2588, 32
  %v2593 = vpop.permute.xlu0 %2592
  %2594 = vrot.lane.b32.xlu0 %v2589, 32
  %v2595 = vpop.permute.xlu0 %2594
  %v2598 = vmul.f32 %v2561, %v2593
  %v2599 = vmul.f32 %v2563, %v2595
  %2602 = vrot.lane.b32.xlu0 %v2386, 80
  %v2603 = vpop.permute.xlu0 %2602
  %2604 = vrot.lane.b32.xlu0 %v2387, 80
  %v2605 = vpop.permute.xlu0 %2604
  %v2606 = vsel %vm98, %v2603, 0
  %v2608 = vsel %vm98, %v2605, 0
  %2610 = vmatprep.subr.mxu0 0.0
  %2611 = vmatpush1.msra.mxu0 %v63
  %2612 = vmatprep.subr.mxu0 0.0
  %2613 = vmatpush1.msra.mxu0 %v64
  %2614 = vmatprep.subr.mxu0 0.0
  %2615 = vmatpush1.msra.mxu0 0.0
  %2616 = vmatprep.subr.mxu0 0.0
  %2617 = vmatpush1.msra.mxu0 0.0
  %2618 = vmatprep.subr.mxu0 0.0
  %2619 = vmatpush1.msra.mxu0 0.0
  %2620 = vmatprep.subr.mxu0 0.0
  %2621 = vmatpush1.msra.mxu0 0.0
  %2622 = vmatprep.subr.mxu0 0.0
  %2623 = vmatpush1.msra.mxu0 0.0
  %2624 = vmatprep.subr.mxu0 0.0
  %2625 = vmatpush1.msra.mxu0 0.0
  %2626 = vmatprep.subr.mxu0 0.0
  %2627 = vmatpush1.msra.mxu0 0.0
  %2628 = vmatprep.subr.mxu0 0.0
  %2629 = vmatpush1.msra.mxu0 0.0
  %2630 = vmatprep.subr.mxu0 0.0
  %2631 = vmatpush1.msra.mxu0 0.0
  %2632 = vmatprep.subr.mxu0 0.0
  %2633 = vmatpush1.msra.mxu0 0.0
  %2634 = vmatprep.subr.mxu0 0.0
  %2635 = vmatpush1.msra.mxu0 0.0
  %2636 = vmatprep.subr.mxu0 0.0
  %2637 = vmatpush1.msra.mxu0 0.0
  %2638 = vmatprep.subr.mxu0 0.0
  %2639 = vmatpush1.msra.mxu0 0.0
  %2640 = vmatprep.subr.mxu0 0.0
  %2641 = vmatpush1.msra.mxu0 0.0
  %2642 = vmatprep.subr.mxu0 0.0
  %2643 = vmatpush1.msra.mxu0 0.0
  %2644 = vmatprep.subr.mxu0 0.0
  %2645 = vmatpush1.msra.mxu0 0.0
  %2646 = vmatprep.subr.mxu0 0.0
  %2647 = vmatpush1.msra.mxu0 0.0
  %2648 = vmatprep.subr.mxu0 0.0
  %2649 = vmatpush1.msra.mxu0 0.0
  %2650 = vmatprep.subr.mxu0 0.0
  %2651 = vmatpush1.msra.mxu0 0.0
  %2652 = vmatprep.subr.mxu0 0.0
  %2653 = vmatpush1.msra.mxu0 0.0
  %2654 = vmatprep.subr.mxu0 0.0
  %2655 = vmatpush1.msra.mxu0 0.0
  %2656 = vmatprep.subr.mxu0 0.0
  %2657 = vmatpush1.msra.mxu0 0.0
  %2658 = vmatprep.subr.mxu0 0.0
  %2659 = vmatpush1.msra.mxu0 0.0
  %2660 = vmatprep.subr.mxu0 0.0
  %2661 = vmatpush1.msra.mxu0 0.0
  %2662 = vmatprep.subr.mxu0 0.0
  %2663 = vmatpush1.msra.mxu0 0.0
  %2664 = vmatprep.subr.mxu0 0.0
  %2665 = vmatpush1.msra.mxu0 0.0
  %2666 = vmatprep.subr.mxu0 0.0
  %2667 = vmatpush1.msra.mxu0 0.0
  %2668 = vmatprep.subr.mxu0 0.0
  %2669 = vmatpush1.msra.mxu0 0.0
  %2670 = vmatprep.subr.mxu0 0.0
  %2671 = vmatpush1.msra.mxu0 0.0
  %2672 = vmatprep.subr.mxu0 0.0
  %2673 = vmatpush1.msra.mxu0 0.0
  %2674 = vmatprep.mubr.f32.mxu0 0.0
  %2675 = vmatmul.mubr.f32.gmra.mrb[0].mxu0 %v2606
  %v2676 = vpop.f32.mrb[0].mxu0
  %v2677 = vadd.f32 0.0, %v2676
  %v2678 = vpop.f32.mrb[0].mxu0
  %2679 = vmatprep.mubr.f32.mxu0 0.0
  %2680 = vmatmul.mubr.f32.gmra.mrb[0].mxu0 %v2608
  %v2681 = vpop.f32.mrb[0].mxu0
  %v2682 = vadd.f32 0.0, %v2681
  %v2683 = vpop.f32.mrb[0].mxu0
  %2684 = vdwg.mxu0
  %2685 = vmatprep.subr.mxu0 0.0
  %2686 = vmatpush1.msra.mxu0 %v59
  %2687 = vmatprep.subr.mxu0 0.0
  %2688 = vmatpush1.msra.mxu0 %v60
  %2689 = vmatprep.subr.mxu0 0.0
  %2690 = vmatpush1.msra.mxu0 %v61
  %2691 = vmatprep.subr.mxu0 0.0
  %2692 = vmatpush1.msra.mxu0 %v62
  %2693 = vmatprep.subr.mxu0 0.0
  %2694 = vmatpush1.msra.mxu0 0.0
  %2695 = vmatprep.subr.mxu0 0.0
  %2696 = vmatpush1.msra.mxu0 0.0
  %2697 = vmatprep.subr.mxu0 0.0
  %2698 = vmatpush1.msra.mxu0 0.0
  %2699 = vmatprep.subr.mxu0 0.0
  %2700 = vmatpush1.msra.mxu0 0.0
  %2701 = vmatprep.subr.mxu0 0.0
  %2702 = vmatpush1.msra.mxu0 0.0
  %2703 = vmatprep.subr.mxu0 0.0
  %2704 = vmatpush1.msra.mxu0 0.0
  %2705 = vmatprep.subr.mxu0 0.0
  %2706 = vmatpush1.msra.mxu0 0.0
  %2707 = vmatprep.subr.mxu0 0.0
  %2708 = vmatpush1.msra.mxu0 0.0
  %2709 = vmatprep.subr.mxu0 0.0
  %2710 = vmatpush1.msra.mxu0 0.0
  %2711 = vmatprep.subr.mxu0 0.0
  %2712 = vmatpush1.msra.mxu0 0.0
  %2713 = vmatprep.subr.mxu0 0.0
  %2714 = vmatpush1.msra.mxu0 0.0
  %2715 = vmatprep.subr.mxu0 0.0
  %2716 = vmatpush1.msra.mxu0 0.0
  %2717 = vmatprep.subr.mxu0 0.0
  %2718 = vmatpush1.msra.mxu0 0.0
  %2719 = vmatprep.subr.mxu0 0.0
  %2720 = vmatpush1.msra.mxu0 0.0
  %2721 = vmatprep.subr.mxu0 0.0
  %2722 = vmatpush1.msra.mxu0 0.0
  %2723 = vmatprep.subr.mxu0 0.0
  %2724 = vmatpush1.msra.mxu0 0.0
  %2725 = vmatprep.subr.mxu0 0.0
  %2726 = vmatpush1.msra.mxu0 0.0
  %2727 = vmatprep.subr.mxu0 0.0
  %2728 = vmatpush1.msra.mxu0 0.0
  %2729 = vmatprep.subr.mxu0 0.0
  %2730 = vmatpush1.msra.mxu0 0.0
  %2731 = vmatprep.subr.mxu0 0.0
  %2732 = vmatpush1.msra.mxu0 0.0
  %2733 = vmatprep.subr.mxu0 0.0
  %2734 = vmatpush1.msra.mxu0 0.0
  %2735 = vmatprep.subr.mxu0 0.0
  %2736 = vmatpush1.msra.mxu0 0.0
  %2737 = vmatprep.subr.mxu0 0.0
  %2738 = vmatpush1.msra.mxu0 0.0
  %2739 = vmatprep.subr.mxu0 0.0
  %2740 = vmatpush1.msra.mxu0 0.0
  %2741 = vmatprep.subr.mxu0 0.0
  %2742 = vmatpush1.msra.mxu0 0.0
  %2743 = vmatprep.subr.mxu0 0.0
  %2744 = vmatpush1.msra.mxu0 0.0
  %2745 = vmatprep.subr.mxu0 0.0
  %2746 = vmatpush1.msra.mxu0 0.0
  %2747 = vmatprep.subr.mxu0 0.0
  %2748 = vmatpush1.msra.mxu0 0.0
  %2749 = vmatprep.mubr.f32.mxu0 0.0
  %2750 = vmatmul.mubr.f32.gmra.mrb[0].mxu0 %v1971
  %v2751 = vpop.f32.mrb[0].mxu0
  %v2752 = vadd.f32 %v2677, %v2751
  %v2753 = vpop.f32.mrb[0].mxu0
  %2754 = vmatprep.mubr.f32.mxu0 0.0
  %2755 = vmatmul.mubr.f32.gmra.mrb[0].mxu0 %v1973
  %v2756 = vpop.f32.mrb[0].mxu0
  %v2757 = vadd.f32 %v2682, %v2756
  %v2758 = vpop.f32.mrb[0].mxu0
  %2759 = vdwg.mxu0
  %v2760 = vadd.f32 %v2752, %v566
  %v2761 = vadd.f32 %v2757, %v566
  %v2762 = vxor.u32 %v2760, 2147483648
  %v2763 = vxor.u32 %v2761, 2147483648
  %v2764 = vmul.f32 %v2762, 1.442695
  %v2765 = vpow.pop %v2764
  %v2766 = vmul.f32 %v2763, 1.442695
  %v2767 = vpow.pop %v2766
  %v2768 = vadd.f32 %v2765, 1.0
  %v2769 = vadd.f32 %v2767, 1.0
  %v2770 = vrcp.pop %v2768
  %v2771 = vmul.f32 1.0, %v2770
  %v2772 = vrcp.pop %v2769
  %v2773 = vmul.f32 1.0, %v2772
  %v2774 = vtanh.pop %v2760
  %v2775 = vtanh.pop %v2761
  %v2776 = vmul.f32 %v2771, %v2388
  %v2777 = vmul.f32 %v2773, %v2389
  %2780 = vrot.lane.b32.xlu0 %v2774, 96
  %v2781 = vpop.permute.xlu0 %2780
  %2782 = vrot.lane.b32.xlu0 %v2775, 96
  %v2783 = vpop.permute.xlu0 %2782
  %v2786 = vmul.f32 %v2771, %v2781
  %v2787 = vmul.f32 %v2773, %v2783
  %2790 = vrot.lane.b32.xlu0 %v2786, 16
  %v2791 = vpop.permute.xlu0 %2790
  %2792 = vrot.lane.b32.xlu0 %v2787, 16
  %v2793 = vpop.permute.xlu0 %2792
  %v2796 = vadd.f32 %v2776, %v2791
  %v2797 = vadd.f32 %v2777, %v2793
  %v2798 = vtanh.pop %v2796
  %v2799 = vtanh.pop %v2797
  %2802 = vrot.lane.b32.xlu0 %v2798, 32
  %v2803 = vpop.permute.xlu0 %2802
  %2804 = vrot.lane.b32.xlu0 %v2799, 32
  %v2805 = vpop.permute.xlu0 %2804
  %v2808 = vmul.f32 %v2771, %v2803
  %v2809 = vmul.f32 %v2773, %v2805
  %v2810 = vsel %vm2384, %v2598, %v2372
  %v2811 = vsel %vm2385, %v2599, %v2373
  %v2812 = vsel %vm2384, %v2586, %v2374
  %v2813 = vsel %vm2385, %v2587, %v2375
  %v2814 = vsel %vm2370, %v2808, %v2386
  %v2815 = vsel %vm2371, %v2809, %v2387
  %v2816 = vsel %vm2370, %v2796, %v2388
  %v2817 = vsel %vm2371, %v2797, %v2389
  %2820 = vrot.lane.b32.xlu0 %v2810, 80
  %v2821 = vpop.permute.xlu0 %2820
  %2822 = vrot.lane.b32.xlu0 %v2811, 80
  %v2823 = vpop.permute.xlu0 %2822
  %v2824 = vsel %vm98, %v2821, 0
  %v2826 = vsel %vm98, %v2823, 0
  %2828 = vmatprep.subr.mxu0 0.0
  %2829 = vmatpush1.msra.mxu0 %v56
  %2830 = vmatprep.subr.mxu0 0.0
  %2831 = vmatpush1.msra.mxu0 %v57
  %2832 = vmatprep.subr.mxu0 0.0
  %2833 = vmatpush1.msra.mxu0 0.0
  %2834 = vmatprep.subr.mxu0 0.0
  %2835 = vmatpush1.msra.mxu0 0.0
  %2836 = vmatprep.subr.mxu0 0.0
  %2837 = vmatpush1.msra.mxu0 0.0
  %2838 = vmatprep.subr.mxu0 0.0
  %2839 = vmatpush1.msra.mxu0 0.0
  %2840 = vmatprep.subr.mxu0 0.0
  %2841 = vmatpush1.msra.mxu0 0.0
  %2842 = vmatprep.subr.mxu0 0.0
  %2843 = vmatpush1.msra.mxu0 0.0
  %2844 = vmatprep.subr.mxu0 0.0
  %2845 = vmatpush1.msra.mxu0 0.0
  %2846 = vmatprep.subr.mxu0 0.0
  %2847 = vmatpush1.msra.mxu0 0.0
  %2848 = vmatprep.subr.mxu0 0.0
  %2849 = vmatpush1.msra.mxu0 0.0
  %2850 = vmatprep.subr.mxu0 0.0
  %2851 = vmatpush1.msra.mxu0 0.0
  %2852 = vmatprep.subr.mxu0 0.0
  %2853 = vmatpush1.msra.mxu0 0.0
  %2854 = vmatprep.subr.mxu0 0.0
  %2855 = vmatpush1.msra.mxu0 0.0
  %2856 = vmatprep.subr.mxu0 0.0
  %2857 = vmatpush1.msra.mxu0 0.0
  %2858 = vmatprep.subr.mxu0 0.0
  %2859 = vmatpush1.msra.mxu0 0.0
  %2860 = vmatprep.subr.mxu0 0.0
  %2861 = vmatpush1.msra.mxu0 0.0
  %2862 = vmatprep.subr.mxu0 0.0
  %2863 = vmatpush1.msra.mxu0 0.0
  %2864 = vmatprep.subr.mxu0 0.0
  %2865 = vmatpush1.msra.mxu0 0.0
  %2866 = vmatprep.subr.mxu0 0.0
  %2867 = vmatpush1.msra.mxu0 0.0
  %2868 = vmatprep.subr.mxu0 0.0
  %2869 = vmatpush1.msra.mxu0 0.0
  %2870 = vmatprep.subr.mxu0 0.0
  %2871 = vmatpush1.msra.mxu0 0.0
  %2872 = vmatprep.subr.mxu0 0.0
  %2873 = vmatpush1.msra.mxu0 0.0
  %2874 = vmatprep.subr.mxu0 0.0
  %2875 = vmatpush1.msra.mxu0 0.0
  %2876 = vmatprep.subr.mxu0 0.0
  %2877 = vmatpush1.msra.mxu0 0.0
  %2878 = vmatprep.subr.mxu0 0.0
  %2879 = vmatpush1.msra.mxu0 0.0
  %2880 = vmatprep.subr.mxu0 0.0
  %2881 = vmatpush1.msra.mxu0 0.0
  %2882 = vmatprep.subr.mxu0 0.0
  %2883 = vmatpush1.msra.mxu0 0.0
  %2884 = vmatprep.subr.mxu0 0.0
  %2885 = vmatpush1.msra.mxu0 0.0
  %2886 = vmatprep.subr.mxu0 0.0
  %2887 = vmatpush1.msra.mxu0 0.0
  %2888 = vmatprep.subr.mxu0 0.0
  %2889 = vmatpush1.msra.mxu0 0.0
  %2890 = vmatprep.subr.mxu0 0.0
  %2891 = vmatpush1.msra.mxu0 0.0
  %2892 = vmatprep.mubr.f32.mxu0 0.0
  %2893 = vmatmul.mubr.f32.gmra.mrb[0].mxu0 %v2824
  %v2894 = vpop.f32.mrb[0].mxu0
  %v2895 = vadd.f32 0.0, %v2894
  %v2896 = vpop.f32.mrb[0].mxu0
  %2897 = vmatprep.mubr.f32.mxu0 0.0
  %2898 = vmatmul.mubr.f32.gmra.mrb[0].mxu0 %v2826
  %v2899 = vpop.f32.mrb[0].mxu0
  %v2900 = vadd.f32 0.0, %v2899
  %v2901 = vpop.f32.mrb[0].mxu0
  %2902 = vdwg.mxu0
  %2903 = vmatprep.subr.mxu0 0.0
  %2904 = vmatpush1.msra.mxu0 %v52
  %2905 = vmatprep.subr.mxu0 0.0
  %2906 = vmatpush1.msra.mxu0 %v53
  %2907 = vmatprep.subr.mxu0 0.0
  %2908 = vmatpush1.msra.mxu0 %v54
  %2909 = vmatprep.subr.mxu0 0.0
  %2910 = vmatpush1.msra.mxu0 %v55
  %2911 = vmatprep.subr.mxu0 0.0
  %2912 = vmatpush1.msra.mxu0 0.0
  %2913 = vmatprep.subr.mxu0 0.0
  %2914 = vmatpush1.msra.mxu0 0.0
  %2915 = vmatprep.subr.mxu0 0.0
  %2916 = vmatpush1.msra.mxu0 0.0
  %2917 = vmatprep.subr.mxu0 0.0
  %2918 = vmatpush1.msra.mxu0 0.0
  %2919 = vmatprep.subr.mxu0 0.0
  %2920 = vmatpush1.msra.mxu0 0.0
  %2921 = vmatprep.subr.mxu0 0.0
  %2922 = vmatpush1.msra.mxu0 0.0
  %2923 = vmatprep.subr.mxu0 0.0
  %2924 = vmatpush1.msra.mxu0 0.0
  %2925 = vmatprep.subr.mxu0 0.0
  %2926 = vmatpush1.msra.mxu0 0.0
  %2927 = vmatprep.subr.mxu0 0.0
  %2928 = vmatpush1.msra.mxu0 0.0
  %2929 = vmatprep.subr.mxu0 0.0
  %2930 = vmatpush1.msra.mxu0 0.0
  %2931 = vmatprep.subr.mxu0 0.0
  %2932 = vmatpush1.msra.mxu0 0.0
  %2933 = vmatprep.subr.mxu0 0.0
  %2934 = vmatpush1.msra.mxu0 0.0
  %2935 = vmatprep.subr.mxu0 0.0
  %2936 = vmatpush1.msra.mxu0 0.0
  %2937 = vmatprep.subr.mxu0 0.0
  %2938 = vmatpush1.msra.mxu0 0.0
  %2939 = vmatprep.subr.mxu0 0.0
  %2940 = vmatpush1.msra.mxu0 0.0
  %2941 = vmatprep.subr.mxu0 0.0
  %2942 = vmatpush1.msra.mxu0 0.0
  %2943 = vmatprep.subr.mxu0 0.0
  %2944 = vmatpush1.msra.mxu0 0.0
  %2945 = vmatprep.subr.mxu0 0.0
  %2946 = vmatpush1.msra.mxu0 0.0
  %2947 = vmatprep.subr.mxu0 0.0
  %2948 = vmatpush1.msra.mxu0 0.0
  %2949 = vmatprep.subr.mxu0 0.0
  %2950 = vmatpush1.msra.mxu0 0.0
  %2951 = vmatprep.subr.mxu0 0.0
  %2952 = vmatpush1.msra.mxu0 0.0
  %2953 = vmatprep.subr.mxu0 0.0
  %2954 = vmatpush1.msra.mxu0 0.0
  %2955 = vmatprep.subr.mxu0 0.0
  %2956 = vmatpush1.msra.mxu0 0.0
  %2957 = vmatprep.subr.mxu0 0.0
  %2958 = vmatpush1.msra.mxu0 0.0
  %2959 = vmatprep.subr.mxu0 0.0
  %2960 = vmatpush1.msra.mxu0 0.0
  %2961 = vmatprep.subr.mxu0 0.0
  %2962 = vmatpush1.msra.mxu0 0.0
  %2963 = vmatprep.subr.mxu0 0.0
  %2964 = vmatpush1.msra.mxu0 0.0
  %2965 = vmatprep.subr.mxu0 0.0
  %2966 = vmatpush1.msra.mxu0 0.0
  %2967 = vmatprep.mubr.f32.mxu0 0.0
  %2968 = vmatmul.mubr.f32.gmra.mrb[0].mxu0 %v1649
  %v2969 = vpop.f32.mrb[0].mxu0
  %v2970 = vadd.f32 %v2895, %v2969
  %v2971 = vpop.f32.mrb[0].mxu0
  %2972 = vmatprep.mubr.f32.mxu0 0.0
  %2973 = vmatmul.mubr.f32.gmra.mrb[0].mxu0 %v1651
  %v2974 = vpop.f32.mrb[0].mxu0
  %v2975 = vadd.f32 %v2900, %v2974
  %v2976 = vpop.f32.mrb[0].mxu0
  %2977 = vdwg.mxu0
  %v2978 = vadd.f32 %v2970, %v312
  %v2979 = vadd.f32 %v2975, %v312
  %v2980 = vxor.u32 %v2978, 2147483648
  %v2981 = vxor.u32 %v2979, 2147483648
  %v2982 = vmul.f32 %v2980, 1.442695
  %v2983 = vpow.pop %v2982
  %v2984 = vmul.f32 %v2981, 1.442695
  %v2985 = vpow.pop %v2984
  %v2986 = vadd.f32 %v2983, 1.0
  %v2987 = vadd.f32 %v2985, 1.0
  %v2988 = vrcp.pop %v2986
  %v2989 = vmul.f32 1.0, %v2988
  %v2990 = vrcp.pop %v2987
  %v2991 = vmul.f32 1.0, %v2990
  %v2992 = vtanh.pop %v2978
  %v2993 = vtanh.pop %v2979
  %v2994 = vmul.f32 %v2989, %v2812
  %v2995 = vmul.f32 %v2991, %v2813
  %2998 = vrot.lane.b32.xlu0 %v2992, 96
  %v2999 = vpop.permute.xlu0 %2998
  %3000 = vrot.lane.b32.xlu0 %v2993, 96
  %v3001 = vpop.permute.xlu0 %3000
  %v3004 = vmul.f32 %v2989, %v2999
  %v3005 = vmul.f32 %v2991, %v3001
  %3008 = vrot.lane.b32.xlu0 %v3004, 16
  %v3009 = vpop.permute.xlu0 %3008
  %3010 = vrot.lane.b32.xlu0 %v3005, 16
  %v3011 = vpop.permute.xlu0 %3010
  %v3014 = vadd.f32 %v2994, %v3009
  %v3015 = vadd.f32 %v2995, %v3011
  %v3016 = vtanh.pop %v3014
  %v3017 = vtanh.pop %v3015
  %3020 = vrot.lane.b32.xlu0 %v3016, 32
  %v3021 = vpop.permute.xlu0 %3020
  %3022 = vrot.lane.b32.xlu0 %v3017, 32
  %v3023 = vpop.permute.xlu0 %3022
  %v3026 = vmul.f32 %v2989, %v3021
  %v3027 = vmul.f32 %v2991, %v3023
  %3030 = vrot.lane.b32.xlu0 %v2814, 80
  %v3031 = vpop.permute.xlu0 %3030
  %3032 = vrot.lane.b32.xlu0 %v2815, 80
  %v3033 = vpop.permute.xlu0 %3032
  %v3034 = vsel %vm98, %v3031, 0
  %v3036 = vsel %vm98, %v3033, 0
  %3038 = vmatprep.subr.mxu0 0.0
  %3039 = vmatpush1.msra.mxu0 %v63
  %3040 = vmatprep.subr.mxu0 0.0
  %3041 = vmatpush1.msra.mxu0 %v64
  %3042 = vmatprep.subr.mxu0 0.0
  %3043 = vmatpush1.msra.mxu0 0.0
  %3044 = vmatprep.subr.mxu0 0.0
  %3045 = vmatpush1.msra.mxu0 0.0
  %3046 = vmatprep.subr.mxu0 0.0
  %3047 = vmatpush1.msra.mxu0 0.0
  %3048 = vmatprep.subr.mxu0 0.0
  %3049 = vmatpush1.msra.mxu0 0.0
  %3050 = vmatprep.subr.mxu0 0.0
  %3051 = vmatpush1.msra.mxu0 0.0
  %3052 = vmatprep.subr.mxu0 0.0
  %3053 = vmatpush1.msra.mxu0 0.0
  %3054 = vmatprep.subr.mxu0 0.0
  %3055 = vmatpush1.msra.mxu0 0.0
  %3056 = vmatprep.subr.mxu0 0.0
  %3057 = vmatpush1.msra.mxu0 0.0
  %3058 = vmatprep.subr.mxu0 0.0
  %3059 = vmatpush1.msra.mxu0 0.0
  %3060 = vmatprep.subr.mxu0 0.0
  %3061 = vmatpush1.msra.mxu0 0.0
  %3062 = vmatprep.subr.mxu0 0.0
  %3063 = vmatpush1.msra.mxu0 0.0
  %3064 = vmatprep.subr.mxu0 0.0
  %3065 = vmatpush1.msra.mxu0 0.0
  %3066 = vmatprep.subr.mxu0 0.0
  %3067 = vmatpush1.msra.mxu0 0.0
  %3068 = vmatprep.subr.mxu0 0.0
  %3069 = vmatpush1.msra.mxu0 0.0
  %3070 = vmatprep.subr.mxu0 0.0
  %3071 = vmatpush1.msra.mxu0 0.0
  %3072 = vmatprep.subr.mxu0 0.0
  %3073 = vmatpush1.msra.mxu0 0.0
  %3074 = vmatprep.subr.mxu0 0.0
  %3075 = vmatpush1.msra.mxu0 0.0
  %3076 = vmatprep.subr.mxu0 0.0
  %3077 = vmatpush1.msra.mxu0 0.0
  %3078 = vmatprep.subr.mxu0 0.0
  %3079 = vmatpush1.msra.mxu0 0.0
  %3080 = vmatprep.subr.mxu0 0.0
  %3081 = vmatpush1.msra.mxu0 0.0
  %3082 = vmatprep.subr.mxu0 0.0
  %3083 = vmatpush1.msra.mxu0 0.0
  %3084 = vmatprep.subr.mxu0 0.0
  %3085 = vmatpush1.msra.mxu0 0.0
  %3086 = vmatprep.subr.mxu0 0.0
  %3087 = vmatpush1.msra.mxu0 0.0
  %3088 = vmatprep.subr.mxu0 0.0
  %3089 = vmatpush1.msra.mxu0 0.0
  %3090 = vmatprep.subr.mxu0 0.0
  %3091 = vmatpush1.msra.mxu0 0.0
  %3092 = vmatprep.subr.mxu0 0.0
  %3093 = vmatpush1.msra.mxu0 0.0
  %3094 = vmatprep.subr.mxu0 0.0
  %3095 = vmatpush1.msra.mxu0 0.0
  %3096 = vmatprep.subr.mxu0 0.0
  %3097 = vmatpush1.msra.mxu0 0.0
  %3098 = vmatprep.subr.mxu0 0.0
  %3099 = vmatpush1.msra.mxu0 0.0
  %3100 = vmatprep.subr.mxu0 0.0
  %3101 = vmatpush1.msra.mxu0 0.0
  %3102 = vmatprep.mubr.f32.mxu0 0.0
  %3103 = vmatmul.mubr.f32.gmra.mrb[0].mxu0 %v3034
  %v3104 = vpop.f32.mrb[0].mxu0
  %v3105 = vadd.f32 0.0, %v3104
  %v3106 = vpop.f32.mrb[0].mxu0
  %3107 = vmatprep.mubr.f32.mxu0 0.0
  %3108 = vmatmul.mubr.f32.gmra.mrb[0].mxu0 %v3036
  %v3109 = vpop.f32.mrb[0].mxu0
  %v3110 = vadd.f32 0.0, %v3109
  %v3111 = vpop.f32.mrb[0].mxu0
  %3112 = vdwg.mxu0
  %3113 = vmatprep.subr.mxu0 0.0
  %3114 = vmatpush1.msra.mxu0 %v59
  %3115 = vmatprep.subr.mxu0 0.0
  %3116 = vmatpush1.msra.mxu0 %v60
  %3117 = vmatprep.subr.mxu0 0.0
  %3118 = vmatpush1.msra.mxu0 %v61
  %3119 = vmatprep.subr.mxu0 0.0
  %3120 = vmatpush1.msra.mxu0 %v62
  %3121 = vmatprep.subr.mxu0 0.0
  %3122 = vmatpush1.msra.mxu0 0.0
  %3123 = vmatprep.subr.mxu0 0.0
  %3124 = vmatpush1.msra.mxu0 0.0
  %3125 = vmatprep.subr.mxu0 0.0
  %3126 = vmatpush1.msra.mxu0 0.0
  %3127 = vmatprep.subr.mxu0 0.0
  %3128 = vmatpush1.msra.mxu0 0.0
  %3129 = vmatprep.subr.mxu0 0.0
  %3130 = vmatpush1.msra.mxu0 0.0
  %3131 = vmatprep.subr.mxu0 0.0
  %3132 = vmatpush1.msra.mxu0 0.0
  %3133 = vmatprep.subr.mxu0 0.0
  %3134 = vmatpush1.msra.mxu0 0.0
  %3135 = vmatprep.subr.mxu0 0.0
  %3136 = vmatpush1.msra.mxu0 0.0
  %3137 = vmatprep.subr.mxu0 0.0
  %3138 = vmatpush1.msra.mxu0 0.0
  %3139 = vmatprep.subr.mxu0 0.0
  %3140 = vmatpush1.msra.mxu0 0.0
  %3141 = vmatprep.subr.mxu0 0.0
  %3142 = vmatpush1.msra.mxu0 0.0
  %3143 = vmatprep.subr.mxu0 0.0
  %3144 = vmatpush1.msra.mxu0 0.0
  %3145 = vmatprep.subr.mxu0 0.0
  %3146 = vmatpush1.msra.mxu0 0.0
  %3147 = vmatprep.subr.mxu0 0.0
  %3148 = vmatpush1.msra.mxu0 0.0
  %3149 = vmatprep.subr.mxu0 0.0
  %3150 = vmatpush1.msra.mxu0 0.0
  %3151 = vmatprep.subr.mxu0 0.0
  %3152 = vmatpush1.msra.mxu0 0.0
  %3153 = vmatprep.subr.mxu0 0.0
  %3154 = vmatpush1.msra.mxu0 0.0
  %3155 = vmatprep.subr.mxu0 0.0
  %3156 = vmatpush1.msra.mxu0 0.0
  %3157 = vmatprep.subr.mxu0 0.0
  %3158 = vmatpush1.msra.mxu0 0.0
  %3159 = vmatprep.subr.mxu0 0.0
  %3160 = vmatpush1.msra.mxu0 0.0
  %3161 = vmatprep.subr.mxu0 0.0
  %3162 = vmatpush1.msra.mxu0 0.0
  %3163 = vmatprep.subr.mxu0 0.0
  %3164 = vmatpush1.msra.mxu0 0.0
  %3165 = vmatprep.subr.mxu0 0.0
  %3166 = vmatpush1.msra.mxu0 0.0
  %3167 = vmatprep.subr.mxu0 0.0
  %3168 = vmatpush1.msra.mxu0 0.0
  %3169 = vmatprep.subr.mxu0 0.0
  %3170 = vmatpush1.msra.mxu0 0.0
  %3171 = vmatprep.subr.mxu0 0.0
  %3172 = vmatpush1.msra.mxu0 0.0
  %3173 = vmatprep.subr.mxu0 0.0
  %3174 = vmatpush1.msra.mxu0 0.0
  %3175 = vmatprep.subr.mxu0 0.0
  %3176 = vmatpush1.msra.mxu0 0.0
  %3177 = vmatprep.mubr.f32.mxu0 0.0
  %3178 = vmatmul.mubr.f32.gmra.mrb[0].mxu0 %v1391
  %v3179 = vpop.f32.mrb[0].mxu0
  %v3180 = vadd.f32 %v3105, %v3179
  %v3181 = vpop.f32.mrb[0].mxu0
  %3182 = vmatprep.mubr.f32.mxu0 0.0
  %3183 = vmatmul.mubr.f32.gmra.mrb[0].mxu0 %v1393
  %v3184 = vpop.f32.mrb[0].mxu0
  %v3185 = vadd.f32 %v3110, %v3184
  %v3186 = vpop.f32.mrb[0].mxu0
  %3187 = vdwg.mxu0
  %v3188 = vadd.f32 %v3180, %v566
  %v3189 = vadd.f32 %v3185, %v566
  %v3190 = vxor.u32 %v3188, 2147483648
  %v3191 = vxor.u32 %v3189, 2147483648
  %v3192 = vmul.f32 %v3190, 1.442695
  %v3193 = vpow.pop %v3192
  %v3194 = vmul.f32 %v3191, 1.442695
  %v3195 = vpow.pop %v3194
  %v3196 = vadd.f32 %v3193, 1.0
  %v3197 = vadd.f32 %v3195, 1.0
  %v3198 = vrcp.pop %v3196
  %v3199 = vmul.f32 1.0, %v3198
  %v3200 = vrcp.pop %v3197
  %v3201 = vmul.f32 1.0, %v3200
  %v3202 = vtanh.pop %v3188
  %v3203 = vtanh.pop %v3189
  %v3204 = vmul.f32 %v3199, %v2816
  %v3205 = vmul.f32 %v3201, %v2817
  %3208 = vrot.lane.b32.xlu0 %v3202, 96
  %v3209 = vpop.permute.xlu0 %3208
  %3210 = vrot.lane.b32.xlu0 %v3203, 96
  %v3211 = vpop.permute.xlu0 %3210
  %v3214 = vmul.f32 %v3199, %v3209
  %v3215 = vmul.f32 %v3201, %v3211
  %3218 = vrot.lane.b32.xlu0 %v3214, 16
  %v3219 = vpop.permute.xlu0 %3218
  %3220 = vrot.lane.b32.xlu0 %v3215, 16
  %v3221 = vpop.permute.xlu0 %3220
  %v3224 = vadd.f32 %v3204, %v3219
  %v3225 = vadd.f32 %v3205, %v3221
  %v3226 = vtanh.pop %v3224
  %v3227 = vtanh.pop %v3225
  %3230 = vrot.lane.b32.xlu0 %v3226, 32
  %v3231 = vpop.permute.xlu0 %3230
  %3232 = vrot.lane.b32.xlu0 %v3227, 32
  %v3233 = vpop.permute.xlu0 %3232
  %v3236 = vmul.f32 %v3199, %v3231
  %v3237 = vmul.f32 %v3201, %v3233
  %v3238 = vsel %vm1804, %v3026, %v2810
  %v3239 = vsel %vm1805, %v3027, %v2811
  %v3240 = vsel %vm1804, %v3014, %v2812
  %v3241 = vsel %vm1805, %v3015, %v2813
  %v3242 = vsel %vm1790, %v3236, %v2814
  %v3243 = vsel %vm1791, %v3237, %v2815
  %v3244 = vsel %vm1790, %v3224, %v2816
  %v3245 = vsel %vm1791, %v3225, %v2817
  %3248 = vrot.lane.b32.xlu0 %v3238, 80
  %v3249 = vpop.permute.xlu0 %3248
  %3250 = vrot.lane.b32.xlu0 %v3239, 80
  %v3251 = vpop.permute.xlu0 %3250
  %v3252 = vsel %vm98, %v3249, 0
  %v3254 = vsel %vm98, %v3251, 0
  %3256 = vmatprep.subr.mxu0 0.0
  %3257 = vmatpush1.msra.mxu0 %v56
  %3258 = vmatprep.subr.mxu0 0.0
  %3259 = vmatpush1.msra.mxu0 %v57
  %3260 = vmatprep.subr.mxu0 0.0
  %3261 = vmatpush1.msra.mxu0 0.0
  %3262 = vmatprep.subr.mxu0 0.0
  %3263 = vmatpush1.msra.mxu0 0.0
  %3264 = vmatprep.subr.mxu0 0.0
  %3265 = vmatpush1.msra.mxu0 0.0
  %3266 = vmatprep.subr.mxu0 0.0
  %3267 = vmatpush1.msra.mxu0 0.0
  %3268 = vmatprep.subr.mxu0 0.0
  %3269 = vmatpush1.msra.mxu0 0.0
  %3270 = vmatprep.subr.mxu0 0.0
  %3271 = vmatpush1.msra.mxu0 0.0
  %3272 = vmatprep.subr.mxu0 0.0
  %3273 = vmatpush1.msra.mxu0 0.0
  %3274 = vmatprep.subr.mxu0 0.0
  %3275 = vmatpush1.msra.mxu0 0.0
  %3276 = vmatprep.subr.mxu0 0.0
  %3277 = vmatpush1.msra.mxu0 0.0
  %3278 = vmatprep.subr.mxu0 0.0
  %3279 = vmatpush1.msra.mxu0 0.0
  %3280 = vmatprep.subr.mxu0 0.0
  %3281 = vmatpush1.msra.mxu0 0.0
  %3282 = vmatprep.subr.mxu0 0.0
  %3283 = vmatpush1.msra.mxu0 0.0
  %3284 = vmatprep.subr.mxu0 0.0
  %3285 = vmatpush1.msra.mxu0 0.0
  %3286 = vmatprep.subr.mxu0 0.0
  %3287 = vmatpush1.msra.mxu0 0.0
  %3288 = vmatprep.subr.mxu0 0.0
  %3289 = vmatpush1.msra.mxu0 0.0
  %3290 = vmatprep.subr.mxu0 0.0
  %3291 = vmatpush1.msra.mxu0 0.0
  %3292 = vmatprep.subr.mxu0 0.0
  %3293 = vmatpush1.msra.mxu0 0.0
  %3294 = vmatprep.subr.mxu0 0.0
  %3295 = vmatpush1.msra.mxu0 0.0
  %3296 = vmatprep.subr.mxu0 0.0
  %3297 = vmatpush1.msra.mxu0 0.0
  %3298 = vmatprep.subr.mxu0 0.0
  %3299 = vmatpush1.msra.mxu0 0.0
  %3300 = vmatprep.subr.mxu0 0.0
  %3301 = vmatpush1.msra.mxu0 0.0
  %3302 = vmatprep.subr.mxu0 0.0
  %3303 = vmatpush1.msra.mxu0 0.0
  %3304 = vmatprep.subr.mxu0 0.0
  %3305 = vmatpush1.msra.mxu0 0.0
  %3306 = vmatprep.subr.mxu0 0.0
  %3307 = vmatpush1.msra.mxu0 0.0
  %3308 = vmatprep.subr.mxu0 0.0
  %3309 = vmatpush1.msra.mxu0 0.0
  %3310 = vmatprep.subr.mxu0 0.0
  %3311 = vmatpush1.msra.mxu0 0.0
  %3312 = vmatprep.subr.mxu0 0.0
  %3313 = vmatpush1.msra.mxu0 0.0
  %3314 = vmatprep.subr.mxu0 0.0
  %3315 = vmatpush1.msra.mxu0 0.0
  %3316 = vmatprep.subr.mxu0 0.0
  %3317 = vmatpush1.msra.mxu0 0.0
  %3318 = vmatprep.subr.mxu0 0.0
  %3319 = vmatpush1.msra.mxu0 0.0
  %3320 = vmatprep.mubr.f32.mxu0 0.0
  %3321 = vmatmul.mubr.f32.gmra.mrb[0].mxu0 %v3252
  %v3322 = vpop.f32.mrb[0].mxu0
  %v3323 = vadd.f32 0.0, %v3322
  %v3324 = vpop.f32.mrb[0].mxu0
  %3325 = vmatprep.mubr.f32.mxu0 0.0
  %3326 = vmatmul.mubr.f32.gmra.mrb[0].mxu0 %v3254
  %v3327 = vpop.f32.mrb[0].mxu0
  %v3328 = vadd.f32 0.0, %v3327
  %v3329 = vpop.f32.mrb[0].mxu0
  %3330 = vdwg.mxu0
  %3331 = vmatprep.subr.mxu0 0.0
  %3332 = vmatpush1.msra.mxu0 %v52
  %3333 = vmatprep.subr.mxu0 0.0
  %3334 = vmatpush1.msra.mxu0 %v53
  %3335 = vmatprep.subr.mxu0 0.0
  %3336 = vmatpush1.msra.mxu0 %v54
  %3337 = vmatprep.subr.mxu0 0.0
  %3338 = vmatpush1.msra.mxu0 %v55
  %3339 = vmatprep.subr.mxu0 0.0
  %3340 = vmatpush1.msra.mxu0 0.0
  %3341 = vmatprep.subr.mxu0 0.0
  %3342 = vmatpush1.msra.mxu0 0.0
  %3343 = vmatprep.subr.mxu0 0.0
  %3344 = vmatpush1.msra.mxu0 0.0
  %3345 = vmatprep.subr.mxu0 0.0
  %3346 = vmatpush1.msra.mxu0 0.0
  %3347 = vmatprep.subr.mxu0 0.0
  %3348 = vmatpush1.msra.mxu0 0.0
  %3349 = vmatprep.subr.mxu0 0.0
  %3350 = vmatpush1.msra.mxu0 0.0
  %3351 = vmatprep.subr.mxu0 0.0
  %3352 = vmatpush1.msra.mxu0 0.0
  %3353 = vmatprep.subr.mxu0 0.0
  %3354 = vmatpush1.msra.mxu0 0.0
  %3355 = vmatprep.subr.mxu0 0.0
  %3356 = vmatpush1.msra.mxu0 0.0
  %3357 = vmatprep.subr.mxu0 0.0
  %3358 = vmatpush1.msra.mxu0 0.0
  %3359 = vmatprep.subr.mxu0 0.0
  %3360 = vmatpush1.msra.mxu0 0.0
  %3361 = vmatprep.subr.mxu0 0.0
  %3362 = vmatpush1.msra.mxu0 0.0
  %3363 = vmatprep.subr.mxu0 0.0
  %3364 = vmatpush1.msra.mxu0 0.0
  %3365 = vmatprep.subr.mxu0 0.0
  %3366 = vmatpush1.msra.mxu0 0.0
  %3367 = vmatprep.subr.mxu0 0.0
  %3368 = vmatpush1.msra.mxu0 0.0
  %3369 = vmatprep.subr.mxu0 0.0
  %3370 = vmatpush1.msra.mxu0 0.0
  %3371 = vmatprep.subr.mxu0 0.0
  %3372 = vmatpush1.msra.mxu0 0.0
  %3373 = vmatprep.subr.mxu0 0.0
  %3374 = vmatpush1.msra.mxu0 0.0
  %3375 = vmatprep.subr.mxu0 0.0
  %3376 = vmatpush1.msra.mxu0 0.0
  %3377 = vmatprep.subr.mxu0 0.0
  %3378 = vmatpush1.msra.mxu0 0.0
  %3379 = vmatprep.subr.mxu0 0.0
  %3380 = vmatpush1.msra.mxu0 0.0
  %3381 = vmatprep.subr.mxu0 0.0
  %3382 = vmatpush1.msra.mxu0 0.0
  %3383 = vmatprep.subr.mxu0 0.0
  %3384 = vmatpush1.msra.mxu0 0.0
  %3385 = vmatprep.subr.mxu0 0.0
  %3386 = vmatpush1.msra.mxu0 0.0
  %3387 = vmatprep.subr.mxu0 0.0
  %3388 = vmatpush1.msra.mxu0 0.0
  %3389 = vmatprep.subr.mxu0 0.0
  %3390 = vmatpush1.msra.mxu0 0.0
  %3391 = vmatprep.subr.mxu0 0.0
  %3392 = vmatpush1.msra.mxu0 0.0
  %3393 = vmatprep.subr.mxu0 0.0
  %3394 = vmatpush1.msra.mxu0 0.0
  %3395 = vmatprep.mubr.f32.mxu0 0.0
  %3396 = vmatmul.mubr.f32.gmra.mrb[0].mxu0 %v1069
  %v3397 = vpop.f32.mrb[0].mxu0
  %v3398 = vadd.f32 %v3323, %v3397
  %v3399 = vpop.f32.mrb[0].mxu0
  %3400 = vmatprep.mubr.f32.mxu0 0.0
  %3401 = vmatmul.mubr.f32.gmra.mrb[0].mxu0 %v1071
  %v3402 = vpop.f32.mrb[0].mxu0
  %v3403 = vadd.f32 %v3328, %v3402
  %v3404 = vpop.f32.mrb[0].mxu0
  %3405 = vdwg.mxu0
  %v3406 = vadd.f32 %v3398, %v312
  %v3407 = vadd.f32 %v3403, %v312
  %v3408 = vxor.u32 %v3406, 2147483648
  %v3409 = vxor.u32 %v3407, 2147483648
  %v3410 = vmul.f32 %v3408, 1.442695
  %v3411 = vpow.pop %v3410
  %v3412 = vmul.f32 %v3409, 1.442695
  %v3413 = vpow.pop %v3412
  %v3414 = vadd.f32 %v3411, 1.0
  %v3415 = vadd.f32 %v3413, 1.0
  %v3416 = vrcp.pop %v3414
  %v3417 = vmul.f32 1.0, %v3416
  %v3418 = vrcp.pop %v3415
  %v3419 = vmul.f32 1.0, %v3418
  %v3420 = vtanh.pop %v3406
  %v3421 = vtanh.pop %v3407
  %v3422 = vmul.f32 %v3417, %v3240
  %v3423 = vmul.f32 %v3419, %v3241
  %3426 = vrot.lane.b32.xlu0 %v3420, 96
  %v3427 = vpop.permute.xlu0 %3426
  %3428 = vrot.lane.b32.xlu0 %v3421, 96
  %v3429 = vpop.permute.xlu0 %3428
  %v3432 = vmul.f32 %v3417, %v3427
  %v3433 = vmul.f32 %v3419, %v3429
  %3436 = vrot.lane.b32.xlu0 %v3432, 16
  %v3437 = vpop.permute.xlu0 %3436
  %3438 = vrot.lane.b32.xlu0 %v3433, 16
  %v3439 = vpop.permute.xlu0 %3438
  %v3442 = vadd.f32 %v3422, %v3437
  %v3443 = vadd.f32 %v3423, %v3439
  %v3444 = vtanh.pop %v3442
  %v3445 = vtanh.pop %v3443
  %3448 = vrot.lane.b32.xlu0 %v3444, 32
  %v3449 = vpop.permute.xlu0 %3448
  %3450 = vrot.lane.b32.xlu0 %v3445, 32
  %v3451 = vpop.permute.xlu0 %3450
  %v3454 = vmul.f32 %v3417, %v3449
  %v3455 = vmul.f32 %v3419, %v3451
  %3458 = vrot.lane.b32.xlu0 %v3242, 80
  %v3459 = vpop.permute.xlu0 %3458
  %3460 = vrot.lane.b32.xlu0 %v3243, 80
  %v3461 = vpop.permute.xlu0 %3460
  %v3462 = vsel %vm98, %v3459, 0
  %v3464 = vsel %vm98, %v3461, 0
  %3466 = vmatprep.subr.mxu0 0.0
  %3467 = vmatpush1.msra.mxu0 %v63
  %3468 = vmatprep.subr.mxu0 0.0
  %3469 = vmatpush1.msra.mxu0 %v64
  %3470 = vmatprep.subr.mxu0 0.0
  %3471 = vmatpush1.msra.mxu0 0.0
  %3472 = vmatprep.subr.mxu0 0.0
  %3473 = vmatpush1.msra.mxu0 0.0
  %3474 = vmatprep.subr.mxu0 0.0
  %3475 = vmatpush1.msra.mxu0 0.0
  %3476 = vmatprep.subr.mxu0 0.0
  %3477 = vmatpush1.msra.mxu0 0.0
  %3478 = vmatprep.subr.mxu0 0.0
  %3479 = vmatpush1.msra.mxu0 0.0
  %3480 = vmatprep.subr.mxu0 0.0
  %3481 = vmatpush1.msra.mxu0 0.0
  %3482 = vmatprep.subr.mxu0 0.0
  %3483 = vmatpush1.msra.mxu0 0.0
  %3484 = vmatprep.subr.mxu0 0.0
  %3485 = vmatpush1.msra.mxu0 0.0
  %3486 = vmatprep.subr.mxu0 0.0
  %3487 = vmatpush1.msra.mxu0 0.0
  %3488 = vmatprep.subr.mxu0 0.0
  %3489 = vmatpush1.msra.mxu0 0.0
  %3490 = vmatprep.subr.mxu0 0.0
  %3491 = vmatpush1.msra.mxu0 0.0
  %3492 = vmatprep.subr.mxu0 0.0
  %3493 = vmatpush1.msra.mxu0 0.0
  %3494 = vmatprep.subr.mxu0 0.0
  %3495 = vmatpush1.msra.mxu0 0.0
  %3496 = vmatprep.subr.mxu0 0.0
  %3497 = vmatpush1.msra.mxu0 0.0
  %3498 = vmatprep.subr.mxu0 0.0
  %3499 = vmatpush1.msra.mxu0 0.0
  %3500 = vmatprep.subr.mxu0 0.0
  %3501 = vmatpush1.msra.mxu0 0.0
  %3502 = vmatprep.subr.mxu0 0.0
  %3503 = vmatpush1.msra.mxu0 0.0
  %3504 = vmatprep.subr.mxu0 0.0
  %3505 = vmatpush1.msra.mxu0 0.0
  %3506 = vmatprep.subr.mxu0 0.0
  %3507 = vmatpush1.msra.mxu0 0.0
  %3508 = vmatprep.subr.mxu0 0.0
  %3509 = vmatpush1.msra.mxu0 0.0
  %3510 = vmatprep.subr.mxu0 0.0
  %3511 = vmatpush1.msra.mxu0 0.0
  %3512 = vmatprep.subr.mxu0 0.0
  %3513 = vmatpush1.msra.mxu0 0.0
  %3514 = vmatprep.subr.mxu0 0.0
  %3515 = vmatpush1.msra.mxu0 0.0
  %3516 = vmatprep.subr.mxu0 0.0
  %3517 = vmatpush1.msra.mxu0 0.0
  %3518 = vmatprep.subr.mxu0 0.0
  %3519 = vmatpush1.msra.mxu0 0.0
  %3520 = vmatprep.subr.mxu0 0.0
  %3521 = vmatpush1.msra.mxu0 0.0
  %3522 = vmatprep.subr.mxu0 0.0
  %3523 = vmatpush1.msra.mxu0 0.0
  %3524 = vmatprep.subr.mxu0 0.0
  %3525 = vmatpush1.msra.mxu0 0.0
  %3526 = vmatprep.subr.mxu0 0.0
  %3527 = vmatpush1.msra.mxu0 0.0
  %3528 = vmatprep.subr.mxu0 0.0
  %3529 = vmatpush1.msra.mxu0 0.0
  %3530 = vmatprep.mubr.f32.mxu0 0.0
  %3531 = vmatmul.mubr.f32.gmra.mrb[0].mxu0 %v3462
  %v3532 = vpop.f32.mrb[0].mxu0
  %v3533 = vadd.f32 0.0, %v3532
  %v3534 = vpop.f32.mrb[0].mxu0
  %3535 = vmatprep.mubr.f32.mxu0 0.0
  %3536 = vmatmul.mubr.f32.gmra.mrb[0].mxu0 %v3464
  %v3537 = vpop.f32.mrb[0].mxu0
  %v3538 = vadd.f32 0.0, %v3537
  %v3539 = vpop.f32.mrb[0].mxu0
  %3540 = vdwg.mxu0
  %3541 = vmatprep.subr.mxu0 0.0
  %3542 = vmatpush1.msra.mxu0 %v59
  %3543 = vmatprep.subr.mxu0 0.0
  %3544 = vmatpush1.msra.mxu0 %v60
  %3545 = vmatprep.subr.mxu0 0.0
  %3546 = vmatpush1.msra.mxu0 %v61
  %3547 = vmatprep.subr.mxu0 0.0
  %3548 = vmatpush1.msra.mxu0 %v62
  %3549 = vmatprep.subr.mxu0 0.0
  %3550 = vmatpush1.msra.mxu0 0.0
  %3551 = vmatprep.subr.mxu0 0.0
  %3552 = vmatpush1.msra.mxu0 0.0
  %3553 = vmatprep.subr.mxu0 0.0
  %3554 = vmatpush1.msra.mxu0 0.0
  %3555 = vmatprep.subr.mxu0 0.0
  %3556 = vmatpush1.msra.mxu0 0.0
  %3557 = vmatprep.subr.mxu0 0.0
  %3558 = vmatpush1.msra.mxu0 0.0
  %3559 = vmatprep.subr.mxu0 0.0
  %3560 = vmatpush1.msra.mxu0 0.0
  %3561 = vmatprep.subr.mxu0 0.0
  %3562 = vmatpush1.msra.mxu0 0.0
  %3563 = vmatprep.subr.mxu0 0.0
  %3564 = vmatpush1.msra.mxu0 0.0
  %3565 = vmatprep.subr.mxu0 0.0
  %3566 = vmatpush1.msra.mxu0 0.0
  %3567 = vmatprep.subr.mxu0 0.0
  %3568 = vmatpush1.msra.mxu0 0.0
  %3569 = vmatprep.subr.mxu0 0.0
  %3570 = vmatpush1.msra.mxu0 0.0
  %3571 = vmatprep.subr.mxu0 0.0
  %3572 = vmatpush1.msra.mxu0 0.0
  %3573 = vmatprep.subr.mxu0 0.0
  %3574 = vmatpush1.msra.mxu0 0.0
  %3575 = vmatprep.subr.mxu0 0.0
  %3576 = vmatpush1.msra.mxu0 0.0
  %3577 = vmatprep.subr.mxu0 0.0
  %3578 = vmatpush1.msra.mxu0 0.0
  %3579 = vmatprep.subr.mxu0 0.0
  %3580 = vmatpush1.msra.mxu0 0.0
  %3581 = vmatprep.subr.mxu0 0.0
  %3582 = vmatpush1.msra.mxu0 0.0
  %3583 = vmatprep.subr.mxu0 0.0
  %3584 = vmatpush1.msra.mxu0 0.0
  %3585 = vmatprep.subr.mxu0 0.0
  %3586 = vmatpush1.msra.mxu0 0.0
  %3587 = vmatprep.subr.mxu0 0.0
  %3588 = vmatpush1.msra.mxu0 0.0
  %3589 = vmatprep.subr.mxu0 0.0
  %3590 = vmatpush1.msra.mxu0 0.0
  %3591 = vmatprep.subr.mxu0 0.0
  %3592 = vmatpush1.msra.mxu0 0.0
  %3593 = vmatprep.subr.mxu0 0.0
  %3594 = vmatpush1.msra.mxu0 0.0
  %3595 = vmatprep.subr.mxu0 0.0
  %3596 = vmatpush1.msra.mxu0 0.0
  %3597 = vmatprep.subr.mxu0 0.0
  %3598 = vmatpush1.msra.mxu0 0.0
  %3599 = vmatprep.subr.mxu0 0.0
  %3600 = vmatpush1.msra.mxu0 0.0
  %3601 = vmatprep.subr.mxu0 0.0
  %3602 = vmatpush1.msra.mxu0 0.0
  %3603 = vmatprep.subr.mxu0 0.0
  %3604 = vmatpush1.msra.mxu0 0.0
  %3605 = vmatprep.mubr.f32.mxu0 0.0
  %3606 = vmatmul.mubr.f32.gmra.mrb[0].mxu0 %v811
  %v3607 = vpop.f32.mrb[0].mxu0
  %v3608 = vadd.f32 %v3533, %v3607
  %v3609 = vpop.f32.mrb[0].mxu0
  %3610 = vmatprep.mubr.f32.mxu0 0.0
  %3611 = vmatmul.mubr.f32.gmra.mrb[0].mxu0 %v813
  %v3612 = vpop.f32.mrb[0].mxu0
  %v3613 = vadd.f32 %v3538, %v3612
  %v3614 = vpop.f32.mrb[0].mxu0
  %3615 = vdwg.mxu0
  %v3616 = vadd.f32 %v3608, %v566
  %v3617 = vadd.f32 %v3613, %v566
  %v3618 = vxor.u32 %v3616, 2147483648
  %v3619 = vxor.u32 %v3617, 2147483648
  %v3620 = vmul.f32 %v3618, 1.442695
  %v3621 = vpow.pop %v3620
  %v3622 = vmul.f32 %v3619, 1.442695
  %v3623 = vpow.pop %v3622
  %v3624 = vadd.f32 %v3621, 1.0
  %v3625 = vadd.f32 %v3623, 1.0
  %v3626 = vrcp.pop %v3624
  %v3627 = vmul.f32 1.0, %v3626
  %v3628 = vrcp.pop %v3625
  %v3629 = vmul.f32 1.0, %v3628
  %v3630 = vtanh.pop %v3616
  %v3631 = vtanh.pop %v3617
  %v3632 = vmul.f32 %v3627, %v3244
  %v3633 = vmul.f32 %v3629, %v3245
  %3636 = vrot.lane.b32.xlu0 %v3630, 96
  %v3637 = vpop.permute.xlu0 %3636
  %3638 = vrot.lane.b32.xlu0 %v3631, 96
  %v3639 = vpop.permute.xlu0 %3638
  %v3642 = vmul.f32 %v3627, %v3637
  %v3643 = vmul.f32 %v3629, %v3639
  %3646 = vrot.lane.b32.xlu0 %v3642, 16
  %v3647 = vpop.permute.xlu0 %3646
  %3648 = vrot.lane.b32.xlu0 %v3643, 16
  %v3649 = vpop.permute.xlu0 %3648
  %v3652 = vadd.f32 %v3632, %v3647
  %v3653 = vadd.f32 %v3633, %v3649
  %v3654 = vtanh.pop %v3652
  %v3655 = vtanh.pop %v3653
  %3658 = vrot.lane.b32.xlu0 %v3654, 32
  %v3659 = vpop.permute.xlu0 %3658
  %3660 = vrot.lane.b32.xlu0 %v3655, 32
  %v3661 = vpop.permute.xlu0 %3660
  %v3664 = vmul.f32 %v3627, %v3659
  %v3665 = vmul.f32 %v3629, %v3661
  %v3666 = vsel %vm1224, %v3454, %v3238
  %v3667 = vsel %vm1225, %v3455, %v3239
  %v3668 = vsel %vm1224, %v3442, %v3240
  %v3669 = vsel %vm1225, %v3443, %v3241
  %v3670 = vsel %vm1210, %v3664, %v3242
  %v3671 = vsel %vm1211, %v3665, %v3243
  %v3672 = vsel %vm1210, %v3652, %v3244
  %v3673 = vsel %vm1211, %v3653, %v3245
  %3676 = vrot.lane.b32.xlu0 %v3666, 80
  %v3677 = vpop.permute.xlu0 %3676
  %3678 = vrot.lane.b32.xlu0 %v3667, 80
  %v3679 = vpop.permute.xlu0 %3678
  %v3680 = vsel %vm98, %v3677, 0
  %v3682 = vsel %vm98, %v3679, 0
  %3684 = vmatprep.subr.mxu0 0.0
  %3685 = vmatpush1.msra.mxu0 %v56
  %3686 = vmatprep.subr.mxu0 0.0
  %3687 = vmatpush1.msra.mxu0 %v57
  %3688 = vmatprep.subr.mxu0 0.0
  %3689 = vmatpush1.msra.mxu0 0.0
  %3690 = vmatprep.subr.mxu0 0.0
  %3691 = vmatpush1.msra.mxu0 0.0
  %3692 = vmatprep.subr.mxu0 0.0
  %3693 = vmatpush1.msra.mxu0 0.0
  %3694 = vmatprep.subr.mxu0 0.0
  %3695 = vmatpush1.msra.mxu0 0.0
  %3696 = vmatprep.subr.mxu0 0.0
  %3697 = vmatpush1.msra.mxu0 0.0
  %3698 = vmatprep.subr.mxu0 0.0
  %3699 = vmatpush1.msra.mxu0 0.0
  %3700 = vmatprep.subr.mxu0 0.0
  %3701 = vmatpush1.msra.mxu0 0.0
  %3702 = vmatprep.subr.mxu0 0.0
  %3703 = vmatpush1.msra.mxu0 0.0
  %3704 = vmatprep.subr.mxu0 0.0
  %3705 = vmatpush1.msra.mxu0 0.0
  %3706 = vmatprep.subr.mxu0 0.0
  %3707 = vmatpush1.msra.mxu0 0.0
  %3708 = vmatprep.subr.mxu0 0.0
  %3709 = vmatpush1.msra.mxu0 0.0
  %3710 = vmatprep.subr.mxu0 0.0
  %3711 = vmatpush1.msra.mxu0 0.0
  %3712 = vmatprep.subr.mxu0 0.0
  %3713 = vmatpush1.msra.mxu0 0.0
  %3714 = vmatprep.subr.mxu0 0.0
  %3715 = vmatpush1.msra.mxu0 0.0
  %3716 = vmatprep.subr.mxu0 0.0
  %3717 = vmatpush1.msra.mxu0 0.0
  %3718 = vmatprep.subr.mxu0 0.0
  %3719 = vmatpush1.msra.mxu0 0.0
  %3720 = vmatprep.subr.mxu0 0.0
  %3721 = vmatpush1.msra.mxu0 0.0
  %3722 = vmatprep.subr.mxu0 0.0
  %3723 = vmatpush1.msra.mxu0 0.0
  %3724 = vmatprep.subr.mxu0 0.0
  %3725 = vmatpush1.msra.mxu0 0.0
  %3726 = vmatprep.subr.mxu0 0.0
  %3727 = vmatpush1.msra.mxu0 0.0
  %3728 = vmatprep.subr.mxu0 0.0
  %3729 = vmatpush1.msra.mxu0 0.0
  %3730 = vmatprep.subr.mxu0 0.0
  %3731 = vmatpush1.msra.mxu0 0.0
  %3732 = vmatprep.subr.mxu0 0.0
  %3733 = vmatpush1.msra.mxu0 0.0
  %3734 = vmatprep.subr.mxu0 0.0
  %3735 = vmatpush1.msra.mxu0 0.0
  %3736 = vmatprep.subr.mxu0 0.0
  %3737 = vmatpush1.msra.mxu0 0.0
  %3738 = vmatprep.subr.mxu0 0.0
  %3739 = vmatpush1.msra.mxu0 0.0
  %3740 = vmatprep.subr.mxu0 0.0
  %3741 = vmatpush1.msra.mxu0 0.0
  %3742 = vmatprep.subr.mxu0 0.0
  %3743 = vmatpush1.msra.mxu0 0.0
  %3744 = vmatprep.subr.mxu0 0.0
  %3745 = vmatpush1.msra.mxu0 0.0
  %3746 = vmatprep.subr.mxu0 0.0
  %3747 = vmatpush1.msra.mxu0 0.0
  %3748 = vmatprep.mubr.f32.mxu0 0.0
  %3749 = vmatmul.mubr.f32.gmra.mrb[0].mxu0 %v3680
  %v3750 = vpop.f32.mrb[0].mxu0
  %v3751 = vadd.f32 0.0, %v3750
  %v3752 = vpop.f32.mrb[0].mxu0
  %3753 = vmatprep.mubr.f32.mxu0 0.0
  %3754 = vmatmul.mubr.f32.gmra.mrb[0].mxu0 %v3682
  %v3755 = vpop.f32.mrb[0].mxu0
  %v3756 = vadd.f32 0.0, %v3755
  %v3757 = vpop.f32.mrb[0].mxu0
  %3758 = vdwg.mxu0
  %3759 = vmatprep.subr.mxu0 0.0
  %3760 = vmatpush1.msra.mxu0 %v52
  %3761 = vmatprep.subr.mxu0 0.0
  %3762 = vmatpush1.msra.mxu0 %v53
  %3763 = vmatprep.subr.mxu0 0.0
  %3764 = vmatpush1.msra.mxu0 %v54
  %3765 = vmatprep.subr.mxu0 0.0
  %3766 = vmatpush1.msra.mxu0 %v55
  %3767 = vmatprep.subr.mxu0 0.0
  %3768 = vmatpush1.msra.mxu0 0.0
  %3769 = vmatprep.subr.mxu0 0.0
  %3770 = vmatpush1.msra.mxu0 0.0
  %3771 = vmatprep.subr.mxu0 0.0
  %3772 = vmatpush1.msra.mxu0 0.0
  %3773 = vmatprep.subr.mxu0 0.0
  %3774 = vmatpush1.msra.mxu0 0.0
  %3775 = vmatprep.subr.mxu0 0.0
  %3776 = vmatpush1.msra.mxu0 0.0
  %3777 = vmatprep.subr.mxu0 0.0
  %3778 = vmatpush1.msra.mxu0 0.0
  %3779 = vmatprep.subr.mxu0 0.0
  %3780 = vmatpush1.msra.mxu0 0.0
  %3781 = vmatprep.subr.mxu0 0.0
  %3782 = vmatpush1.msra.mxu0 0.0
  %3783 = vmatprep.subr.mxu0 0.0
  %3784 = vmatpush1.msra.mxu0 0.0
  %3785 = vmatprep.subr.mxu0 0.0
  %3786 = vmatpush1.msra.mxu0 0.0
  %3787 = vmatprep.subr.mxu0 0.0
  %3788 = vmatpush1.msra.mxu0 0.0
  %3789 = vmatprep.subr.mxu0 0.0
  %3790 = vmatpush1.msra.mxu0 0.0
  %3791 = vmatprep.subr.mxu0 0.0
  %3792 = vmatpush1.msra.mxu0 0.0
  %3793 = vmatprep.subr.mxu0 0.0
  %3794 = vmatpush1.msra.mxu0 0.0
  %3795 = vmatprep.subr.mxu0 0.0
  %3796 = vmatpush1.msra.mxu0 0.0
  %3797 = vmatprep.subr.mxu0 0.0
  %3798 = vmatpush1.msra.mxu0 0.0
  %3799 = vmatprep.subr.mxu0 0.0
  %3800 = vmatpush1.msra.mxu0 0.0
  %3801 = vmatprep.subr.mxu0 0.0
  %3802 = vmatpush1.msra.mxu0 0.0
  %3803 = vmatprep.subr.mxu0 0.0
  %3804 = vmatpush1.msra.mxu0 0.0
  %3805 = vmatprep.subr.mxu0 0.0
  %3806 = vmatpush1.msra.mxu0 0.0
  %3807 = vmatprep.subr.mxu0 0.0
  %3808 = vmatpush1.msra.mxu0 0.0
  %3809 = vmatprep.subr.mxu0 0.0
  %3810 = vmatpush1.msra.mxu0 0.0
  %3811 = vmatprep.subr.mxu0 0.0
  %3812 = vmatpush1.msra.mxu0 0.0
  %3813 = vmatprep.subr.mxu0 0.0
  %3814 = vmatpush1.msra.mxu0 0.0
  %3815 = vmatprep.subr.mxu0 0.0
  %3816 = vmatpush1.msra.mxu0 0.0
  %3817 = vmatprep.subr.mxu0 0.0
  %3818 = vmatpush1.msra.mxu0 0.0
  %3819 = vmatprep.subr.mxu0 0.0
  %3820 = vmatpush1.msra.mxu0 0.0
  %3821 = vmatprep.subr.mxu0 0.0
  %3822 = vmatpush1.msra.mxu0 0.0
  %3823 = vmatprep.mubr.f32.mxu0 0.0
  %3824 = vmatmul.mubr.f32.gmra.mrb[0].mxu0 %v483
  %v3825 = vpop.f32.mrb[0].mxu0
  %v3826 = vadd.f32 %v3751, %v3825
  %v3827 = vpop.f32.mrb[0].mxu0
  %3828 = vmatprep.mubr.f32.mxu0 0.0
  %3829 = vmatmul.mubr.f32.gmra.mrb[0].mxu0 %v485
  %v3830 = vpop.f32.mrb[0].mxu0
  %v3831 = vadd.f32 %v3756, %v3830
  %v3832 = vpop.f32.mrb[0].mxu0
  %3833 = vdwg.mxu0
  %v3834 = vadd.f32 %v3826, %v312
  %v3835 = vadd.f32 %v3831, %v312
  %v3836 = vxor.u32 %v3834, 2147483648
  %v3837 = vxor.u32 %v3835, 2147483648
  %v3838 = vmul.f32 %v3836, 1.442695
  %v3839 = vpow.pop %v3838
  %v3840 = vmul.f32 %v3837, 1.442695
  %v3841 = vpow.pop %v3840
  %v3842 = vadd.f32 %v3839, 1.0
  %v3843 = vadd.f32 %v3841, 1.0
  %v3844 = vrcp.pop %v3842
  %v3845 = vmul.f32 1.0, %v3844
  %v3846 = vrcp.pop %v3843
  %v3847 = vmul.f32 1.0, %v3846
  %v3848 = vtanh.pop %v3834
  %v3849 = vtanh.pop %v3835
  %v3850 = vmul.f32 %v3845, %v3668
  %v3851 = vmul.f32 %v3847, %v3669
  %3854 = vrot.lane.b32.xlu0 %v3848, 96
  %v3855 = vpop.permute.xlu0 %3854
  %3856 = vrot.lane.b32.xlu0 %v3849, 96
  %v3857 = vpop.permute.xlu0 %3856
  %v3860 = vmul.f32 %v3845, %v3855
  %v3861 = vmul.f32 %v3847, %v3857
  %3864 = vrot.lane.b32.xlu0 %v3860, 16
  %v3865 = vpop.permute.xlu0 %3864
  %3866 = vrot.lane.b32.xlu0 %v3861, 16
  %v3867 = vpop.permute.xlu0 %3866
  %v3870 = vadd.f32 %v3850, %v3865
  %v3871 = vadd.f32 %v3851, %v3867
  %3874 = vrot.lane.b32.xlu0 %v3670, 80
  %v3875 = vpop.permute.xlu0 %3874
  %3876 = vrot.lane.b32.xlu0 %v3671, 80
  %v3877 = vpop.permute.xlu0 %3876
  %v3878 = vsel %vm98, %v3875, 0
  %v3880 = vsel %vm98, %v3877, 0
  %3882 = vmatprep.subr.mxu0 0.0
  %3883 = vmatpush1.msra.mxu0 %v63
  %3884 = vmatprep.subr.mxu0 0.0
  %3885 = vmatpush1.msra.mxu0 %v64
  %3886 = vmatprep.subr.mxu0 0.0
  %3887 = vmatpush1.msra.mxu0 0.0
  %3888 = vmatprep.subr.mxu0 0.0
  %3889 = vmatpush1.msra.mxu0 0.0
  %3890 = vmatprep.subr.mxu0 0.0
  %3891 = vmatpush1.msra.mxu0 0.0
  %3892 = vmatprep.subr.mxu0 0.0
  %3893 = vmatpush1.msra.mxu0 0.0
  %3894 = vmatprep.subr.mxu0 0.0
  %3895 = vmatpush1.msra.mxu0 0.0
  %3896 = vmatprep.subr.mxu0 0.0
  %3897 = vmatpush1.msra.mxu0 0.0
  %3898 = vmatprep.subr.mxu0 0.0
  %3899 = vmatpush1.msra.mxu0 0.0
  %3900 = vmatprep.subr.mxu0 0.0
  %3901 = vmatpush1.msra.mxu0 0.0
  %3902 = vmatprep.subr.mxu0 0.0
  %3903 = vmatpush1.msra.mxu0 0.0
  %3904 = vmatprep.subr.mxu0 0.0
  %3905 = vmatpush1.msra.mxu0 0.0
  %3906 = vmatprep.subr.mxu0 0.0
  %3907 = vmatpush1.msra.mxu0 0.0
  %3908 = vmatprep.subr.mxu0 0.0
  %3909 = vmatpush1.msra.mxu0 0.0
  %3910 = vmatprep.subr.mxu0 0.0
  %3911 = vmatpush1.msra.mxu0 0.0
  %3912 = vmatprep.subr.mxu0 0.0
  %3913 = vmatpush1.msra.mxu0 0.0
  %3914 = vmatprep.subr.mxu0 0.0
  %3915 = vmatpush1.msra.mxu0 0.0
  %3916 = vmatprep.subr.mxu0 0.0
  %3917 = vmatpush1.msra.mxu0 0.0
  %3918 = vmatprep.subr.mxu0 0.0
  %3919 = vmatpush1.msra.mxu0 0.0
  %3920 = vmatprep.subr.mxu0 0.0
  %3921 = vmatpush1.msra.mxu0 0.0
  %3922 = vmatprep.subr.mxu0 0.0
  %3923 = vmatpush1.msra.mxu0 0.0
  %3924 = vmatprep.subr.mxu0 0.0
  %3925 = vmatpush1.msra.mxu0 0.0
  %3926 = vmatprep.subr.mxu0 0.0
  %3927 = vmatpush1.msra.mxu0 0.0
  %3928 = vmatprep.subr.mxu0 0.0
  %3929 = vmatpush1.msra.mxu0 0.0
  %3930 = vmatprep.subr.mxu0 0.0
  %3931 = vmatpush1.msra.mxu0 0.0
  %3932 = vmatprep.subr.mxu0 0.0
  %3933 = vmatpush1.msra.mxu0 0.0
  %3934 = vmatprep.subr.mxu0 0.0
  %3935 = vmatpush1.msra.mxu0 0.0
  %3936 = vmatprep.subr.mxu0 0.0
  %3937 = vmatpush1.msra.mxu0 0.0
  %3938 = vmatprep.subr.mxu0 0.0
  %3939 = vmatpush1.msra.mxu0 0.0
  %3940 = vmatprep.subr.mxu0 0.0
  %3941 = vmatpush1.msra.mxu0 0.0
  %3942 = vmatprep.subr.mxu0 0.0
  %3943 = vmatpush1.msra.mxu0 0.0
  %3944 = vmatprep.subr.mxu0 0.0
  %3945 = vmatpush1.msra.mxu0 0.0
  %3946 = vmatprep.mubr.f32.mxu0 0.0
  %3947 = vmatmul.mubr.f32.gmra.mrb[0].mxu0 %v3878
  %v3948 = vpop.f32.mrb[0].mxu0
  %v3949 = vadd.f32 0.0, %v3948
  %v3950 = vpop.f32.mrb[0].mxu0
  %3951 = vmatprep.mubr.f32.mxu0 0.0
  %3952 = vmatmul.mubr.f32.gmra.mrb[0].mxu0 %v3880
  %v3953 = vpop.f32.mrb[0].mxu0
  %v3954 = vadd.f32 0.0, %v3953
  %v3955 = vpop.f32.mrb[0].mxu0
  %3956 = vdwg.mxu0
  %3957 = vmatprep.subr.mxu0 0.0
  %3958 = vmatpush1.msra.mxu0 %v59
  %3959 = vmatprep.subr.mxu0 0.0
  %3960 = vmatpush1.msra.mxu0 %v60
  %3961 = vmatprep.subr.mxu0 0.0
  %3962 = vmatpush1.msra.mxu0 %v61
  %3963 = vmatprep.subr.mxu0 0.0
  %3964 = vmatpush1.msra.mxu0 %v62
  %3965 = vmatprep.subr.mxu0 0.0
  %3966 = vmatpush1.msra.mxu0 0.0
  %3967 = vmatprep.subr.mxu0 0.0
  %3968 = vmatpush1.msra.mxu0 0.0
  %3969 = vmatprep.subr.mxu0 0.0
  %3970 = vmatpush1.msra.mxu0 0.0
  %3971 = vmatprep.subr.mxu0 0.0
  %3972 = vmatpush1.msra.mxu0 0.0
  %3973 = vmatprep.subr.mxu0 0.0
  %3974 = vmatpush1.msra.mxu0 0.0
  %3975 = vmatprep.subr.mxu0 0.0
  %3976 = vmatpush1.msra.mxu0 0.0
  %3977 = vmatprep.subr.mxu0 0.0
  %3978 = vmatpush1.msra.mxu0 0.0
  %3979 = vmatprep.subr.mxu0 0.0
  %3980 = vmatpush1.msra.mxu0 0.0
  %3981 = vmatprep.subr.mxu0 0.0
  %3982 = vmatpush1.msra.mxu0 0.0
  %3983 = vmatprep.subr.mxu0 0.0
  %3984 = vmatpush1.msra.mxu0 0.0
  %3985 = vmatprep.subr.mxu0 0.0
  %3986 = vmatpush1.msra.mxu0 0.0
  %3987 = vmatprep.subr.mxu0 0.0
  %3988 = vmatpush1.msra.mxu0 0.0
  %3989 = vmatprep.subr.mxu0 0.0
  %3990 = vmatpush1.msra.mxu0 0.0
  %3991 = vmatprep.subr.mxu0 0.0
  %3992 = vmatpush1.msra.mxu0 0.0
  %3993 = vmatprep.subr.mxu0 0.0
  %3994 = vmatpush1.msra.mxu0 0.0
  %3995 = vmatprep.subr.mxu0 0.0
  %3996 = vmatpush1.msra.mxu0 0.0
  %3997 = vmatprep.subr.mxu0 0.0
  %3998 = vmatpush1.msra.mxu0 0.0
  %3999 = vmatprep.subr.mxu0 0.0
  %4000 = vmatpush1.msra.mxu0 0.0
  %4001 = vmatprep.subr.mxu0 0.0
  %4002 = vmatpush1.msra.mxu0 0.0
  %4003 = vmatprep.subr.mxu0 0.0
  %4004 = vmatpush1.msra.mxu0 0.0
  %4005 = vmatprep.subr.mxu0 0.0
  %4006 = vmatpush1.msra.mxu0 0.0
  %4007 = vmatprep.subr.mxu0 0.0
  %4008 = vmatpush1.msra.mxu0 0.0
  %4009 = vmatprep.subr.mxu0 0.0
  %4010 = vmatpush1.msra.mxu0 0.0
  %4011 = vmatprep.subr.mxu0 0.0
  %4012 = vmatpush1.msra.mxu0 0.0
  %4013 = vmatprep.subr.mxu0 0.0
  %4014 = vmatpush1.msra.mxu0 0.0
  %4015 = vmatprep.subr.mxu0 0.0
  %4016 = vmatpush1.msra.mxu0 0.0
  %4017 = vmatprep.subr.mxu0 0.0
  %4018 = vmatpush1.msra.mxu0 0.0
  %4019 = vmatprep.subr.mxu0 0.0
  %4020 = vmatpush1.msra.mxu0 0.0
  %4021 = vmatprep.mubr.f32.mxu0 0.0
  %4022 = vmatmul.mubr.f32.gmra.mrb[0].mxu0 %v229
  %v4023 = vpop.f32.mrb[0].mxu0
  %v4024 = vadd.f32 %v3949, %v4023
  %v4025 = vpop.f32.mrb[0].mxu0
  %4026 = vmatprep.mubr.f32.mxu0 0.0
  %4027 = vmatmul.mubr.f32.gmra.mrb[0].mxu0 %v231
  %v4028 = vpop.f32.mrb[0].mxu0
  %v4029 = vadd.f32 %v3954, %v4028
  %v4030 = vpop.f32.mrb[0].mxu0
  %4031 = vdwg.mxu0
  %v4032 = vadd.f32 %v4024, %v566
  %v4033 = vadd.f32 %v4029, %v566
  %v4034 = vxor.u32 %v4032, 2147483648
  %v4035 = vxor.u32 %v4033, 2147483648
  %v4036 = vmul.f32 %v4034, 1.442695
  %v4037 = vpow.pop %v4036
  %v4038 = vmul.f32 %v4035, 1.442695
  %v4039 = vpow.pop %v4038
  %v4040 = vadd.f32 %v4037, 1.0
  %v4041 = vadd.f32 %v4039, 1.0
  %v4042 = vrcp.pop %v4040
  %v4043 = vmul.f32 1.0, %v4042
  %v4044 = vrcp.pop %v4041
  %v4045 = vmul.f32 1.0, %v4044
  %v4046 = vtanh.pop %v4032
  %v4047 = vtanh.pop %v4033
  %v4048 = vmul.f32 %v4043, %v3672
  %v4049 = vmul.f32 %v4045, %v3673
  %4052 = vrot.lane.b32.xlu0 %v4046, 96
  %v4053 = vpop.permute.xlu0 %4052
  %4054 = vrot.lane.b32.xlu0 %v4047, 96
  %v4055 = vpop.permute.xlu0 %4054
  %v4058 = vmul.f32 %v4043, %v4053
  %v4059 = vmul.f32 %v4045, %v4055
  %4062 = vrot.lane.b32.xlu0 %v4058, 16
  %v4063 = vpop.permute.xlu0 %4062
  %4064 = vrot.lane.b32.xlu0 %v4059, 16
  %v4065 = vpop.permute.xlu0 %4064
  %v4068 = vadd.f32 %v4048, %v4063
  %v4069 = vadd.f32 %v4049, %v4065
  %v4070 = vsel %vm644, %v3870, %v3668
  %v4071 = vsel %vm645, %v3871, %v3669
  %v4072 = vsel %vm630, %v4068, %v3672
  %v4073 = vsel %vm631, %v4069, %v3673
  %v4074 = vsub.f32 %v4070, %v4071
  %v4075 = vand.u32 2147483647, %v4074
  %v4076 = vsub.f32 %v4072, %v4073
  %v4077 = vand.u32 2147483647, %v4076
  %v4078 = vmul.f32 %v4070, %v4071
  %v4079 = vmul.f32 %v4072, %v4073
  %v4080 = vld [vmem:[%s8] sm:$0xff]
  %v4081 = vld [vmem:[%s8 + $0x8] sm:$0xff]
  %v4082 = vld [vmem:[%s9] sm:$0xff]
  %v4083 = vld [vmem:[%s9 + $0x8] sm:$0xff]
  %4085 = vrot.lane.b32.xlu0 %v4077, 112
  %v4086 = vpop.permute.xlu0 %4085
  %v4087 = vsel %vm98, %v4086, 0
  %4089 = vmatprep.subr.mxu0 0.0
  %4090 = vmatpush1.msra.mxu0 %v4082
  %4091 = vmatprep.subr.mxu0 0.0
  %4092 = vmatpush1.msra.mxu0 %v4083
  %4093 = vmatprep.subr.mxu0 0.0
  %4094 = vmatpush1.msra.mxu0 0.0
  %4095 = vmatprep.subr.mxu0 0.0
  %4096 = vmatpush1.msra.mxu0 0.0
  %4097 = vmatprep.subr.mxu0 0.0
  %4098 = vmatpush1.msra.mxu0 0.0
  %4099 = vmatprep.subr.mxu0 0.0
  %4100 = vmatpush1.msra.mxu0 0.0
  %4101 = vmatprep.subr.mxu0 0.0
  %4102 = vmatpush1.msra.mxu0 0.0
  %4103 = vmatprep.subr.mxu0 0.0
  %4104 = vmatpush1.msra.mxu0 0.0
  %4105 = vmatprep.subr.mxu0 0.0
  %4106 = vmatpush1.msra.mxu0 0.0
  %4107 = vmatprep.subr.mxu0 0.0
  %4108 = vmatpush1.msra.mxu0 0.0
  %4109 = vmatprep.subr.mxu0 0.0
  %4110 = vmatpush1.msra.mxu0 0.0
  %4111 = vmatprep.subr.mxu0 0.0
  %4112 = vmatpush1.msra.mxu0 0.0
  %4113 = vmatprep.subr.mxu0 0.0
  %4114 = vmatpush1.msra.mxu0 0.0
  %4115 = vmatprep.subr.mxu0 0.0
  %4116 = vmatpush1.msra.mxu0 0.0
  %4117 = vmatprep.subr.mxu0 0.0
  %4118 = vmatpush1.msra.mxu0 0.0
  %4119 = vmatprep.subr.mxu0 0.0
  %4120 = vmatpush1.msra.mxu0 0.0
  %4121 = vmatprep.subr.mxu0 0.0
  %4122 = vmatpush1.msra.mxu0 0.0
  %4123 = vmatprep.subr.mxu0 0.0
  %4124 = vmatpush1.msra.mxu0 0.0
  %4125 = vmatprep.subr.mxu0 0.0
  %4126 = vmatpush1.msra.mxu0 0.0
  %4127 = vmatprep.subr.mxu0 0.0
  %4128 = vmatpush1.msra.mxu0 0.0
  %4129 = vmatprep.subr.mxu0 0.0
  %4130 = vmatpush1.msra.mxu0 0.0
  %4131 = vmatprep.subr.mxu0 0.0
  %4132 = vmatpush1.msra.mxu0 0.0
  %4133 = vmatprep.subr.mxu0 0.0
  %4134 = vmatpush1.msra.mxu0 0.0
  %4135 = vmatprep.subr.mxu0 0.0
  %4136 = vmatpush1.msra.mxu0 0.0
  %4137 = vmatprep.subr.mxu0 0.0
  %4138 = vmatpush1.msra.mxu0 0.0
  %4139 = vmatprep.subr.mxu0 0.0
  %4140 = vmatpush1.msra.mxu0 0.0
  %4141 = vmatprep.subr.mxu0 0.0
  %4142 = vmatpush1.msra.mxu0 0.0
  %4143 = vmatprep.subr.mxu0 0.0
  %4144 = vmatpush1.msra.mxu0 0.0
  %4145 = vmatprep.subr.mxu0 0.0
  %4146 = vmatpush1.msra.mxu0 0.0
  %4147 = vmatprep.subr.mxu0 0.0
  %4148 = vmatpush1.msra.mxu0 0.0
  %4149 = vmatprep.subr.mxu0 0.0
  %4150 = vmatpush1.msra.mxu0 0.0
  %4151 = vmatprep.subr.mxu0 0.0
  %4152 = vmatpush1.msra.mxu0 0.0
  %4153 = vmatprep.mubr.f32.mxu0 0.0
  %4154 = vmatmul.mubr.f32.gmra.mrb[0].mxu0 %v4087
  %v4155 = vpop.f32.mrb[0].mxu0
  %v4156 = vadd.f32 0.0, %v4155
  %v4157 = vpop.f32.mrb[0].mxu0
  %4158 = vdwg.mxu0
  %4160 = vrot.lane.b32.xlu0 %v4075, 112
  %v4161 = vpop.permute.xlu0 %4160
  %v4162 = vsel %vm98, %v4161, 0
  %4164 = vmatprep.subr.mxu0 0.0
  %4165 = vmatpush1.msra.mxu0 %v4080
  %4166 = vmatprep.subr.mxu0 0.0
  %4167 = vmatpush1.msra.mxu0 %v4081
  %4168 = vmatprep.subr.mxu0 0.0
  %4169 = vmatpush1.msra.mxu0 0.0
  %4170 = vmatprep.subr.mxu0 0.0
  %4171 = vmatpush1.msra.mxu0 0.0
  %4172 = vmatprep.subr.mxu0 0.0
  %4173 = vmatpush1.msra.mxu0 0.0
  %4174 = vmatprep.subr.mxu0 0.0
  %4175 = vmatpush1.msra.mxu0 0.0
  %4176 = vmatprep.subr.mxu0 0.0
  %4177 = vmatpush1.msra.mxu0 0.0
  %4178 = vmatprep.subr.mxu0 0.0
  %4179 = vmatpush1.msra.mxu0 0.0
  %4180 = vmatprep.subr.mxu0 0.0
  %4181 = vmatpush1.msra.mxu0 0.0
  %4182 = vmatprep.subr.mxu0 0.0
  %4183 = vmatpush1.msra.mxu0 0.0
  %4184 = vmatprep.subr.mxu0 0.0
  %4185 = vmatpush1.msra.mxu0 0.0
  %4186 = vmatprep.subr.mxu0 0.0
  %4187 = vmatpush1.msra.mxu0 0.0
  %4188 = vmatprep.subr.mxu0 0.0
  %4189 = vmatpush1.msra.mxu0 0.0
  %4190 = vmatprep.subr.mxu0 0.0
  %4191 = vmatpush1.msra.mxu0 0.0
  %4192 = vmatprep.subr.mxu0 0.0
  %4193 = vmatpush1.msra.mxu0 0.0
  %4194 = vmatprep.subr.mxu0 0.0
  %4195 = vmatpush1.msra.mxu0 0.0
  %4196 = vmatprep.subr.mxu0 0.0
  %4197 = vmatpush1.msra.mxu0 0.0
  %4198 = vmatprep.subr.mxu0 0.0
  %4199 = vmatpush1.msra.mxu0 0.0
  %4200 = vmatprep.subr.mxu0 0.0
  %4201 = vmatpush1.msra.mxu0 0.0
  %4202 = vmatprep.subr.mxu0 0.0
  %4203 = vmatpush1.msra.mxu0 0.0
  %4204 = vmatprep.subr.mxu0 0.0
  %4205 = vmatpush1.msra.mxu0 0.0
  %4206 = vmatprep.subr.mxu0 0.0
  %4207 = vmatpush1.msra.mxu0 0.0
  %4208 = vmatprep.subr.mxu0 0.0
  %4209 = vmatpush1.msra.mxu0 0.0
  %4210 = vmatprep.subr.mxu0 0.0
  %4211 = vmatpush1.msra.mxu0 0.0
  %4212 = vmatprep.subr.mxu0 0.0
  %4213 = vmatpush1.msra.mxu0 0.0
  %4214 = vmatprep.subr.mxu0 0.0
  %4215 = vmatpush1.msra.mxu0 0.0
  %4216 = vmatprep.subr.mxu0 0.0
  %4217 = vmatpush1.msra.mxu0 0.0
  %4218 = vmatprep.subr.mxu0 0.0
  %4219 = vmatpush1.msra.mxu0 0.0
  %4220 = vmatprep.subr.mxu0 0.0
  %4221 = vmatpush1.msra.mxu0 0.0
  %4222 = vmatprep.subr.mxu0 0.0
  %4223 = vmatpush1.msra.mxu0 0.0
  %4224 = vmatprep.subr.mxu0 0.0
  %4225 = vmatpush1.msra.mxu0 0.0
  %4226 = vmatprep.subr.mxu0 0.0
  %4227 = vmatpush1.msra.mxu0 0.0
  %4228 = vmatprep.mubr.f32.mxu0 0.0
  %4229 = vmatmul.mubr.f32.gmra.mrb[0].mxu0 %v4162
  %v4230 = vpop.f32.mrb[0].mxu0
  %v4231 = vadd.f32 %v4156, %v4230
  %v4232 = vpop.f32.mrb[0].mxu0
  %4233 = vdwg.mxu0
  %v4234 = vld [vmem:[%s10] sm:$0xff]
  %v4235 = vld [vmem:[%s10 + $0x8] sm:$0xff]
  %4237 = vrot.lane.b32.xlu0 %v4078, 112
  %v4238 = vpop.permute.xlu0 %4237
  %v4239 = vsel %vm98, %v4238, 0
  %4241 = vmatprep.subr.mxu0 0.0
  %4242 = vmatpush1.msra.mxu0 %v4234
  %4243 = vmatprep.subr.mxu0 0.0
  %4244 = vmatpush1.msra.mxu0 %v4235
  %4245 = vmatprep.subr.mxu0 0.0
  %4246 = vmatpush1.msra.mxu0 0.0
  %4247 = vmatprep.subr.mxu0 0.0
  %4248 = vmatpush1.msra.mxu0 0.0
  %4249 = vmatprep.subr.mxu0 0.0
  %4250 = vmatpush1.msra.mxu0 0.0
  %4251 = vmatprep.subr.mxu0 0.0
  %4252 = vmatpush1.msra.mxu0 0.0
  %4253 = vmatprep.subr.mxu0 0.0
  %4254 = vmatpush1.msra.mxu0 0.0
  %4255 = vmatprep.subr.mxu0 0.0
  %4256 = vmatpush1.msra.mxu0 0.0
  %4257 = vmatprep.subr.mxu0 0.0
  %4258 = vmatpush1.msra.mxu0 0.0
  %4259 = vmatprep.subr.mxu0 0.0
  %4260 = vmatpush1.msra.mxu0 0.0
  %4261 = vmatprep.subr.mxu0 0.0
  %4262 = vmatpush1.msra.mxu0 0.0
  %4263 = vmatprep.subr.mxu0 0.0
  %4264 = vmatpush1.msra.mxu0 0.0
  %4265 = vmatprep.subr.mxu0 0.0
  %4266 = vmatpush1.msra.mxu0 0.0
  %4267 = vmatprep.subr.mxu0 0.0
  %4268 = vmatpush1.msra.mxu0 0.0
  %4269 = vmatprep.subr.mxu0 0.0
  %4270 = vmatpush1.msra.mxu0 0.0
  %4271 = vmatprep.subr.mxu0 0.0
  %4272 = vmatpush1.msra.mxu0 0.0
  %4273 = vmatprep.subr.mxu0 0.0
  %4274 = vmatpush1.msra.mxu0 0.0
  %4275 = vmatprep.subr.mxu0 0.0
  %4276 = vmatpush1.msra.mxu0 0.0
  %4277 = vmatprep.subr.mxu0 0.0
  %4278 = vmatpush1.msra.mxu0 0.0
  %4279 = vmatprep.subr.mxu0 0.0
  %4280 = vmatpush1.msra.mxu0 0.0
  %4281 = vmatprep.subr.mxu0 0.0
  %4282 = vmatpush1.msra.mxu0 0.0
  %4283 = vmatprep.subr.mxu0 0.0
  %4284 = vmatpush1.msra.mxu0 0.0
  %4285 = vmatprep.subr.mxu0 0.0
  %4286 = vmatpush1.msra.mxu0 0.0
  %4287 = vmatprep.subr.mxu0 0.0
  %4288 = vmatpush1.msra.mxu0 0.0
  %4289 = vmatprep.subr.mxu0 0.0
  %4290 = vmatpush1.msra.mxu0 0.0
  %4291 = vmatprep.subr.mxu0 0.0
  %4292 = vmatpush1.msra.mxu0 0.0
  %4293 = vmatprep.subr.mxu0 0.0
  %4294 = vmatpush1.msra.mxu0 0.0
  %4295 = vmatprep.subr.mxu0 0.0
  %4296 = vmatpush1.msra.mxu0 0.0
  %4297 = vmatprep.subr.mxu0 0.0
  %4298 = vmatpush1.msra.mxu0 0.0
  %4299 = vmatprep.subr.mxu0 0.0
  %4300 = vmatpush1.msra.mxu0 0.0
  %4301 = vmatprep.subr.mxu0 0.0
  %4302 = vmatpush1.msra.mxu0 0.0
  %4303 = vmatprep.subr.mxu0 0.0
  %4304 = vmatpush1.msra.mxu0 0.0
  %4305 = vmatprep.mubr.f32.mxu0 0.0
  %4306 = vmatmul.mubr.f32.gmra.mrb[0].mxu0 %v4239
  %v4307 = vpop.f32.mrb[0].mxu0
  %v4308 = vadd.f32 0.0, %v4307
  %v4309 = vpop.f32.mrb[0].mxu0
  %4310 = vdwg.mxu0
  %v4311 = vadd.f32 %v4231, %v4308
  %v4312 = vld [vmem:[%s11] sm:$0xff]
  %v4313 = vld [vmem:[%s11 + $0x8] sm:$0xff]
  %4315 = vrot.lane.b32.xlu0 %v4079, 112
  %v4316 = vpop.permute.xlu0 %4315
  %v4317 = vsel %vm98, %v4316, 0
  %4319 = vmatprep.subr.mxu0 0.0
  %4320 = vmatpush1.msra.mxu0 %v4312
  %4321 = vmatprep.subr.mxu0 0.0
  %4322 = vmatpush1.msra.mxu0 %v4313
  %4323 = vmatprep.subr.mxu0 0.0
  %4324 = vmatpush1.msra.mxu0 0.0
  %4325 = vmatprep.subr.mxu0 0.0
  %4326 = vmatpush1.msra.mxu0 0.0
  %4327 = vmatprep.subr.mxu0 0.0
  %4328 = vmatpush1.msra.mxu0 0.0
  %4329 = vmatprep.subr.mxu0 0.0
  %4330 = vmatpush1.msra.mxu0 0.0
  %4331 = vmatprep.subr.mxu0 0.0
  %4332 = vmatpush1.msra.mxu0 0.0
  %4333 = vmatprep.subr.mxu0 0.0
  %4334 = vmatpush1.msra.mxu0 0.0
  %4335 = vmatprep.subr.mxu0 0.0
  %4336 = vmatpush1.msra.mxu0 0.0
  %4337 = vmatprep.subr.mxu0 0.0
  %4338 = vmatpush1.msra.mxu0 0.0
  %4339 = vmatprep.subr.mxu0 0.0
  %4340 = vmatpush1.msra.mxu0 0.0
  %4341 = vmatprep.subr.mxu0 0.0
  %4342 = vmatpush1.msra.mxu0 0.0
  %4343 = vmatprep.subr.mxu0 0.0
  %4344 = vmatpush1.msra.mxu0 0.0
  %4345 = vmatprep.subr.mxu0 0.0
  %4346 = vmatpush1.msra.mxu0 0.0
  %4347 = vmatprep.subr.mxu0 0.0
  %4348 = vmatpush1.msra.mxu0 0.0
  %4349 = vmatprep.subr.mxu0 0.0
  %4350 = vmatpush1.msra.mxu0 0.0
  %4351 = vmatprep.subr.mxu0 0.0
  %4352 = vmatpush1.msra.mxu0 0.0
  %4353 = vmatprep.subr.mxu0 0.0
  %4354 = vmatpush1.msra.mxu0 0.0
  %4355 = vmatprep.subr.mxu0 0.0
  %4356 = vmatpush1.msra.mxu0 0.0
  %4357 = vmatprep.subr.mxu0 0.0
  %4358 = vmatpush1.msra.mxu0 0.0
  %4359 = vmatprep.subr.mxu0 0.0
  %4360 = vmatpush1.msra.mxu0 0.0
  %4361 = vmatprep.subr.mxu0 0.0
  %4362 = vmatpush1.msra.mxu0 0.0
  %4363 = vmatprep.subr.mxu0 0.0
  %4364 = vmatpush1.msra.mxu0 0.0
  %4365 = vmatprep.subr.mxu0 0.0
  %4366 = vmatpush1.msra.mxu0 0.0
  %4367 = vmatprep.subr.mxu0 0.0
  %4368 = vmatpush1.msra.mxu0 0.0
  %4369 = vmatprep.subr.mxu0 0.0
  %4370 = vmatpush1.msra.mxu0 0.0
  %4371 = vmatprep.subr.mxu0 0.0
  %4372 = vmatpush1.msra.mxu0 0.0
  %4373 = vmatprep.subr.mxu0 0.0
  %4374 = vmatpush1.msra.mxu0 0.0
  %4375 = vmatprep.subr.mxu0 0.0
  %4376 = vmatpush1.msra.mxu0 0.0
  %4377 = vmatprep.subr.mxu0 0.0
  %4378 = vmatpush1.msra.mxu0 0.0
  %4379 = vmatprep.subr.mxu0 0.0
  %4380 = vmatpush1.msra.mxu0 0.0
  %4381 = vmatprep.subr.mxu0 0.0
  %4382 = vmatpush1.msra.mxu0 0.0
  %4383 = vmatprep.mubr.f32.mxu0 0.0
  %4384 = vmatmul.mubr.f32.gmra.mrb[0].mxu0 %v4317
  %v4385 = vpop.f32.mrb[0].mxu0
  %v4386 = vadd.f32 0.0, %v4385
  %v4387 = vpop.f32.mrb[0].mxu0
  %4388 = vdwg.mxu0
  %v4389 = vadd.f32 %v4311, %v4386
  %v4390 = vld [vmem:[%s12] sm:$0x1]
  %v4392 = vlaneseq
  %v4393 = vshrl.u32 %v4392, 7
  %v4394 = vsub.s32 0, %v4393
  %v4395 = vrot.slane %v4390, %v4394
  %v4397 = vadd.f32 %v4389, %v4395
  %v4398 = vtanh.pop %v4397
  %v4399 = vld [vmem:[%s13] sm:$0xff]
  %v4400 = vld [vmem:[%s13 + $0x8] sm:$0xff]
  %v4401 = vld [vmem:[%s13 + $0x10] sm:$0xff]
  %v4402 = vld [vmem:[%s13 + $0x18] sm:$0xff]
  %v4403 = vld [vmem:[%s14] sm:$0x1]
  %v4405 = vlaneseq
  %v4406 = vshrl.u32 %v4405, 7
  %v4407 = vsub.s32 0, %v4406
  %v4408 = vrot.slane %v4403, %v4407
  %v4411 = vsel %vm228, %v4398, 0
  %4413 = vmatprep.subr.mxu0 0.0
  %4414 = vmatpush1.msra.mxu0 %v4399
  %4415 = vmatprep.subr.mxu0 0.0
  %4416 = vmatpush1.msra.mxu0 %v4400
  %4417 = vmatprep.subr.mxu0 0.0
  %4418 = vmatpush1.msra.mxu0 %v4401
  %4419 = vmatprep.subr.mxu0 0.0
  %4420 = vmatpush1.msra.mxu0 %v4402
  %4421 = vmatprep.subr.mxu0 0.0
  %4422 = vmatpush1.msra.mxu0 0.0
  %4423 = vmatprep.subr.mxu0 0.0
  %4424 = vmatpush1.msra.mxu0 0.0
  %4425 = vmatprep.subr.mxu0 0.0
  %4426 = vmatpush1.msra.mxu0 0.0
  %4427 = vmatprep.subr.mxu0 0.0
  %4428 = vmatpush1.msra.mxu0 0.0
  %4429 = vmatprep.subr.mxu0 0.0
  %4430 = vmatpush1.msra.mxu0 0.0
  %4431 = vmatprep.subr.mxu0 0.0
  %4432 = vmatpush1.msra.mxu0 0.0
  %4433 = vmatprep.subr.mxu0 0.0
  %4434 = vmatpush1.msra.mxu0 0.0
  %4435 = vmatprep.subr.mxu0 0.0
  %4436 = vmatpush1.msra.mxu0 0.0
  %4437 = vmatprep.subr.mxu0 0.0
  %4438 = vmatpush1.msra.mxu0 0.0
  %4439 = vmatprep.subr.mxu0 0.0
  %4440 = vmatpush1.msra.mxu0 0.0
  %4441 = vmatprep.subr.mxu0 0.0
  %4442 = vmatpush1.msra.mxu0 0.0
  %4443 = vmatprep.subr.mxu0 0.0
  %4444 = vmatpush1.msra.mxu0 0.0
  %4445 = vmatprep.subr.mxu0 0.0
  %4446 = vmatpush1.msra.mxu0 0.0
  %4447 = vmatprep.subr.mxu0 0.0
  %4448 = vmatpush1.msra.mxu0 0.0
  %4449 = vmatprep.subr.mxu0 0.0
  %4450 = vmatpush1.msra.mxu0 0.0
  %4451 = vmatprep.subr.mxu0 0.0
  %4452 = vmatpush1.msra.mxu0 0.0
  %4453 = vmatprep.subr.mxu0 0.0
  %4454 = vmatpush1.msra.mxu0 0.0
  %4455 = vmatprep.subr.mxu0 0.0
  %4456 = vmatpush1.msra.mxu0 0.0
  %4457 = vmatprep.subr.mxu0 0.0
  %4458 = vmatpush1.msra.mxu0 0.0
  %4459 = vmatprep.subr.mxu0 0.0
  %4460 = vmatpush1.msra.mxu0 0.0
  %4461 = vmatprep.subr.mxu0 0.0
  %4462 = vmatpush1.msra.mxu0 0.0
  %4463 = vmatprep.subr.mxu0 0.0
  %4464 = vmatpush1.msra.mxu0 0.0
  %4465 = vmatprep.subr.mxu0 0.0
  %4466 = vmatpush1.msra.mxu0 0.0
  %4467 = vmatprep.subr.mxu0 0.0
  %4468 = vmatpush1.msra.mxu0 0.0
  %4469 = vmatprep.subr.mxu0 0.0
  %4470 = vmatpush1.msra.mxu0 0.0
  %4471 = vmatprep.subr.mxu0 0.0
  %4472 = vmatpush1.msra.mxu0 0.0
  %4473 = vmatprep.subr.mxu0 0.0
  %4474 = vmatpush1.msra.mxu0 0.0
  %4475 = vmatprep.subr.mxu0 0.0
  %4476 = vmatpush1.msra.mxu0 0.0
  %4477 = vmatprep.mubr.f32.mxu0 0.0
  %4478 = vmatmul.mubr.f32.gmra.mrb[0].mxu0 %v4411
  %v4479 = vpop.f32.mrb[0].mxu0
  %v4480 = vadd.f32 %v4408, %v4479
  %v4481 = vpop.f32.mrb[0].mxu0
  %4482 = vdwg.mxu0
  %vm4483 = vcmask 23552
  %4484 = vst.msk [vmem:[%s15] sm:$0xff] %vm4483, %v4480
  // Predicated region
  $region62: #{model_forward.1} parent=0 // pred_check
    _
  $region63: #{model_forward.1} parent=0 // pred_check_branch
    %4486 = sbr.rel (0) target = $region65
  $region64: #{model_forward.1} parent=0 // pred_region
    _
  $region65: #{model_forward.1} parent=0 // pred_fallthru
    _
  // Predicated region
  $region66: #{model_forward.1} parent=0 // pred_check
    _
  $region67: #{model_forward.1} parent=0 // pred_check_branch
    %4488 = sbr.rel (0) target = $region69
  $region68: #{model_forward.1} parent=0 // pred_region
    _
  $region69: #{model_forward.1} parent=0 // pred_fallthru
    _

</llo_original>
